<compile_context>
chip_gen: v6e
topology: v6e:2x2x1
jax: 0.10.0
libtpu: 0.0.40
codegen_flags: <defaults>
</compile_context>

<pallas_src>
import jax
import jax.numpy as jnp
from jax import lax
from jax.experimental import pallas as pl
from jax.experimental.pallas import tpu as pltpu


def _goal_encoder_kernel(obsx_ref, obsy_ref, wemb0_ref, wemb1_ref, bemb_ref,
                         wih_ref, bgate_ref, whh_ref, h0_ref, c0_ref,
                         out_ref, gx_ref):
    # gx_ref: (T, B, 4H) scratch holding the hoisted input projection.
    T, B, G = gx_ref.shape
    H = out_ref.shape[1]

    # ---- input embedding + ReLU on the VPU (K=2 would starve the MXU) ----
    # obs columns are (T*B, 1); w_emb rows are (1, E) -> broadcast FMAs.
    emb = jnp.maximum(
        obsx_ref[...] * wemb0_ref[...]
        + obsy_ref[...] * wemb1_ref[...]
        + bemb_ref[...], 0.0)                                  # (T*B, E)

    # ---- hoisted input projection for ALL timesteps (one MXU matmul) ----
    # bias = b_ih + b_hh pre-summed in the wrapper; result is lane-dense
    # (4H = 128 lanes) so the per-step scratch read is a full-width vld.
    gx = jnp.dot(emb, wih_ref[...],
                 preferred_element_type=jnp.float32,
                 precision=lax.Precision.HIGHEST) + bgate_ref[...]
    gx_ref[...] = gx.reshape(T, B, G)

    whh = whh_ref[...]                                         # hoisted load

    # ---- LSTMCell recurrence: per step only h @ W_hh + activations ----
    # Gate columns were permuted to [i, f, o, g]: one sigmoid over the first
    # 3H lanes, one tanh over the last H lanes.
    def step(t, carry):
        h, c = carry
        gates = gx_ref[t] + jnp.dot(h, whh,
                                    preferred_element_type=jnp.float32,
                                    precision=lax.Precision.HIGHEST)  # (B, 4H)
        sig = jax.nn.sigmoid(gates[:, :3 * H])
        g_g = jnp.tanh(gates[:, 3 * H:])
        i_g = sig[:, 0:H]
        f_g = sig[:, H:2 * H]
        o_g = sig[:, 2 * H:3 * H]
        c_new = f_g * c + i_g * g_g
        h_new = o_g * jnp.tanh(c_new)
        return (h_new, c_new)

    h_fin, _ = lax.fori_loop(0, T, step, (h0_ref[...], c0_ref[...]),
                             unroll=True)
    out_ref[...] = h_fin


def _reorder_gates(w, hidden_dim):
    """Permute gate columns from PyTorch order [i, f, g, o] to [i, f, o, g]."""
    i, f, g, o = jnp.split(w, 4, axis=-1)
    return jnp.concatenate([i, f, o, g], axis=-1)


def goal_encoder_forward(obs_goal, params, h0, c0, obs_len):
    """obs_goal: (T, B, 2) float32.  Returns the final hidden state (B, H)."""
    obs = obs_goal[:obs_len]          # obs_len must be a static Python int
    T, B, _ = obs.shape
    H = h0.shape[1]

    # Layout plumbing done in XLA (free) so the kernel sees clean operands.
    obs_flat = obs.reshape(T * B, 2)
    obs_x = obs_flat[:, 0:1]                       # (T*B, 1)
    obs_y = obs_flat[:, 1:2]                       # (T*B, 1)
    wemb0 = params["w_emb"][0:1, :]                # (1, E)
    wemb1 = params["w_emb"][1:2, :]                # (1, E)
    bemb = params["b_emb"]                         # (1, E)

    w_ih = _reorder_gates(params["w_ih"], H)                       # (E, 4H)
    w_hh = _reorder_gates(params["w_hh"], H)                       # (H, 4H)
    b_gate = _reorder_gates(params["b_ih"] + params["b_hh"], H)    # (1, 4H)

    vmem = pl.BlockSpec(memory_space=pltpu.MemorySpace.VMEM)
    return pl.pallas_call(
        _goal_encoder_kernel,
        out_shape=jax.ShapeDtypeStruct((B, H), jnp.float32),
        in_specs=[vmem] * 10,
        out_specs=vmem,
        scratch_shapes=[pltpu.VMEM((T, B, 4 * H), jnp.float32)],
    )(obs_x, obs_y, wemb0, wemb1, bemb, w_ih, b_gate, w_hh, h0, c0)


def make_params(key, input_dim, hidden_dim):
    ks = jax.random.split(key, 6)
    scale_emb = 1.0 / jnp.sqrt(2.0)
    scale_lstm = 1.0 / jnp.sqrt(hidden_dim)
    return {
        # inputEmbedding: Linear(2, input_dim)  -> stored as (2, E)
        "w_emb": jax.random.uniform(ks[0], (2, input_dim), jnp.float32,
                                    -scale_emb, scale_emb),
        "b_emb": jax.random.uniform(ks[1], (1, input_dim), jnp.float32,
                                    -scale_emb, scale_emb),
        # goalEncoderLSTM: LSTMCell(input_dim, hidden_dim)
        # weight_ih stored as (E, 4H), weight_hh as (H, 4H), gate order i,f,g,o
        "w_ih": jax.random.uniform(ks[2], (input_dim, 4 * hidden_dim),
                                   jnp.float32, -scale_lstm, scale_lstm),
        "b_ih": jax.random.uniform(ks[3], (1, 4 * hidden_dim), jnp.float32,
                                   -scale_lstm, scale_lstm),
        "w_hh": jax.random.uniform(ks[4], (hidden_dim, 4 * hidden_dim),
                                   jnp.float32, -scale_lstm, scale_lstm),
        "b_hh": jax.random.uniform(ks[5], (1, 4 * hidden_dim), jnp.float32,
                                   -scale_lstm, scale_lstm),
    }


def _reference(obs_goal, params, h0, c0, obs_len):
    """Pure-JAX reference in the original PyTorch gate order."""
    obs = obs_goal[:obs_len]
    T, B, _ = obs.shape
    H = h0.shape[1]
    hi = lax.Precision.HIGHEST
    emb = jax.nn.relu(jnp.dot(obs.reshape(T * B, 2), params["w_emb"],
                              precision=hi) + params["b_emb"])
    emb = emb.reshape(T, B, -1)
    h, c = h0, c0
    for t in range(T):
        gates = (jnp.dot(emb[t], params["w_ih"], precision=hi) + params["b_ih"]
                 + jnp.dot(h, params["w_hh"], precision=hi) + params["b_hh"])
        i = jax.nn.sigmoid(gates[:, 0 * H:1 * H])
        f = jax.nn.sigmoid(gates[:, 1 * H:2 * H])
        g = jnp.tanh(gates[:, 2 * H:3 * H])
        o = jax.nn.sigmoid(gates[:, 3 * H:4 * H])
        c = f * c + i * g
        h = o * jnp.tanh(c)
    return h


if __name__ == "__main__":
    obs_len = 8
    goal_encoder_input_dim = 16
    goal_encoder_hidden_dim = 32
    batch = 8
    seq_len = obs_len

    key = jax.random.PRNGKey(0)
    k_obs, k_par, k_h, k_c = jax.random.split(key, 4)

    obs_goal = jax.random.normal(k_obs, (seq_len, batch, 2), jnp.float32)
    params = make_params(k_par, goal_encoder_input_dim, goal_encoder_hidden_dim)
    # torch.randn(...) initial hidden/cell state -> deterministic normals here
    h0 = jax.random.normal(k_h, (batch, goal_encoder_hidden_dim), jnp.float32)
    c0 = jax.random.normal(k_c, (batch, goal_encoder_hidden_dim), jnp.float32)

    out = goal_encoder_forward(obs_goal, params, h0, c0, obs_len)
    jax.block_until_ready(out)
    assert out.shape == (batch, goal_encoder_hidden_dim)

    ref = _reference(obs_goal, params, h0, c0, obs_len)
    assert jnp.allclose(out, ref, rtol=1e-3, atol=1e-3), "mismatch vs reference"

    print("KERNEL_OK")
</pallas_src>

<mosaic_0001>
module attributes {stable_mosaic.version = 11 : i64} {
  func.func @_goal_encoder_kernel(%arg0: memref<64x1xf32, #tpu.memory_space<vmem>>, %arg1: memref<64x1xf32, #tpu.memory_space<vmem>>, %arg2: memref<1x16xf32, #tpu.memory_space<vmem>>, %arg3: memref<1x16xf32, #tpu.memory_space<vmem>>, %arg4: memref<1x16xf32, #tpu.memory_space<vmem>>, %arg5: memref<16x128xf32, #tpu.memory_space<vmem>>, %arg6: memref<1x128xf32, #tpu.memory_space<vmem>>, %arg7: memref<32x128xf32, #tpu.memory_space<vmem>>, %arg8: memref<8x32xf32, #tpu.memory_space<vmem>>, %arg9: memref<8x32xf32, #tpu.memory_space<vmem>>, %arg10: memref<8x32xf32, #tpu.memory_space<vmem>>, %arg11: memref<8x8x128xf32, #tpu.memory_space<vmem>>) attributes {dimension_semantics = [], scalar_prefetch = 0 : i64, scratch_operands = 1 : i64, tpu.core_type = #tpu.core_type<tc>} {
    %c0 = arith.constant 0 : index
    %c0_0 = arith.constant 0 : index
    %0 = vector.load %arg0[%c0, %c0_0] : memref<64x1xf32, #tpu.memory_space<vmem>>, vector<64x1xf32>
    %c0_1 = arith.constant 0 : index
    %c0_2 = arith.constant 0 : index
    %1 = vector.load %arg2[%c0_1, %c0_2] : memref<1x16xf32, #tpu.memory_space<vmem>>, vector<1x16xf32>
    %2 = vector.broadcast %0 : vector<64x1xf32> to vector<64x16xf32>
    %3 = vector.broadcast %1 : vector<1x16xf32> to vector<64x16xf32>
    %4 = arith.mulf %2, %3 : vector<64x16xf32>
    %c0_3 = arith.constant 0 : index
    %c0_4 = arith.constant 0 : index
    %5 = vector.load %arg1[%c0_3, %c0_4] : memref<64x1xf32, #tpu.memory_space<vmem>>, vector<64x1xf32>
    %c0_5 = arith.constant 0 : index
    %c0_6 = arith.constant 0 : index
    %6 = vector.load %arg3[%c0_5, %c0_6] : memref<1x16xf32, #tpu.memory_space<vmem>>, vector<1x16xf32>
    %7 = vector.broadcast %5 : vector<64x1xf32> to vector<64x16xf32>
    %8 = vector.broadcast %6 : vector<1x16xf32> to vector<64x16xf32>
    %9 = arith.mulf %7, %8 : vector<64x16xf32>
    %10 = arith.addf %4, %9 : vector<64x16xf32>
    %c0_7 = arith.constant 0 : index
    %c0_8 = arith.constant 0 : index
    %11 = vector.load %arg4[%c0_7, %c0_8] : memref<1x16xf32, #tpu.memory_space<vmem>>, vector<1x16xf32>
    %12 = vector.broadcast %11 : vector<1x16xf32> to vector<64x16xf32>
    %13 = arith.addf %10, %12 : vector<64x16xf32>
    %cst = arith.constant 0.000000e+00 : f32
    %14 = vector.broadcast %cst : f32 to vector<64x16xf32>
    %15 = arith.maximumf %13, %14 : vector<64x16xf32>
    %c0_9 = arith.constant 0 : index
    %c0_10 = arith.constant 0 : index
    %16 = vector.load %arg5[%c0_9, %c0_10] : memref<16x128xf32, #tpu.memory_space<vmem>>, vector<16x128xf32>
    %cst_11 = arith.constant dense<0.000000e+00> : vector<64x128xf32>
    %17 = tpu.matmul %15, %16, %cst_11 {dimension_numbers = #tpu.dot_dimension_numbers<[1], [0], [0], [1], [0, 0, 1, 1], [], []>, precision = #tpu.contract_precision<fp32>} : vector<64x16xf32>, vector<16x128xf32>, vector<64x128xf32> -> vector<64x128xf32>
    %c0_12 = arith.constant 0 : index
    %c0_13 = arith.constant 0 : index
    %18 = vector.load %arg6[%c0_12, %c0_13] : memref<1x128xf32, #tpu.memory_space<vmem>>, vector<1x128xf32>
    %19 = vector.broadcast %18 : vector<1x128xf32> to vector<64x128xf32>
    %20 = arith.addf %17, %19 : vector<64x128xf32>
    %21 = vector.shape_cast %20 : vector<64x128xf32> to vector<8x8x128xf32>
    %c0_14 = arith.constant 0 : index
    %c0_15 = arith.constant 0 : index
    %c0_16 = arith.constant 0 : index
    %22 = vector.load %arg11[%c0_14, %c0_15, %c0_16] : memref<8x8x128xf32, #tpu.memory_space<vmem>>, vector<8x8x128xf32>
    tpu.vector_store %arg11[%c0_14, %c0_15, %c0_16], %21 {strides = array<i32>} : memref<8x8x128xf32, #tpu.memory_space<vmem>>, vector<8x8x128xf32>,
    %c0_17 = arith.constant 0 : index
    %c0_18 = arith.constant 0 : index
    %23 = vector.load %arg7[%c0_17, %c0_18] : memref<32x128xf32, #tpu.memory_space<vmem>>, vector<32x128xf32>
    %c0_19 = arith.constant 0 : index
    %c0_20 = arith.constant 0 : index
    %24 = vector.load %arg8[%c0_19, %c0_20] : memref<8x32xf32, #tpu.memory_space<vmem>>, vector<8x32xf32>
    %c0_21 = arith.constant 0 : index
    %c0_22 = arith.constant 0 : index
    %25 = vector.load %arg9[%c0_21, %c0_22] : memref<8x32xf32, #tpu.memory_space<vmem>>, vector<8x32xf32>
    %c0_i32 = arith.constant 0 : i32
    %26 = arith.index_cast %c0_i32 : i32 to index
    %c0_23 = arith.constant 0 : index
    %c0_24 = arith.constant 0 : index
    %27 = vector.load %arg11[%26, %c0_23, %c0_24] : memref<8x8x128xf32, #tpu.memory_space<vmem>>, vector<1x8x128xf32>
    %28 = vector.shape_cast %27 : vector<1x8x128xf32> to vector<8x128xf32>
    %cst_25 = arith.constant dense<0.000000e+00> : vector<8x128xf32>
    %29 = tpu.matmul %24, %23, %cst_25 {dimension_numbers = #tpu.dot_dimension_numbers<[1], [0], [0], [1], [0, 0, 1, 1], [], []>, precision = #tpu.contract_precision<fp32>} : vector<8x32xf32>, vector<32x128xf32>, vector<8x128xf32> -> vector<8x128xf32>
    %30 = arith.addf %28, %29 : vector<8x128xf32>
    %31 = vector.extract_strided_slice %30 {offsets = [0, 0], sizes = [8, 96], strides = [1, 1]} : vector<8x128xf32> to vector<8x96xf32>
    %32 = arith.negf %31 : vector<8x96xf32>
    %33 = math.exp %32 : vector<8x96xf32>
    %cst_26 = arith.constant 1.000000e+00 : f32
    %34 = vector.broadcast %cst_26 : f32 to vector<8x96xf32>
    %35 = arith.addf %34, %33 : vector<8x96xf32>
    %36 = arith.divf %34, %35 : vector<8x96xf32>
    %37 = vector.extract_strided_slice %30 {offsets = [0, 96], sizes = [8, 32], strides = [1, 1]} : vector<8x128xf32> to vector<8x32xf32>
    %38 = math.tanh %37 : vector<8x32xf32>
    %39 = vector.extract_strided_slice %36 {offsets = [0, 0], sizes = [8, 32], strides = [1, 1]} : vector<8x96xf32> to vector<8x32xf32>
    %40 = vector.extract_strided_slice %36 {offsets = [0, 32], sizes = [8, 32], strides = [1, 1]} : vector<8x96xf32> to vector<8x32xf32>
    %41 = vector.extract_strided_slice %36 {offsets = [0, 64], sizes = [8, 32], strides = [1, 1]} : vector<8x96xf32> to vector<8x32xf32>
    %42 = arith.mulf %40, %25 : vector<8x32xf32>
    %43 = arith.mulf %39, %38 : vector<8x32xf32>
    %44 = arith.addf %42, %43 : vector<8x32xf32>
    %45 = math.tanh %44 : vector<8x32xf32>
    %46 = arith.mulf %41, %45 : vector<8x32xf32>
    %c1_i32 = arith.constant 1 : i32
    %47 = arith.index_cast %c1_i32 : i32 to index
    %c0_27 = arith.constant 0 : index
    %c0_28 = arith.constant 0 : index
    %48 = vector.load %arg11[%47, %c0_27, %c0_28] : memref<8x8x128xf32, #tpu.memory_space<vmem>>, vector<1x8x128xf32>
    %49 = vector.shape_cast %48 : vector<1x8x128xf32> to vector<8x128xf32>
    %cst_29 = arith.constant dense<0.000000e+00> : vector<8x128xf32>
    %50 = tpu.matmul %46, %23, %cst_29 {dimension_numbers = #tpu.dot_dimension_numbers<[1], [0], [0], [1], [0, 0, 1, 1], [], []>, precision = #tpu.contract_precision<fp32>} : vector<8x32xf32>, vector<32x128xf32>, vector<8x128xf32> -> vector<8x128xf32>
    %51 = arith.addf %49, %50 : vector<8x128xf32>
    %52 = vector.extract_strided_slice %51 {offsets = [0, 0], sizes = [8, 96], strides = [1, 1]} : vector<8x128xf32> to vector<8x96xf32>
    %53 = arith.negf %52 : vector<8x96xf32>
    %54 = math.exp %53 : vector<8x96xf32>
    %cst_30 = arith.constant 1.000000e+00 : f32
    %55 = vector.broadcast %cst_30 : f32 to vector<8x96xf32>
    %56 = arith.addf %55, %54 : vector<8x96xf32>
    %57 = arith.divf %55, %56 : vector<8x96xf32>
    %58 = vector.extract_strided_slice %51 {offsets = [0, 96], sizes = [8, 32], strides = [1, 1]} : vector<8x128xf32> to vector<8x32xf32>
    %59 = math.tanh %58 : vector<8x32xf32>
    %60 = vector.extract_strided_slice %57 {offsets = [0, 0], sizes = [8, 32], strides = [1, 1]} : vector<8x96xf32> to vector<8x32xf32>
    %61 = vector.extract_strided_slice %57 {offsets = [0, 32], sizes = [8, 32], strides = [1, 1]} : vector<8x96xf32> to vector<8x32xf32>
    %62 = vector.extract_strided_slice %57 {offsets = [0, 64], sizes = [8, 32], strides = [1, 1]} : vector<8x96xf32> to vector<8x32xf32>
    %63 = arith.mulf %61, %44 : vector<8x32xf32>
    %64 = arith.mulf %60, %59 : vector<8x32xf32>
    %65 = arith.addf %63, %64 : vector<8x32xf32>
    %66 = math.tanh %65 : vector<8x32xf32>
    %67 = arith.mulf %62, %66 : vector<8x32xf32>
    %c2_i32 = arith.constant 2 : i32
    %68 = arith.index_cast %c2_i32 : i32 to index
    %c0_31 = arith.constant 0 : index
    %c0_32 = arith.constant 0 : index
    %69 = vector.load %arg11[%68, %c0_31, %c0_32] : memref<8x8x128xf32, #tpu.memory_space<vmem>>, vector<1x8x128xf32>
    %70 = vector.shape_cast %69 : vector<1x8x128xf32> to vector<8x128xf32>
    %cst_33 = arith.constant dense<0.000000e+00> : vector<8x128xf32>
    %71 = tpu.matmul %67, %23, %cst_33 {dimension_numbers = #tpu.dot_dimension_numbers<[1], [0], [0], [1], [0, 0, 1, 1], [], []>, precision = #tpu.contract_precision<fp32>} : vector<8x32xf32>, vector<32x128xf32>, vector<8x128xf32> -> vector<8x128xf32>
    %72 = arith.addf %70, %71 : vector<8x128xf32>
    %73 = vector.extract_strided_slice %72 {offsets = [0, 0], sizes = [8, 96], strides = [1, 1]} : vector<8x128xf32> to vector<8x96xf32>
    %74 = arith.negf %73 : vector<8x96xf32>
    %75 = math.exp %74 : vector<8x96xf32>
    %cst_34 = arith.constant 1.000000e+00 : f32
    %76 = vector.broadcast %cst_34 : f32 to vector<8x96xf32>
    %77 = arith.addf %76, %75 : vector<8x96xf32>
    %78 = arith.divf %76, %77 : vector<8x96xf32>
    %79 = vector.extract_strided_slice %72 {offsets = [0, 96], sizes = [8, 32], strides = [1, 1]} : vector<8x128xf32> to vector<8x32xf32>
    %80 = math.tanh %79 : vector<8x32xf32>
    %81 = vector.extract_strided_slice %78 {offsets = [0, 0], sizes = [8, 32], strides = [1, 1]} : vector<8x96xf32> to vector<8x32xf32>
    %82 = vector.extract_strided_slice %78 {offsets = [0, 32], sizes = [8, 32], strides = [1, 1]} : vector<8x96xf32> to vector<8x32xf32>
    %83 = vector.extract_strided_slice %78 {offsets = [0, 64], sizes = [8, 32], strides = [1, 1]} : vector<8x96xf32> to vector<8x32xf32>
    %84 = arith.mulf %82, %65 : vector<8x32xf32>
    %85 = arith.mulf %81, %80 : vector<8x32xf32>
    %86 = arith.addf %84, %85 : vector<8x32xf32>
    %87 = math.tanh %86 : vector<8x32xf32>
    %88 = arith.mulf %83, %87 : vector<8x32xf32>
    %c3_i32 = arith.constant 3 : i32
    %89 = arith.index_cast %c3_i32 : i32 to index
    %c0_35 = arith.constant 0 : index
    %c0_36 = arith.constant 0 : index
    %90 = vector.load %arg11[%89, %c0_35, %c0_36] : memref<8x8x128xf32, #tpu.memory_space<vmem>>, vector<1x8x128xf32>
    %91 = vector.shape_cast %90 : vector<1x8x128xf32> to vector<8x128xf32>
    %cst_37 = arith.constant dense<0.000000e+00> : vector<8x128xf32>
    %92 = tpu.matmul %88, %23, %cst_37 {dimension_numbers = #tpu.dot_dimension_numbers<[1], [0], [0], [1], [0, 0, 1, 1], [], []>, precision = #tpu.contract_precision<fp32>} : vector<8x32xf32>, vector<32x128xf32>, vector<8x128xf32> -> vector<8x128xf32>
    %93 = arith.addf %91, %92 : vector<8x128xf32>
    %94 = vector.extract_strided_slice %93 {offsets = [0, 0], sizes = [8, 96], strides = [1, 1]} : vector<8x128xf32> to vector<8x96xf32>
    %95 = arith.negf %94 : vector<8x96xf32>
    %96 = math.exp %95 : vector<8x96xf32>
    %cst_38 = arith.constant 1.000000e+00 : f32
    %97 = vector.broadcast %cst_38 : f32 to vector<8x96xf32>
    %98 = arith.addf %97, %96 : vector<8x96xf32>
    %99 = arith.divf %97, %98 : vector<8x96xf32>
    %100 = vector.extract_strided_slice %93 {offsets = [0, 96], sizes = [8, 32], strides = [1, 1]} : vector<8x128xf32> to vector<8x32xf32>
    %101 = math.tanh %100 : vector<8x32xf32>
    %102 = vector.extract_strided_slice %99 {offsets = [0, 0], sizes = [8, 32], strides = [1, 1]} : vector<8x96xf32> to vector<8x32xf32>
    %103 = vector.extract_strided_slice %99 {offsets = [0, 32], sizes = [8, 32], strides = [1, 1]} : vector<8x96xf32> to vector<8x32xf32>
    %104 = vector.extract_strided_slice %99 {offsets = [0, 64], sizes = [8, 32], strides = [1, 1]} : vector<8x96xf32> to vector<8x32xf32>
    %105 = arith.mulf %103, %86 : vector<8x32xf32>
    %106 = arith.mulf %102, %101 : vector<8x32xf32>
    %107 = arith.addf %105, %106 : vector<8x32xf32>
    %108 = math.tanh %107 : vector<8x32xf32>
    %109 = arith.mulf %104, %108 : vector<8x32xf32>
    %c4_i32 = arith.constant 4 : i32
    %110 = arith.index_cast %c4_i32 : i32 to index
    %c0_39 = arith.constant 0 : index
    %c0_40 = arith.constant 0 : index
    %111 = vector.load %arg11[%110, %c0_39, %c0_40] : memref<8x8x128xf32, #tpu.memory_space<vmem>>, vector<1x8x128xf32>
    %112 = vector.shape_cast %111 : vector<1x8x128xf32> to vector<8x128xf32>
    %cst_41 = arith.constant dense<0.000000e+00> : vector<8x128xf32>
    %113 = tpu.matmul %109, %23, %cst_41 {dimension_numbers = #tpu.dot_dimension_numbers<[1], [0], [0], [1], [0, 0, 1, 1], [], []>, precision = #tpu.contract_precision<fp32>} : vector<8x32xf32>, vector<32x128xf32>, vector<8x128xf32> -> vector<8x128xf32>
    %114 = arith.addf %112, %113 : vector<8x128xf32>
    %115 = vector.extract_strided_slice %114 {offsets = [0, 0], sizes = [8, 96], strides = [1, 1]} : vector<8x128xf32> to vector<8x96xf32>
    %116 = arith.negf %115 : vector<8x96xf32>
    %117 = math.exp %116 : vector<8x96xf32>
    %cst_42 = arith.constant 1.000000e+00 : f32
    %118 = vector.broadcast %cst_42 : f32 to vector<8x96xf32>
    %119 = arith.addf %118, %117 : vector<8x96xf32>
    %120 = arith.divf %118, %119 : vector<8x96xf32>
    %121 = vector.extract_strided_slice %114 {offsets = [0, 96], sizes = [8, 32], strides = [1, 1]} : vector<8x128xf32> to vector<8x32xf32>
    %122 = math.tanh %121 : vector<8x32xf32>
    %123 = vector.extract_strided_slice %120 {offsets = [0, 0], sizes = [8, 32], strides = [1, 1]} : vector<8x96xf32> to vector<8x32xf32>
    %124 = vector.extract_strided_slice %120 {offsets = [0, 32], sizes = [8, 32], strides = [1, 1]} : vector<8x96xf32> to vector<8x32xf32>
    %125 = vector.extract_strided_slice %120 {offsets = [0, 64], sizes = [8, 32], strides = [1, 1]} : vector<8x96xf32> to vector<8x32xf32>
    %126 = arith.mulf %124, %107 : vector<8x32xf32>
    %127 = arith.mulf %123, %122 : vector<8x32xf32>
    %128 = arith.addf %126, %127 : vector<8x32xf32>
    %129 = math.tanh %128 : vector<8x32xf32>
    %130 = arith.mulf %125, %129 : vector<8x32xf32>
    %c5_i32 = arith.constant 5 : i32
    %131 = arith.index_cast %c5_i32 : i32 to index
    %c0_43 = arith.constant 0 : index
    %c0_44 = arith.constant 0 : index
    %132 = vector.load %arg11[%131, %c0_43, %c0_44] : memref<8x8x128xf32, #tpu.memory_space<vmem>>, vector<1x8x128xf32>
    %133 = vector.shape_cast %132 : vector<1x8x128xf32> to vector<8x128xf32>
    %cst_45 = arith.constant dense<0.000000e+00> : vector<8x128xf32>
    %134 = tpu.matmul %130, %23, %cst_45 {dimension_numbers = #tpu.dot_dimension_numbers<[1], [0], [0], [1], [0, 0, 1, 1], [], []>, precision = #tpu.contract_precision<fp32>} : vector<8x32xf32>, vector<32x128xf32>, vector<8x128xf32> -> vector<8x128xf32>
    %135 = arith.addf %133, %134 : vector<8x128xf32>
    %136 = vector.extract_strided_slice %135 {offsets = [0, 0], sizes = [8, 96], strides = [1, 1]} : vector<8x128xf32> to vector<8x96xf32>
    %137 = arith.negf %136 : vector<8x96xf32>
    %138 = math.exp %137 : vector<8x96xf32>
    %cst_46 = arith.constant 1.000000e+00 : f32
    %139 = vector.broadcast %cst_46 : f32 to vector<8x96xf32>
    %140 = arith.addf %139, %138 : vector<8x96xf32>
    %141 = arith.divf %139, %140 : vector<8x96xf32>
    %142 = vector.extract_strided_slice %135 {offsets = [0, 96], sizes = [8, 32], strides = [1, 1]} : vector<8x128xf32> to vector<8x32xf32>
    %143 = math.tanh %142 : vector<8x32xf32>
    %144 = vector.extract_strided_slice %141 {offsets = [0, 0], sizes = [8, 32], strides = [1, 1]} : vector<8x96xf32> to vector<8x32xf32>
    %145 = vector.extract_strided_slice %141 {offsets = [0, 32], sizes = [8, 32], strides = [1, 1]} : vector<8x96xf32> to vector<8x32xf32>
    %146 = vector.extract_strided_slice %141 {offsets = [0, 64], sizes = [8, 32], strides = [1, 1]} : vector<8x96xf32> to vector<8x32xf32>
    %147 = arith.mulf %145, %128 : vector<8x32xf32>
    %148 = arith.mulf %144, %143 : vector<8x32xf32>
    %149 = arith.addf %147, %148 : vector<8x32xf32>
    %150 = math.tanh %149 : vector<8x32xf32>
    %151 = arith.mulf %146, %150 : vector<8x32xf32>
    %c6_i32 = arith.constant 6 : i32
    %152 = arith.index_cast %c6_i32 : i32 to index
    %c0_47 = arith.constant 0 : index
    %c0_48 = arith.constant 0 : index
    %153 = vector.load %arg11[%152, %c0_47, %c0_48] : memref<8x8x128xf32, #tpu.memory_space<vmem>>, vector<1x8x128xf32>
    %154 = vector.shape_cast %153 : vector<1x8x128xf32> to vector<8x128xf32>
    %cst_49 = arith.constant dense<0.000000e+00> : vector<8x128xf32>
    %155 = tpu.matmul %151, %23, %cst_49 {dimension_numbers = #tpu.dot_dimension_numbers<[1], [0], [0], [1], [0, 0, 1, 1], [], []>, precision = #tpu.contract_precision<fp32>} : vector<8x32xf32>, vector<32x128xf32>, vector<8x128xf32> -> vector<8x128xf32>
    %156 = arith.addf %154, %155 : vector<8x128xf32>
    %157 = vector.extract_strided_slice %156 {offsets = [0, 0], sizes = [8, 96], strides = [1, 1]} : vector<8x128xf32> to vector<8x96xf32>
    %158 = arith.negf %157 : vector<8x96xf32>
    %159 = math.exp %158 : vector<8x96xf32>
    %cst_50 = arith.constant 1.000000e+00 : f32
    %160 = vector.broadcast %cst_50 : f32 to vector<8x96xf32>
    %161 = arith.addf %160, %159 : vector<8x96xf32>
    %162 = arith.divf %160, %161 : vector<8x96xf32>
    %163 = vector.extract_strided_slice %156 {offsets = [0, 96], sizes = [8, 32], strides = [1, 1]} : vector<8x128xf32> to vector<8x32xf32>
    %164 = math.tanh %163 : vector<8x32xf32>
    %165 = vector.extract_strided_slice %162 {offsets = [0, 0], sizes = [8, 32], strides = [1, 1]} : vector<8x96xf32> to vector<8x32xf32>
    %166 = vector.extract_strided_slice %162 {offsets = [0, 32], sizes = [8, 32], strides = [1, 1]} : vector<8x96xf32> to vector<8x32xf32>
    %167 = vector.extract_strided_slice %162 {offsets = [0, 64], sizes = [8, 32], strides = [1, 1]} : vector<8x96xf32> to vector<8x32xf32>
    %168 = arith.mulf %166, %149 : vector<8x32xf32>
    %169 = arith.mulf %165, %164 : vector<8x32xf32>
    %170 = arith.addf %168, %169 : vector<8x32xf32>
    %171 = math.tanh %170 : vector<8x32xf32>
    %172 = arith.mulf %167, %171 : vector<8x32xf32>
    %c7_i32 = arith.constant 7 : i32
    %173 = arith.index_cast %c7_i32 : i32 to index
    %c0_51 = arith.constant 0 : index
    %c0_52 = arith.constant 0 : index
    %174 = vector.load %arg11[%173, %c0_51, %c0_52] : memref<8x8x128xf32, #tpu.memory_space<vmem>>, vector<1x8x128xf32>
    %175 = vector.shape_cast %174 : vector<1x8x128xf32> to vector<8x128xf32>
    %cst_53 = arith.constant dense<0.000000e+00> : vector<8x128xf32>
    %176 = tpu.matmul %172, %23, %cst_53 {dimension_numbers = #tpu.dot_dimension_numbers<[1], [0], [0], [1], [0, 0, 1, 1], [], []>, precision = #tpu.contract_precision<fp32>} : vector<8x32xf32>, vector<32x128xf32>, vector<8x128xf32> -> vector<8x128xf32>
    %177 = arith.addf %175, %176 : vector<8x128xf32>
    %178 = vector.extract_strided_slice %177 {offsets = [0, 0], sizes = [8, 96], strides = [1, 1]} : vector<8x128xf32> to vector<8x96xf32>
    %179 = arith.negf %178 : vector<8x96xf32>
    %180 = math.exp %179 : vector<8x96xf32>
    %cst_54 = arith.constant 1.000000e+00 : f32
    %181 = vector.broadcast %cst_54 : f32 to vector<8x96xf32>
    %182 = arith.addf %181, %180 : vector<8x96xf32>
    %183 = arith.divf %181, %182 : vector<8x96xf32>
    %184 = vector.extract_strided_slice %177 {offsets = [0, 96], sizes = [8, 32], strides = [1, 1]} : vector<8x128xf32> to vector<8x32xf32>
    %185 = math.tanh %184 : vector<8x32xf32>
    %186 = vector.extract_strided_slice %183 {offsets = [0, 0], sizes = [8, 32], strides = [1, 1]} : vector<8x96xf32> to vector<8x32xf32>
    %187 = vector.extract_strided_slice %183 {offsets = [0, 32], sizes = [8, 32], strides = [1, 1]} : vector<8x96xf32> to vector<8x32xf32>
    %188 = vector.extract_strided_slice %183 {offsets = [0, 64], sizes = [8, 32], strides = [1, 1]} : vector<8x96xf32> to vector<8x32xf32>
    %189 = arith.mulf %187, %170 : vector<8x32xf32>
    %190 = arith.mulf %186, %185 : vector<8x32xf32>
    %191 = arith.addf %189, %190 : vector<8x32xf32>
    %192 = math.tanh %191 : vector<8x32xf32>
    %193 = arith.mulf %188, %192 : vector<8x32xf32>
    %c8_i32 = arith.constant 8 : i32
    %c0_55 = arith.constant 0 : index
    %c0_56 = arith.constant 0 : index
    %194 = vector.load %arg10[%c0_55, %c0_56] : memref<8x32xf32, #tpu.memory_space<vmem>>, vector<8x32xf32>
    tpu.vector_store %arg10[%c0_55, %c0_56], %193 {strides = array<i32>} : memref<8x32xf32, #tpu.memory_space<vmem>>, vector<8x32xf32>,
    return
  }
}

</mosaic_0001>

<llo_original>
// kernel: tpu_custom_call.1
$region0: #{tpu_custom_call.1}
  #allocation0 [shape = 'u32[]', space=smem, size = 0x4, offset = 0x4, fixed_abs, tag = 'smem constant byte address 0x4 - core index']
  #allocation1 [shape = 'u32[144,128]{1,0:T(1,128)}', space=vmem, size = 0x12000, scoped, tag = 'internal scratch']
  #allocation2 [shape = 'f32[8,8,128]{2,1,0:T(8,128)}', space=vmem, size = 0x8000, scoped, tag = 'scratch operand']
  %s0 = inlined_call_operand.vmem [shape: f32[64,1], index: 0, kind: input, shape index: {}]
  %s1 = inlined_call_operand.vmem [shape: f32[64,1], index: 1, kind: input, shape index: {}]
  %s2 = inlined_call_operand.vmem [shape: f32[1,16], index: 2, kind: input, shape index: {}]
  %s3 = inlined_call_operand.vmem [shape: f32[1,16], index: 3, kind: input, shape index: {}]
  %s4 = inlined_call_operand.vmem [shape: f32[1,16], index: 4, kind: input, shape index: {}]
  %s5 = inlined_call_operand.vmem [shape: f32[16,128], index: 5, kind: input, shape index: {}]
  %s6 = inlined_call_operand.vmem [shape: f32[1,128], index: 6, kind: input, shape index: {}]
  %s7 = inlined_call_operand.vmem [shape: f32[32,128], index: 7, kind: input, shape index: {}]
  %s8 = inlined_call_operand.vmem [shape: f32[8,32], index: 8, kind: input, shape index: {}]
  %s9 = inlined_call_operand.vmem [shape: f32[8,32], index: 9, kind: input, shape index: {}]
  %s10 = inlined_call_operand.hbm [shape: f32[8,32], index: 10, kind: output, shape index: {}]
  %s11 = sld [smem:[#allocation0]]
  $region50: #{tpu_custom_call.1} parent=0
    _
  %s13 = ssub.s32 1, %s11
  %s14 = scalar_select 0, %s13, %s11
  $region1: #{tpu_custom_call.1} parent=0
    #allocation3 [shape = 'u8[4096]{0}', space=vmem, size = 0x1000, scoped, tag = 'output window, operand 0, single buffered']
    #allocation4 [shape = 's32[1]{0}', space=sflag, size = 0x4, scoped, tag = 'scoped memory for tpu_custom_call.1']
    %15 = vsyncpa [#allocation4], 0
    // Predicated region
    $region2: #{tpu_custom_call.1} parent=1 // pred_check
      _
    $region3: #{tpu_custom_call.1} parent=1 // pred_check_branch
      %17 = sbr.rel (0) target = $region5
    $region4: #{tpu_custom_call.1} parent=1 // pred_region
      _
    $region5: #{tpu_custom_call.1} parent=1 // pred_fallthru
      _
    // Predicated region
    $region6: #{tpu_custom_call.1} parent=1 // pred_check
      _
    $region7: #{tpu_custom_call.1} parent=1 // pred_check_branch
      %19 = sbr.rel (0) target = $region9
    $region8: #{tpu_custom_call.1} parent=1 // pred_region
      _
    $region9: #{tpu_custom_call.1} parent=1 // pred_fallthru
      _
    // Predicated region
    $region10: #{tpu_custom_call.1} parent=1 // pred_check
      _
    $region11: #{tpu_custom_call.1} parent=1 // pred_check_branch
      %21 = sbr.rel (0) target = $region13
    $region12: #{tpu_custom_call.1} parent=1 // pred_region
      _
    $region13: #{tpu_custom_call.1} parent=1 // pred_fallthru
      _
    // Predicated region
    $region14: #{tpu_custom_call.1} parent=1 // pred_check
      _
    $region15: #{tpu_custom_call.1} parent=1 // pred_check_branch
      %23 = sbr.rel (0) target = $region17
    $region16: #{tpu_custom_call.1} parent=1 // pred_region
      _
    $region17: #{tpu_custom_call.1} parent=1 // pred_fallthru
      _
    // Predicated region
    $region18: #{tpu_custom_call.1} parent=1 // pred_check
      _
    $region19: #{tpu_custom_call.1} parent=1 // pred_check_branch
      %25 = sbr.rel (0) target = $region21
    $region20: #{tpu_custom_call.1} parent=1 // pred_region
      _
    $region21: #{tpu_custom_call.1} parent=1 // pred_fallthru
      _
    // Predicated region
    $region22: #{tpu_custom_call.1} parent=1 // pred_check
      _
    $region23: #{tpu_custom_call.1} parent=1 // pred_check_branch
      %27 = sbr.rel (0) target = $region25
    $region24: #{tpu_custom_call.1} parent=1 // pred_region
      _
    $region25: #{tpu_custom_call.1} parent=1 // pred_fallthru
      _
    // Predicated region
    $region26: #{tpu_custom_call.1} parent=1 // pred_check
      _
    $region27: #{tpu_custom_call.1} parent=1 // pred_check_branch
      %29 = sbr.rel (0) target = $region29
    $region28: #{tpu_custom_call.1} parent=1 // pred_region
      _
    $region29: #{tpu_custom_call.1} parent=1 // pred_fallthru
      _
    // Predicated region
    $region30: #{tpu_custom_call.1} parent=1 // pred_check
      _
    $region31: #{tpu_custom_call.1} parent=1 // pred_check_branch
      %31 = sbr.rel (0) target = $region33
    $region32: #{tpu_custom_call.1} parent=1 // pred_region
      _
    $region33: #{tpu_custom_call.1} parent=1 // pred_fallthru
      _
    // Predicated region
    $region34: #{tpu_custom_call.1} parent=1 // pred_check
      _
    $region35: #{tpu_custom_call.1} parent=1 // pred_check_branch
      %33 = sbr.rel (0) target = $region37
    $region36: #{tpu_custom_call.1} parent=1 // pred_region
      _
    $region37: #{tpu_custom_call.1} parent=1 // pred_fallthru
      _
    // Predicated region
    $region38: #{tpu_custom_call.1} parent=1 // pred_check
      _
    $region39: #{tpu_custom_call.1} parent=1 // pred_check_branch
      %35 = sbr.rel (0) target = $region41
    $region40: #{tpu_custom_call.1} parent=1 // pred_region
      _
    $region41: #{tpu_custom_call.1} parent=1 // pred_fallthru
      _
    %v36 = vld [vmem:[%s0] sm:$0xff]
    %v37 = vld [vmem:[%s0 + $0x8] sm:$0xff]
    %v38 = vld [vmem:[%s0 + $0x10] sm:$0xff]
    %v39 = vld [vmem:[%s0 + $0x18] sm:$0xff]
    %v40 = vld [vmem:[%s0 + $0x20] sm:$0xff]
    %v41 = vld [vmem:[%s0 + $0x28] sm:$0xff]
    %v42 = vld [vmem:[%s0 + $0x30] sm:$0xff]
    %v43 = vld [vmem:[%s0 + $0x38] sm:$0xff]
    %v44 = vld [vmem:[%s2] sm:$0x1]
    %46 = vset.pattern.permute.xlu0 0
    %47 = vperm.xlu0 %46, %v36
    %v48 = vpop.permute.xlu0 %47
    %51 = vset.pattern.permute.xlu0 0
    %52 = vperm.xlu0 %51, %v37
    %v53 = vpop.permute.xlu0 %52
    %56 = vset.pattern.permute.xlu0 0
    %57 = vperm.xlu0 %56, %v38
    %v58 = vpop.permute.xlu0 %57
    %61 = vset.pattern.permute.xlu0 0
    %62 = vperm.xlu0 %61, %v39
    %v63 = vpop.permute.xlu0 %62
    %66 = vset.pattern.permute.xlu0 0
    %67 = vperm.xlu0 %66, %v40
    %v68 = vpop.permute.xlu0 %67
    %71 = vset.pattern.permute.xlu0 0
    %72 = vperm.xlu0 %71, %v41
    %v73 = vpop.permute.xlu0 %72
    %76 = vset.pattern.permute.xlu0 0
    %77 = vperm.xlu0 %76, %v42
    %v78 = vpop.permute.xlu0 %77
    %81 = vset.pattern.permute.xlu0 0
    %82 = vperm.xlu0 %81, %v43
    %v83 = vpop.permute.xlu0 %82
    %v86 = vlaneseq
    %v87 = vshrl.u32 %v86, 7
    %v88 = vsub.s32 0, %v87
    %v89 = vrot.slane %v44, %v88
    %v91 = vmul.f32 %v48, %v89
    %v92 = vmul.f32 %v53, %v89
    %v93 = vmul.f32 %v58, %v89
    %v94 = vmul.f32 %v63, %v89
    %v95 = vmul.f32 %v68, %v89
    %v96 = vmul.f32 %v73, %v89
    %v97 = vmul.f32 %v78, %v89
    %v98 = vmul.f32 %v83, %v89
    %v99 = vld [vmem:[%s1] sm:$0xff]
    %v100 = vld [vmem:[%s1 + $0x8] sm:$0xff]
    %v101 = vld [vmem:[%s1 + $0x10] sm:$0xff]
    %v102 = vld [vmem:[%s1 + $0x18] sm:$0xff]
    %v103 = vld [vmem:[%s1 + $0x20] sm:$0xff]
    %v104 = vld [vmem:[%s1 + $0x28] sm:$0xff]
    %v105 = vld [vmem:[%s1 + $0x30] sm:$0xff]
    %v106 = vld [vmem:[%s1 + $0x38] sm:$0xff]
    %v107 = vld [vmem:[%s3] sm:$0x1]
    %109 = vset.pattern.permute.xlu0 0
    %110 = vperm.xlu0 %109, %v99
    %v111 = vpop.permute.xlu0 %110
    %114 = vset.pattern.permute.xlu0 0
    %115 = vperm.xlu0 %114, %v100
    %v116 = vpop.permute.xlu0 %115
    %119 = vset.pattern.permute.xlu0 0
    %120 = vperm.xlu0 %119, %v101
    %v121 = vpop.permute.xlu0 %120
    %124 = vset.pattern.permute.xlu0 0
    %125 = vperm.xlu0 %124, %v102
    %v126 = vpop.permute.xlu0 %125
    %129 = vset.pattern.permute.xlu0 0
    %130 = vperm.xlu0 %129, %v103
    %v131 = vpop.permute.xlu0 %130
    %134 = vset.pattern.permute.xlu0 0
    %135 = vperm.xlu0 %134, %v104
    %v136 = vpop.permute.xlu0 %135
    %139 = vset.pattern.permute.xlu0 0
    %140 = vperm.xlu0 %139, %v105
    %v141 = vpop.permute.xlu0 %140
    %144 = vset.pattern.permute.xlu0 0
    %145 = vperm.xlu0 %144, %v106
    %v146 = vpop.permute.xlu0 %145
    %v149 = vlaneseq
    %v150 = vshrl.u32 %v149, 7
    %v151 = vsub.s32 0, %v150
    %v152 = vrot.slane %v107, %v151
    %v154 = vmul.f32 %v111, %v152
    %v155 = vmul.f32 %v116, %v152
    %v156 = vmul.f32 %v121, %v152
    %v157 = vmul.f32 %v126, %v152
    %v158 = vmul.f32 %v131, %v152
    %v159 = vmul.f32 %v136, %v152
    %v160 = vmul.f32 %v141, %v152
    %v161 = vmul.f32 %v146, %v152
    %v162 = vadd.f32 %v91, %v154
    %v163 = vadd.f32 %v92, %v155
    %v164 = vadd.f32 %v93, %v156
    %v165 = vadd.f32 %v94, %v157
    %v166 = vadd.f32 %v95, %v158
    %v167 = vadd.f32 %v96, %v159
    %v168 = vadd.f32 %v97, %v160
    %v169 = vadd.f32 %v98, %v161
    %v170 = vld [vmem:[%s4] sm:$0x1]
    %v172 = vlaneseq
    %v173 = vshrl.u32 %v172, 7
    %v174 = vsub.s32 0, %v173
    %v175 = vrot.slane %v170, %v174
    %v177 = vadd.f32 %v162, %v175
    %v178 = vadd.f32 %v163, %v175
    %v179 = vadd.f32 %v164, %v175
    %v180 = vadd.f32 %v165, %v175
    %v181 = vadd.f32 %v166, %v175
    %v182 = vadd.f32 %v167, %v175
    %v183 = vadd.f32 %v168, %v175
    %v184 = vadd.f32 %v169, %v175
    %v185 = vmax.f32 %v177, 0.0
    %v186 = vmax.f32 %v178, 0.0
    %v187 = vmax.f32 %v179, 0.0
    %v188 = vmax.f32 %v180, 0.0
    %v189 = vmax.f32 %v181, 0.0
    %v190 = vmax.f32 %v182, 0.0
    %v191 = vmax.f32 %v183, 0.0
    %v192 = vmax.f32 %v184, 0.0
    %v193 = vld [vmem:[%s5] sm:$0xff]
    %v194 = vld [vmem:[%s5 + $0x8] sm:$0xff]
    %v195 = vld [vmem:[%s6] sm:$0x1]
    %v197 = vlaneseq
    %v198 = vshrl.u32 %v197, 7
    %v199 = vsub.s32 0, %v198
    %v200 = vrot.slane %v195, %v199
    %vm202 = vcmask 130048
    %v204 = vsel %vm202, %v185, 0
    %v207 = vsel %vm202, %v186, 0
    %v210 = vsel %vm202, %v187, 0
    %v213 = vsel %vm202, %v188, 0
    %v216 = vsel %vm202, %v189, 0
    %v219 = vsel %vm202, %v190, 0
    %v222 = vsel %vm202, %v191, 0
    %v225 = vsel %vm202, %v192, 0
    %227 = vmatprep.subr.mxu0 0.0
    %228 = vmatpush1.msra.mxu0 0.0
    %229 = vmatprep.subr.mxu0 0.0
    %230 = vmatpush1.msra.mxu0 0.0
    %231 = vmatprep.subr.mxu0 0.0
    %232 = vmatpush1.msra.mxu0 0.0
    %233 = vmatprep.subr.mxu0 0.0
    %234 = vmatpush1.msra.mxu0 0.0
    %235 = vmatprep.subr.mxu0 0.0
    %236 = vmatpush1.msra.mxu0 0.0
    %237 = vmatprep.subr.mxu0 0.0
    %238 = vmatpush1.msra.mxu0 0.0
    %239 = vmatprep.subr.mxu0 0.0
    %240 = vmatpush1.msra.mxu0 0.0
    %241 = vmatprep.subr.mxu0 0.0
    %242 = vmatpush1.msra.mxu0 0.0
    %243 = vmatprep.subr.mxu0 0.0
    %244 = vmatpush1.msra.mxu0 0.0
    %245 = vmatprep.subr.mxu0 0.0
    %246 = vmatpush1.msra.mxu0 0.0
    %247 = vmatprep.subr.mxu0 0.0
    %248 = vmatpush1.msra.mxu0 0.0
    %249 = vmatprep.subr.mxu0 0.0
    %250 = vmatpush1.msra.mxu0 0.0
    %251 = vmatprep.subr.mxu0 0.0
    %252 = vmatpush1.msra.mxu0 0.0
    %253 = vmatprep.subr.mxu0 0.0
    %254 = vmatpush1.msra.mxu0 0.0
    %255 = vmatprep.subr.mxu0 0.0
    %v256 = vand.u32 %v194, 4294901760
    %257 = vmatpush1.msra.mxu0 %v256
    %258 = vmatprep.subr.mxu0 0.0
    %v259 = vand.u32 %v193, 4294901760
    %260 = vmatpush1.msra.mxu0 %v259
    %261 = vmatprep.subr.mxu0 0.0
    %262 = vmatpush2.msra.mxu0 0.0
    %263 = vmatprep.subr.mxu0 0.0
    %264 = vmatpush2.msra.mxu0 0.0
    %265 = vmatprep.subr.mxu0 0.0
    %266 = vmatpush2.msra.mxu0 0.0
    %267 = vmatprep.subr.mxu0 0.0
    %268 = vmatpush2.msra.mxu0 0.0
    %269 = vmatprep.subr.mxu0 0.0
    %270 = vmatpush2.msra.mxu0 0.0
    %271 = vmatprep.subr.mxu0 0.0
    %272 = vmatpush2.msra.mxu0 0.0
    %273 = vmatprep.subr.mxu0 0.0
    %274 = vmatpush2.msra.mxu0 0.0
    %275 = vmatprep.subr.mxu0 0.0
    %276 = vmatpush2.msra.mxu0 0.0
    %277 = vmatprep.subr.mxu0 0.0
    %278 = vmatpush2.msra.mxu0 0.0
    %279 = vmatprep.subr.mxu0 0.0
    %280 = vmatpush2.msra.mxu0 0.0
    %281 = vmatprep.subr.mxu0 0.0
    %282 = vmatpush2.msra.mxu0 0.0
    %283 = vmatprep.subr.mxu0 0.0
    %284 = vmatpush2.msra.mxu0 0.0
    %285 = vmatprep.subr.mxu0 0.0
    %286 = vmatpush2.msra.mxu0 0.0
    %287 = vmatprep.subr.mxu0 0.0
    %288 = vmatpush2.msra.mxu0 0.0
    %289 = vmatprep.subr.mxu0 0.0
    %290 = vmatpush2.msra.mxu0 0.0
    %291 = vmatprep.subr.mxu0 0.0
    %292 = vmatpush2.msra.mxu0 0.0
    %293 = vmatprep.mubr.f32.mxu0 0.0
    %v294 = vand.u32 %v204, 4294901760
    %v295 = vsub.f32 %v204, %v294
    %v296 = vand.u32 %v295, 4294901760
    %v297 = vsub.f32 %v295, %v296
    %v298 = vand.u32 %v297, 4294901760
    %299 = vmatmul.mubr.f32.gmra.mxu0 %v298
    %v300 = vpop.f32.mrf.mxu0
    %v301 = vadd.f32 %v200, %v300
    %v302 = vpop.f32.mrf.mxu0
    %303 = vmatprep.mubr.f32.mxu0 0.0
    %v304 = vand.u32 %v207, 4294901760
    %v305 = vsub.f32 %v207, %v304
    %v306 = vand.u32 %v305, 4294901760
    %v307 = vsub.f32 %v305, %v306
    %v308 = vand.u32 %v307, 4294901760
    %309 = vmatmul.mubr.f32.gmra.mxu0 %v308
    %v310 = vpop.f32.mrf.mxu0
    %v311 = vadd.f32 %v200, %v310
    %v312 = vpop.f32.mrf.mxu0
    %313 = vmatprep.mubr.f32.mxu0 0.0
    %v314 = vand.u32 %v210, 4294901760
    %v315 = vsub.f32 %v210, %v314
    %v316 = vand.u32 %v315, 4294901760
    %v317 = vsub.f32 %v315, %v316
    %v318 = vand.u32 %v317, 4294901760
    %319 = vmatmul.mubr.f32.gmra.mxu0 %v318
    %v320 = vpop.f32.mrf.mxu0
    %v321 = vadd.f32 %v200, %v320
    %v322 = vpop.f32.mrf.mxu0
    %323 = vmatprep.mubr.f32.mxu0 0.0
    %v324 = vand.u32 %v213, 4294901760
    %v325 = vsub.f32 %v213, %v324
    %v326 = vand.u32 %v325, 4294901760
    %v327 = vsub.f32 %v325, %v326
    %v328 = vand.u32 %v327, 4294901760
    %329 = vmatmul.mubr.f32.gmra.mxu0 %v328
    %v330 = vpop.f32.mrf.mxu0
    %v331 = vadd.f32 %v200, %v330
    %v332 = vpop.f32.mrf.mxu0
    %333 = vmatprep.mubr.f32.mxu0 0.0
    %v334 = vand.u32 %v216, 4294901760
    %v335 = vsub.f32 %v216, %v334
    %v336 = vand.u32 %v335, 4294901760
    %v337 = vsub.f32 %v335, %v336
    %v338 = vand.u32 %v337, 4294901760
    %339 = vmatmul.mubr.f32.gmra.mxu0 %v338
    %v340 = vpop.f32.mrf.mxu0
    %v341 = vadd.f32 %v200, %v340
    %v342 = vpop.f32.mrf.mxu0
    %343 = vmatprep.mubr.f32.mxu0 0.0
    %v344 = vand.u32 %v219, 4294901760
    %v345 = vsub.f32 %v219, %v344
    %v346 = vand.u32 %v345, 4294901760
    %v347 = vsub.f32 %v345, %v346
    %v348 = vand.u32 %v347, 4294901760
    %349 = vmatmul.mubr.f32.gmra.mxu0 %v348
    %v350 = vpop.f32.mrf.mxu0
    %v351 = vadd.f32 %v200, %v350
    %v352 = vpop.f32.mrf.mxu0
    %353 = vmatprep.mubr.f32.mxu0 0.0
    %v354 = vand.u32 %v222, 4294901760
    %v355 = vsub.f32 %v222, %v354
    %v356 = vand.u32 %v355, 4294901760
    %v357 = vsub.f32 %v355, %v356
    %v358 = vand.u32 %v357, 4294901760
    %359 = vmatmul.mubr.f32.gmra.mxu0 %v358
    %v360 = vpop.f32.mrf.mxu0
    %v361 = vadd.f32 %v200, %v360
    %v362 = vpop.f32.mrf.mxu0
    %363 = vmatprep.mubr.f32.mxu0 0.0
    %v364 = vand.u32 %v225, 4294901760
    %v365 = vsub.f32 %v225, %v364
    %v366 = vand.u32 %v365, 4294901760
    %v367 = vsub.f32 %v365, %v366
    %v368 = vand.u32 %v367, 4294901760
    %369 = vmatmul.mubr.f32.gmra.mxu0 %v368
    %v370 = vpop.f32.mrf.mxu0
    %v371 = vadd.f32 %v200, %v370
    %v372 = vpop.f32.mrf.mxu0
    %373 = vdwg.mxu0
    %374 = vmatprep.subr.mxu0 0.0
    %375 = vmatpush1.msra.mxu0 0.0
    %376 = vmatprep.subr.mxu0 0.0
    %377 = vmatpush1.msra.mxu0 0.0
    %378 = vmatprep.subr.mxu0 0.0
    %379 = vmatpush1.msra.mxu0 0.0
    %380 = vmatprep.subr.mxu0 0.0
    %381 = vmatpush1.msra.mxu0 0.0
    %382 = vmatprep.subr.mxu0 0.0
    %383 = vmatpush1.msra.mxu0 0.0
    %384 = vmatprep.subr.mxu0 0.0
    %385 = vmatpush1.msra.mxu0 0.0
    %386 = vmatprep.subr.mxu0 0.0
    %387 = vmatpush1.msra.mxu0 0.0
    %388 = vmatprep.subr.mxu0 0.0
    %389 = vmatpush1.msra.mxu0 0.0
    %390 = vmatprep.subr.mxu0 0.0
    %391 = vmatpush1.msra.mxu0 0.0
    %392 = vmatprep.subr.mxu0 0.0
    %393 = vmatpush1.msra.mxu0 0.0
    %394 = vmatprep.subr.mxu0 0.0
    %395 = vmatpush1.msra.mxu0 0.0
    %396 = vmatprep.subr.mxu0 0.0
    %397 = vmatpush1.msra.mxu0 0.0
    %398 = vmatprep.subr.mxu0 0.0
    %399 = vmatpush1.msra.mxu0 0.0
    %400 = vmatprep.subr.mxu0 0.0
    %401 = vmatpush1.msra.mxu0 0.0
    %402 = vmatprep.subr.mxu0 0.0
    %v403 = vand.u32 %v194, 4294901760
    %v404 = vsub.f32 %v194, %v403
    %v405 = vand.u32 %v404, 4294901760
    %v406 = vsub.f32 %v404, %v405
    %v407 = vand.u32 %v406, 4294901760
    %408 = vmatpush1.msra.mxu0 %v407
    %409 = vmatprep.subr.mxu0 0.0
    %v410 = vand.u32 %v193, 4294901760
    %v411 = vsub.f32 %v193, %v410
    %v412 = vand.u32 %v411, 4294901760
    %v413 = vsub.f32 %v411, %v412
    %v414 = vand.u32 %v413, 4294901760
    %415 = vmatpush1.msra.mxu0 %v414
    %416 = vmatprep.subr.mxu0 0.0
    %417 = vmatpush2.msra.mxu0 0.0
    %418 = vmatprep.subr.mxu0 0.0
    %419 = vmatpush2.msra.mxu0 0.0
    %420 = vmatprep.subr.mxu0 0.0
    %421 = vmatpush2.msra.mxu0 0.0
    %422 = vmatprep.subr.mxu0 0.0
    %423 = vmatpush2.msra.mxu0 0.0
    %424 = vmatprep.subr.mxu0 0.0
    %425 = vmatpush2.msra.mxu0 0.0
    %426 = vmatprep.subr.mxu0 0.0
    %427 = vmatpush2.msra.mxu0 0.0
    %428 = vmatprep.subr.mxu0 0.0
    %429 = vmatpush2.msra.mxu0 0.0
    %430 = vmatprep.subr.mxu0 0.0
    %431 = vmatpush2.msra.mxu0 0.0
    %432 = vmatprep.subr.mxu0 0.0
    %433 = vmatpush2.msra.mxu0 0.0
    %434 = vmatprep.subr.mxu0 0.0
    %435 = vmatpush2.msra.mxu0 0.0
    %436 = vmatprep.subr.mxu0 0.0
    %437 = vmatpush2.msra.mxu0 0.0
    %438 = vmatprep.subr.mxu0 0.0
    %439 = vmatpush2.msra.mxu0 0.0
    %440 = vmatprep.subr.mxu0 0.0
    %441 = vmatpush2.msra.mxu0 0.0
    %442 = vmatprep.subr.mxu0 0.0
    %443 = vmatpush2.msra.mxu0 0.0
    %444 = vmatprep.subr.mxu0 0.0
    %445 = vmatpush2.msra.mxu0 0.0
    %446 = vmatprep.subr.mxu0 0.0
    %447 = vmatpush2.msra.mxu0 0.0
    %448 = vmatprep.mubr.f32.mxu0 0.0
    %v449 = vand.u32 %v204, 4294901760
    %450 = vmatmul.mubr.f32.gmra.mxu0 %v449
    %v451 = vpop.f32.mrf.mxu0
    %v452 = vadd.f32 %v301, %v451
    %v453 = vpop.f32.mrf.mxu0
    %454 = vmatprep.mubr.f32.mxu0 0.0
    %v455 = vand.u32 %v207, 4294901760
    %456 = vmatmul.mubr.f32.gmra.mxu0 %v455
    %v457 = vpop.f32.mrf.mxu0
    %v458 = vadd.f32 %v311, %v457
    %v459 = vpop.f32.mrf.mxu0
    %460 = vmatprep.mubr.f32.mxu0 0.0
    %v461 = vand.u32 %v210, 4294901760
    %462 = vmatmul.mubr.f32.gmra.mxu0 %v461
    %v463 = vpop.f32.mrf.mxu0
    %v464 = vadd.f32 %v321, %v463
    %v465 = vpop.f32.mrf.mxu0
    %466 = vmatprep.mubr.f32.mxu0 0.0
    %v467 = vand.u32 %v213, 4294901760
    %468 = vmatmul.mubr.f32.gmra.mxu0 %v467
    %v469 = vpop.f32.mrf.mxu0
    %v470 = vadd.f32 %v331, %v469
    %v471 = vpop.f32.mrf.mxu0
    %472 = vmatprep.mubr.f32.mxu0 0.0
    %v473 = vand.u32 %v216, 4294901760
    %474 = vmatmul.mubr.f32.gmra.mxu0 %v473
    %v475 = vpop.f32.mrf.mxu0
    %v476 = vadd.f32 %v341, %v475
    %v477 = vpop.f32.mrf.mxu0
    %478 = vmatprep.mubr.f32.mxu0 0.0
    %v479 = vand.u32 %v219, 4294901760
    %480 = vmatmul.mubr.f32.gmra.mxu0 %v479
    %v481 = vpop.f32.mrf.mxu0
    %v482 = vadd.f32 %v351, %v481
    %v483 = vpop.f32.mrf.mxu0
    %484 = vmatprep.mubr.f32.mxu0 0.0
    %v485 = vand.u32 %v222, 4294901760
    %486 = vmatmul.mubr.f32.gmra.mxu0 %v485
    %v487 = vpop.f32.mrf.mxu0
    %v488 = vadd.f32 %v361, %v487
    %v489 = vpop.f32.mrf.mxu0
    %490 = vmatprep.mubr.f32.mxu0 0.0
    %v491 = vand.u32 %v225, 4294901760
    %492 = vmatmul.mubr.f32.gmra.mxu0 %v491
    %v493 = vpop.f32.mrf.mxu0
    %v494 = vadd.f32 %v371, %v493
    %v495 = vpop.f32.mrf.mxu0
    %496 = vdwg.mxu0
    %497 = vmatprep.subr.mxu0 0.0
    %498 = vmatpush1.msra.mxu0 0.0
    %499 = vmatprep.subr.mxu0 0.0
    %500 = vmatpush1.msra.mxu0 0.0
    %501 = vmatprep.subr.mxu0 0.0
    %502 = vmatpush1.msra.mxu0 0.0
    %503 = vmatprep.subr.mxu0 0.0
    %504 = vmatpush1.msra.mxu0 0.0
    %505 = vmatprep.subr.mxu0 0.0
    %506 = vmatpush1.msra.mxu0 0.0
    %507 = vmatprep.subr.mxu0 0.0
    %508 = vmatpush1.msra.mxu0 0.0
    %509 = vmatprep.subr.mxu0 0.0
    %510 = vmatpush1.msra.mxu0 0.0
    %511 = vmatprep.subr.mxu0 0.0
    %512 = vmatpush1.msra.mxu0 0.0
    %513 = vmatprep.subr.mxu0 0.0
    %514 = vmatpush1.msra.mxu0 0.0
    %515 = vmatprep.subr.mxu0 0.0
    %516 = vmatpush1.msra.mxu0 0.0
    %517 = vmatprep.subr.mxu0 0.0
    %518 = vmatpush1.msra.mxu0 0.0
    %519 = vmatprep.subr.mxu0 0.0
    %520 = vmatpush1.msra.mxu0 0.0
    %521 = vmatprep.subr.mxu0 0.0
    %522 = vmatpush1.msra.mxu0 0.0
    %523 = vmatprep.subr.mxu0 0.0
    %524 = vmatpush1.msra.mxu0 0.0
    %525 = vmatprep.subr.mxu0 0.0
    %v526 = vand.u32 %v194, 4294901760
    %v527 = vsub.f32 %v194, %v526
    %528 = vmatpush1.msra.mxu0 %v527
    %529 = vmatprep.subr.mxu0 0.0
    %v530 = vand.u32 %v193, 4294901760
    %v531 = vsub.f32 %v193, %v530
    %532 = vmatpush1.msra.mxu0 %v531
    %533 = vmatprep.subr.mxu0 0.0
    %534 = vmatpush2.msra.mxu0 0.0
    %535 = vmatprep.subr.mxu0 0.0
    %536 = vmatpush2.msra.mxu0 0.0
    %537 = vmatprep.subr.mxu0 0.0
    %538 = vmatpush2.msra.mxu0 0.0
    %539 = vmatprep.subr.mxu0 0.0
    %540 = vmatpush2.msra.mxu0 0.0
    %541 = vmatprep.subr.mxu0 0.0
    %542 = vmatpush2.msra.mxu0 0.0
    %543 = vmatprep.subr.mxu0 0.0
    %544 = vmatpush2.msra.mxu0 0.0
    %545 = vmatprep.subr.mxu0 0.0
    %546 = vmatpush2.msra.mxu0 0.0
    %547 = vmatprep.subr.mxu0 0.0
    %548 = vmatpush2.msra.mxu0 0.0
    %549 = vmatprep.subr.mxu0 0.0
    %550 = vmatpush2.msra.mxu0 0.0
    %551 = vmatprep.subr.mxu0 0.0
    %552 = vmatpush2.msra.mxu0 0.0
    %553 = vmatprep.subr.mxu0 0.0
    %554 = vmatpush2.msra.mxu0 0.0
    %555 = vmatprep.subr.mxu0 0.0
    %556 = vmatpush2.msra.mxu0 0.0
    %557 = vmatprep.subr.mxu0 0.0
    %558 = vmatpush2.msra.mxu0 0.0
    %559 = vmatprep.subr.mxu0 0.0
    %560 = vmatpush2.msra.mxu0 0.0
    %561 = vmatprep.subr.mxu0 0.0
    %562 = vmatpush2.msra.mxu0 0.0
    %563 = vmatprep.subr.mxu0 0.0
    %564 = vmatpush2.msra.mxu0 0.0
    %565 = vmatprep.mubr.f32.mxu0 0.0
    %v566 = vand.u32 %v204, 4294901760
    %v567 = vsub.f32 %v204, %v566
    %568 = vmatmul.mubr.f32.gmra.mxu0 %v567
    %v569 = vpop.f32.mrf.mxu0
    %v570 = vadd.f32 %v452, %v569
    %v571 = vpop.f32.mrf.mxu0
    %572 = vmatprep.mubr.f32.mxu0 0.0
    %v573 = vand.u32 %v207, 4294901760
    %v574 = vsub.f32 %v207, %v573
    %575 = vmatmul.mubr.f32.gmra.mxu0 %v574
    %v576 = vpop.f32.mrf.mxu0
    %v577 = vadd.f32 %v458, %v576
    %v578 = vpop.f32.mrf.mxu0
    %579 = vmatprep.mubr.f32.mxu0 0.0
    %v580 = vand.u32 %v210, 4294901760
    %v581 = vsub.f32 %v210, %v580
    %582 = vmatmul.mubr.f32.gmra.mxu0 %v581
    %v583 = vpop.f32.mrf.mxu0
    %v584 = vadd.f32 %v464, %v583
    %v585 = vpop.f32.mrf.mxu0
    %586 = vmatprep.mubr.f32.mxu0 0.0
    %v587 = vand.u32 %v213, 4294901760
    %v588 = vsub.f32 %v213, %v587
    %589 = vmatmul.mubr.f32.gmra.mxu0 %v588
    %v590 = vpop.f32.mrf.mxu0
    %v591 = vadd.f32 %v470, %v590
    %v592 = vpop.f32.mrf.mxu0
    %593 = vmatprep.mubr.f32.mxu0 0.0
    %v594 = vand.u32 %v216, 4294901760
    %v595 = vsub.f32 %v216, %v594
    %596 = vmatmul.mubr.f32.gmra.mxu0 %v595
    %v597 = vpop.f32.mrf.mxu0
    %v598 = vadd.f32 %v476, %v597
    %v599 = vpop.f32.mrf.mxu0
    %600 = vmatprep.mubr.f32.mxu0 0.0
    %v601 = vand.u32 %v219, 4294901760
    %v602 = vsub.f32 %v219, %v601
    %603 = vmatmul.mubr.f32.gmra.mxu0 %v602
    %v604 = vpop.f32.mrf.mxu0
    %v605 = vadd.f32 %v482, %v604
    %v606 = vpop.f32.mrf.mxu0
    %607 = vmatprep.mubr.f32.mxu0 0.0
    %v608 = vand.u32 %v222, 4294901760
    %v609 = vsub.f32 %v222, %v608
    %610 = vmatmul.mubr.f32.gmra.mxu0 %v609
    %v611 = vpop.f32.mrf.mxu0
    %v612 = vadd.f32 %v488, %v611
    %v613 = vpop.f32.mrf.mxu0
    %614 = vmatprep.mubr.f32.mxu0 0.0
    %v615 = vand.u32 %v225, 4294901760
    %v616 = vsub.f32 %v225, %v615
    %617 = vmatmul.mubr.f32.gmra.mxu0 %v616
    %v618 = vpop.f32.mrf.mxu0
    %v619 = vadd.f32 %v494, %v618
    %v620 = vpop.f32.mrf.mxu0
    %621 = vdwg.mxu0
    %622 = vmatprep.subr.mxu0 0.0
    %623 = vmatpush1.msra.mxu0 0.0
    %624 = vmatprep.subr.mxu0 0.0
    %625 = vmatpush1.msra.mxu0 0.0
    %626 = vmatprep.subr.mxu0 0.0
    %627 = vmatpush1.msra.mxu0 0.0
    %628 = vmatprep.subr.mxu0 0.0
    %629 = vmatpush1.msra.mxu0 0.0
    %630 = vmatprep.subr.mxu0 0.0
    %631 = vmatpush1.msra.mxu0 0.0
    %632 = vmatprep.subr.mxu0 0.0
    %633 = vmatpush1.msra.mxu0 0.0
    %634 = vmatprep.subr.mxu0 0.0
    %635 = vmatpush1.msra.mxu0 0.0
    %636 = vmatprep.subr.mxu0 0.0
    %637 = vmatpush1.msra.mxu0 0.0
    %638 = vmatprep.subr.mxu0 0.0
    %639 = vmatpush1.msra.mxu0 0.0
    %640 = vmatprep.subr.mxu0 0.0
    %641 = vmatpush1.msra.mxu0 0.0
    %642 = vmatprep.subr.mxu0 0.0
    %643 = vmatpush1.msra.mxu0 0.0
    %644 = vmatprep.subr.mxu0 0.0
    %645 = vmatpush1.msra.mxu0 0.0
    %646 = vmatprep.subr.mxu0 0.0
    %647 = vmatpush1.msra.mxu0 0.0
    %648 = vmatprep.subr.mxu0 0.0
    %649 = vmatpush1.msra.mxu0 0.0
    %650 = vmatprep.subr.mxu0 0.0
    %v651 = vand.u32 %v194, 4294901760
    %652 = vmatpush1.msra.mxu0 %v651
    %653 = vmatprep.subr.mxu0 0.0
    %v654 = vand.u32 %v193, 4294901760
    %655 = vmatpush1.msra.mxu0 %v654
    %656 = vmatprep.subr.mxu0 0.0
    %657 = vmatpush2.msra.mxu0 0.0
    %658 = vmatprep.subr.mxu0 0.0
    %659 = vmatpush2.msra.mxu0 0.0
    %660 = vmatprep.subr.mxu0 0.0
    %661 = vmatpush2.msra.mxu0 0.0
    %662 = vmatprep.subr.mxu0 0.0
    %663 = vmatpush2.msra.mxu0 0.0
    %664 = vmatprep.subr.mxu0 0.0
    %665 = vmatpush2.msra.mxu0 0.0
    %666 = vmatprep.subr.mxu0 0.0
    %667 = vmatpush2.msra.mxu0 0.0
    %668 = vmatprep.subr.mxu0 0.0
    %669 = vmatpush2.msra.mxu0 0.0
    %670 = vmatprep.subr.mxu0 0.0
    %671 = vmatpush2.msra.mxu0 0.0
    %672 = vmatprep.subr.mxu0 0.0
    %673 = vmatpush2.msra.mxu0 0.0
    %674 = vmatprep.subr.mxu0 0.0
    %675 = vmatpush2.msra.mxu0 0.0
    %676 = vmatprep.subr.mxu0 0.0
    %677 = vmatpush2.msra.mxu0 0.0
    %678 = vmatprep.subr.mxu0 0.0
    %679 = vmatpush2.msra.mxu0 0.0
    %680 = vmatprep.subr.mxu0 0.0
    %681 = vmatpush2.msra.mxu0 0.0
    %682 = vmatprep.subr.mxu0 0.0
    %683 = vmatpush2.msra.mxu0 0.0
    %684 = vmatprep.subr.mxu0 0.0
    %685 = vmatpush2.msra.mxu0 0.0
    %686 = vmatprep.subr.mxu0 0.0
    %687 = vmatpush2.msra.mxu0 0.0
    %688 = vmatprep.mubr.f32.mxu0 0.0
    %v689 = vand.u32 %v204, 4294901760
    %v690 = vsub.f32 %v204, %v689
    %v691 = vand.u32 %v690, 4294901760
    %692 = vmatmul.mubr.f32.gmra.mxu0 %v691
    %v693 = vpop.f32.mrf.mxu0
    %v694 = vadd.f32 %v570, %v693
    %v695 = vpop.f32.mrf.mxu0
    %696 = vmatprep.mubr.f32.mxu0 0.0
    %v697 = vand.u32 %v207, 4294901760
    %v698 = vsub.f32 %v207, %v697
    %v699 = vand.u32 %v698, 4294901760
    %700 = vmatmul.mubr.f32.gmra.mxu0 %v699
    %v701 = vpop.f32.mrf.mxu0
    %v702 = vadd.f32 %v577, %v701
    %v703 = vpop.f32.mrf.mxu0
    %704 = vmatprep.mubr.f32.mxu0 0.0
    %v705 = vand.u32 %v210, 4294901760
    %v706 = vsub.f32 %v210, %v705
    %v707 = vand.u32 %v706, 4294901760
    %708 = vmatmul.mubr.f32.gmra.mxu0 %v707
    %v709 = vpop.f32.mrf.mxu0
    %v710 = vadd.f32 %v584, %v709
    %v711 = vpop.f32.mrf.mxu0
    %712 = vmatprep.mubr.f32.mxu0 0.0
    %v713 = vand.u32 %v213, 4294901760
    %v714 = vsub.f32 %v213, %v713
    %v715 = vand.u32 %v714, 4294901760
    %716 = vmatmul.mubr.f32.gmra.mxu0 %v715
    %v717 = vpop.f32.mrf.mxu0
    %v718 = vadd.f32 %v591, %v717
    %v719 = vpop.f32.mrf.mxu0
    %720 = vmatprep.mubr.f32.mxu0 0.0
    %v721 = vand.u32 %v216, 4294901760
    %v722 = vsub.f32 %v216, %v721
    %v723 = vand.u32 %v722, 4294901760
    %724 = vmatmul.mubr.f32.gmra.mxu0 %v723
    %v725 = vpop.f32.mrf.mxu0
    %v726 = vadd.f32 %v598, %v725
    %v727 = vpop.f32.mrf.mxu0
    %728 = vmatprep.mubr.f32.mxu0 0.0
    %v729 = vand.u32 %v219, 4294901760
    %v730 = vsub.f32 %v219, %v729
    %v731 = vand.u32 %v730, 4294901760
    %732 = vmatmul.mubr.f32.gmra.mxu0 %v731
    %v733 = vpop.f32.mrf.mxu0
    %v734 = vadd.f32 %v605, %v733
    %v735 = vpop.f32.mrf.mxu0
    %736 = vmatprep.mubr.f32.mxu0 0.0
    %v737 = vand.u32 %v222, 4294901760
    %v738 = vsub.f32 %v222, %v737
    %v739 = vand.u32 %v738, 4294901760
    %740 = vmatmul.mubr.f32.gmra.mxu0 %v739
    %v741 = vpop.f32.mrf.mxu0
    %v742 = vadd.f32 %v612, %v741
    %v743 = vpop.f32.mrf.mxu0
    %744 = vmatprep.mubr.f32.mxu0 0.0
    %v745 = vand.u32 %v225, 4294901760
    %v746 = vsub.f32 %v225, %v745
    %v747 = vand.u32 %v746, 4294901760
    %748 = vmatmul.mubr.f32.gmra.mxu0 %v747
    %v749 = vpop.f32.mrf.mxu0
    %v750 = vadd.f32 %v619, %v749
    %v751 = vpop.f32.mrf.mxu0
    %752 = vdwg.mxu0
    %753 = vmatprep.subr.mxu0 0.0
    %754 = vmatpush1.msra.mxu0 0.0
    %755 = vmatprep.subr.mxu0 0.0
    %756 = vmatpush1.msra.mxu0 0.0
    %757 = vmatprep.subr.mxu0 0.0
    %758 = vmatpush1.msra.mxu0 0.0
    %759 = vmatprep.subr.mxu0 0.0
    %760 = vmatpush1.msra.mxu0 0.0
    %761 = vmatprep.subr.mxu0 0.0
    %762 = vmatpush1.msra.mxu0 0.0
    %763 = vmatprep.subr.mxu0 0.0
    %764 = vmatpush1.msra.mxu0 0.0
    %765 = vmatprep.subr.mxu0 0.0
    %766 = vmatpush1.msra.mxu0 0.0
    %767 = vmatprep.subr.mxu0 0.0
    %768 = vmatpush1.msra.mxu0 0.0
    %769 = vmatprep.subr.mxu0 0.0
    %770 = vmatpush1.msra.mxu0 0.0
    %771 = vmatprep.subr.mxu0 0.0
    %772 = vmatpush1.msra.mxu0 0.0
    %773 = vmatprep.subr.mxu0 0.0
    %774 = vmatpush1.msra.mxu0 0.0
    %775 = vmatprep.subr.mxu0 0.0
    %776 = vmatpush1.msra.mxu0 0.0
    %777 = vmatprep.subr.mxu0 0.0
    %778 = vmatpush1.msra.mxu0 0.0
    %779 = vmatprep.subr.mxu0 0.0
    %780 = vmatpush1.msra.mxu0 0.0
    %781 = vmatprep.subr.mxu0 0.0
    %v782 = vand.u32 %v194, 4294901760
    %v783 = vsub.f32 %v194, %v782
    %v784 = vand.u32 %v783, 4294901760
    %785 = vmatpush1.msra.mxu0 %v784
    %786 = vmatprep.subr.mxu0 0.0
    %v787 = vand.u32 %v193, 4294901760
    %v788 = vsub.f32 %v193, %v787
    %v789 = vand.u32 %v788, 4294901760
    %790 = vmatpush1.msra.mxu0 %v789
    %791 = vmatprep.subr.mxu0 0.0
    %792 = vmatpush2.msra.mxu0 0.0
    %793 = vmatprep.subr.mxu0 0.0
    %794 = vmatpush2.msra.mxu0 0.0
    %795 = vmatprep.subr.mxu0 0.0
    %796 = vmatpush2.msra.mxu0 0.0
    %797 = vmatprep.subr.mxu0 0.0
    %798 = vmatpush2.msra.mxu0 0.0
    %799 = vmatprep.subr.mxu0 0.0
    %800 = vmatpush2.msra.mxu0 0.0
    %801 = vmatprep.subr.mxu0 0.0
    %802 = vmatpush2.msra.mxu0 0.0
    %803 = vmatprep.subr.mxu0 0.0
    %804 = vmatpush2.msra.mxu0 0.0
    %805 = vmatprep.subr.mxu0 0.0
    %806 = vmatpush2.msra.mxu0 0.0
    %807 = vmatprep.subr.mxu0 0.0
    %808 = vmatpush2.msra.mxu0 0.0
    %809 = vmatprep.subr.mxu0 0.0
    %810 = vmatpush2.msra.mxu0 0.0
    %811 = vmatprep.subr.mxu0 0.0
    %812 = vmatpush2.msra.mxu0 0.0
    %813 = vmatprep.subr.mxu0 0.0
    %814 = vmatpush2.msra.mxu0 0.0
    %815 = vmatprep.subr.mxu0 0.0
    %816 = vmatpush2.msra.mxu0 0.0
    %817 = vmatprep.subr.mxu0 0.0
    %818 = vmatpush2.msra.mxu0 0.0
    %819 = vmatprep.subr.mxu0 0.0
    %820 = vmatpush2.msra.mxu0 0.0
    %821 = vmatprep.subr.mxu0 0.0
    %822 = vmatpush2.msra.mxu0 0.0
    %823 = vmatprep.mubr.f32.mxu0 0.0
    %v824 = vand.u32 %v204, 4294901760
    %825 = vmatmul.mubr.f32.gmra.mxu0 %v824
    %v826 = vpop.f32.mrf.mxu0
    %v827 = vadd.f32 %v694, %v826
    %v828 = vpop.f32.mrf.mxu0
    %829 = vmatprep.mubr.f32.mxu0 0.0
    %v830 = vand.u32 %v207, 4294901760
    %831 = vmatmul.mubr.f32.gmra.mxu0 %v830
    %v832 = vpop.f32.mrf.mxu0
    %v833 = vadd.f32 %v702, %v832
    %v834 = vpop.f32.mrf.mxu0
    %835 = vmatprep.mubr.f32.mxu0 0.0
    %v836 = vand.u32 %v210, 4294901760
    %837 = vmatmul.mubr.f32.gmra.mxu0 %v836
    %v838 = vpop.f32.mrf.mxu0
    %v839 = vadd.f32 %v710, %v838
    %v840 = vpop.f32.mrf.mxu0
    %841 = vmatprep.mubr.f32.mxu0 0.0
    %v842 = vand.u32 %v213, 4294901760
    %843 = vmatmul.mubr.f32.gmra.mxu0 %v842
    %v844 = vpop.f32.mrf.mxu0
    %v845 = vadd.f32 %v718, %v844
    %v846 = vpop.f32.mrf.mxu0
    %847 = vmatprep.mubr.f32.mxu0 0.0
    %v848 = vand.u32 %v216, 4294901760
    %849 = vmatmul.mubr.f32.gmra.mxu0 %v848
    %v850 = vpop.f32.mrf.mxu0
    %v851 = vadd.f32 %v726, %v850
    %v852 = vpop.f32.mrf.mxu0
    %853 = vmatprep.mubr.f32.mxu0 0.0
    %v854 = vand.u32 %v219, 4294901760
    %855 = vmatmul.mubr.f32.gmra.mxu0 %v854
    %v856 = vpop.f32.mrf.mxu0
    %v857 = vadd.f32 %v734, %v856
    %v858 = vpop.f32.mrf.mxu0
    %859 = vmatprep.mubr.f32.mxu0 0.0
    %v860 = vand.u32 %v222, 4294901760
    %861 = vmatmul.mubr.f32.gmra.mxu0 %v860
    %v862 = vpop.f32.mrf.mxu0
    %v863 = vadd.f32 %v742, %v862
    %v864 = vpop.f32.mrf.mxu0
    %865 = vmatprep.mubr.f32.mxu0 0.0
    %v866 = vand.u32 %v225, 4294901760
    %867 = vmatmul.mubr.f32.gmra.mxu0 %v866
    %v868 = vpop.f32.mrf.mxu0
    %v869 = vadd.f32 %v750, %v868
    %v870 = vpop.f32.mrf.mxu0
    %871 = vdwg.mxu0
    %872 = vmatprep.subr.mxu0 0.0
    %873 = vmatpush1.msra.mxu0 0.0
    %874 = vmatprep.subr.mxu0 0.0
    %875 = vmatpush1.msra.mxu0 0.0
    %876 = vmatprep.subr.mxu0 0.0
    %877 = vmatpush1.msra.mxu0 0.0
    %878 = vmatprep.subr.mxu0 0.0
    %879 = vmatpush1.msra.mxu0 0.0
    %880 = vmatprep.subr.mxu0 0.0
    %881 = vmatpush1.msra.mxu0 0.0
    %882 = vmatprep.subr.mxu0 0.0
    %883 = vmatpush1.msra.mxu0 0.0
    %884 = vmatprep.subr.mxu0 0.0
    %885 = vmatpush1.msra.mxu0 0.0
    %886 = vmatprep.subr.mxu0 0.0
    %887 = vmatpush1.msra.mxu0 0.0
    %888 = vmatprep.subr.mxu0 0.0
    %889 = vmatpush1.msra.mxu0 0.0
    %890 = vmatprep.subr.mxu0 0.0
    %891 = vmatpush1.msra.mxu0 0.0
    %892 = vmatprep.subr.mxu0 0.0
    %893 = vmatpush1.msra.mxu0 0.0
    %894 = vmatprep.subr.mxu0 0.0
    %895 = vmatpush1.msra.mxu0 0.0
    %896 = vmatprep.subr.mxu0 0.0
    %897 = vmatpush1.msra.mxu0 0.0
    %898 = vmatprep.subr.mxu0 0.0
    %899 = vmatpush1.msra.mxu0 0.0
    %900 = vmatprep.subr.mxu0 0.0
    %v901 = vand.u32 %v194, 4294901760
    %902 = vmatpush1.msra.mxu0 %v901
    %903 = vmatprep.subr.mxu0 0.0
    %v904 = vand.u32 %v193, 4294901760
    %905 = vmatpush1.msra.mxu0 %v904
    %906 = vmatprep.subr.mxu0 0.0
    %907 = vmatpush2.msra.mxu0 0.0
    %908 = vmatprep.subr.mxu0 0.0
    %909 = vmatpush2.msra.mxu0 0.0
    %910 = vmatprep.subr.mxu0 0.0
    %911 = vmatpush2.msra.mxu0 0.0
    %912 = vmatprep.subr.mxu0 0.0
    %913 = vmatpush2.msra.mxu0 0.0
    %914 = vmatprep.subr.mxu0 0.0
    %915 = vmatpush2.msra.mxu0 0.0
    %916 = vmatprep.subr.mxu0 0.0
    %917 = vmatpush2.msra.mxu0 0.0
    %918 = vmatprep.subr.mxu0 0.0
    %919 = vmatpush2.msra.mxu0 0.0
    %920 = vmatprep.subr.mxu0 0.0
    %921 = vmatpush2.msra.mxu0 0.0
    %922 = vmatprep.subr.mxu0 0.0
    %923 = vmatpush2.msra.mxu0 0.0
    %924 = vmatprep.subr.mxu0 0.0
    %925 = vmatpush2.msra.mxu0 0.0
    %926 = vmatprep.subr.mxu0 0.0
    %927 = vmatpush2.msra.mxu0 0.0
    %928 = vmatprep.subr.mxu0 0.0
    %929 = vmatpush2.msra.mxu0 0.0
    %930 = vmatprep.subr.mxu0 0.0
    %931 = vmatpush2.msra.mxu0 0.0
    %932 = vmatprep.subr.mxu0 0.0
    %933 = vmatpush2.msra.mxu0 0.0
    %934 = vmatprep.subr.mxu0 0.0
    %935 = vmatpush2.msra.mxu0 0.0
    %936 = vmatprep.subr.mxu0 0.0
    %937 = vmatpush2.msra.mxu0 0.0
    %938 = vmatprep.mubr.f32.mxu0 0.0
    %v939 = vand.u32 %v204, 4294901760
    %940 = vmatmul.mubr.f32.gmra.mxu0 %v939
    %v941 = vpop.f32.mrf.mxu0
    %v942 = vadd.f32 %v827, %v941
    %v943 = vpop.f32.mrf.mxu0
    %944 = vmatprep.mubr.f32.mxu0 0.0
    %v945 = vand.u32 %v207, 4294901760
    %946 = vmatmul.mubr.f32.gmra.mxu0 %v945
    %v947 = vpop.f32.mrf.mxu0
    %v948 = vadd.f32 %v833, %v947
    %v949 = vpop.f32.mrf.mxu0
    %950 = vmatprep.mubr.f32.mxu0 0.0
    %v951 = vand.u32 %v210, 4294901760
    %952 = vmatmul.mubr.f32.gmra.mxu0 %v951
    %v953 = vpop.f32.mrf.mxu0
    %v954 = vadd.f32 %v839, %v953
    %v955 = vpop.f32.mrf.mxu0
    %956 = vmatprep.mubr.f32.mxu0 0.0
    %v957 = vand.u32 %v213, 4294901760
    %958 = vmatmul.mubr.f32.gmra.mxu0 %v957
    %v959 = vpop.f32.mrf.mxu0
    %v960 = vadd.f32 %v845, %v959
    %v961 = vpop.f32.mrf.mxu0
    %962 = vmatprep.mubr.f32.mxu0 0.0
    %v963 = vand.u32 %v216, 4294901760
    %964 = vmatmul.mubr.f32.gmra.mxu0 %v963
    %v965 = vpop.f32.mrf.mxu0
    %v966 = vadd.f32 %v851, %v965
    %v967 = vpop.f32.mrf.mxu0
    %968 = vmatprep.mubr.f32.mxu0 0.0
    %v969 = vand.u32 %v219, 4294901760
    %970 = vmatmul.mubr.f32.gmra.mxu0 %v969
    %v971 = vpop.f32.mrf.mxu0
    %v972 = vadd.f32 %v857, %v971
    %v973 = vpop.f32.mrf.mxu0
    %974 = vmatprep.mubr.f32.mxu0 0.0
    %v975 = vand.u32 %v222, 4294901760
    %976 = vmatmul.mubr.f32.gmra.mxu0 %v975
    %v977 = vpop.f32.mrf.mxu0
    %v978 = vadd.f32 %v863, %v977
    %v979 = vpop.f32.mrf.mxu0
    %980 = vmatprep.mubr.f32.mxu0 0.0
    %v981 = vand.u32 %v225, 4294901760
    %982 = vmatmul.mubr.f32.gmra.mxu0 %v981
    %v983 = vpop.f32.mrf.mxu0
    %v984 = vadd.f32 %v869, %v983
    %v985 = vpop.f32.mrf.mxu0
    %986 = vdwg.mxu0
    %987 = vst [vmem:[#allocation2] sm:$0xff] %v942
    %988 = vst [vmem:[#allocation2 + $0x8] sm:$0xff] %v948
    %989 = vst [vmem:[#allocation2 + $0x10] sm:$0xff] %v954
    %990 = vst [vmem:[#allocation2 + $0x18] sm:$0xff] %v960
    %991 = vst [vmem:[#allocation2 + $0x20] sm:$0xff] %v966
    %992 = vst [vmem:[#allocation2 + $0x28] sm:$0xff] %v972
    %993 = vst [vmem:[#allocation2 + $0x30] sm:$0xff] %v978
    %994 = vst [vmem:[#allocation2 + $0x38] sm:$0xff] %v984
    %v995 = vld [vmem:[%s7] sm:$0xff]
    %v996 = vld [vmem:[%s7 + $0x8] sm:$0xff]
    %v997 = vld [vmem:[%s7 + $0x10] sm:$0xff]
    %v998 = vld [vmem:[%s7 + $0x18] sm:$0xff]
    %v999 = vld [vmem:[%s8] sm:$0xff]
    %v1000 = vld [vmem:[%s9] sm:$0xff]
    %v1001 = vld [vmem:[#allocation2] sm:$0xff]
    %vm1002 = vcmask 261120
    %v1004 = vsel %vm1002, %v999, 0
    %1006 = vmatprep.subr.mxu0 0.0
    %1007 = vmatpush1.msra.mxu0 0.0
    %1008 = vmatprep.subr.mxu0 0.0
    %1009 = vmatpush1.msra.mxu0 0.0
    %1010 = vmatprep.subr.mxu0 0.0
    %1011 = vmatpush1.msra.mxu0 0.0
    %1012 = vmatprep.subr.mxu0 0.0
    %1013 = vmatpush1.msra.mxu0 0.0
    %1014 = vmatprep.subr.mxu0 0.0
    %1015 = vmatpush1.msra.mxu0 0.0
    %1016 = vmatprep.subr.mxu0 0.0
    %1017 = vmatpush1.msra.mxu0 0.0
    %1018 = vmatprep.subr.mxu0 0.0
    %1019 = vmatpush1.msra.mxu0 0.0
    %1020 = vmatprep.subr.mxu0 0.0
    %1021 = vmatpush1.msra.mxu0 0.0
    %1022 = vmatprep.subr.mxu0 0.0
    %1023 = vmatpush1.msra.mxu0 0.0
    %1024 = vmatprep.subr.mxu0 0.0
    %1025 = vmatpush1.msra.mxu0 0.0
    %1026 = vmatprep.subr.mxu0 0.0
    %1027 = vmatpush1.msra.mxu0 0.0
    %1028 = vmatprep.subr.mxu0 0.0
    %1029 = vmatpush1.msra.mxu0 0.0
    %1030 = vmatprep.subr.mxu0 0.0
    %v1031 = vand.u32 %v998, 4294901760
    %1032 = vmatpush1.msra.mxu0 %v1031
    %1033 = vmatprep.subr.mxu0 0.0
    %v1034 = vand.u32 %v997, 4294901760
    %1035 = vmatpush1.msra.mxu0 %v1034
    %1036 = vmatprep.subr.mxu0 0.0
    %v1037 = vand.u32 %v996, 4294901760
    %1038 = vmatpush1.msra.mxu0 %v1037
    %1039 = vmatprep.subr.mxu0 0.0
    %v1040 = vand.u32 %v995, 4294901760
    %1041 = vmatpush1.msra.mxu0 %v1040
    %1042 = vmatprep.subr.mxu0 0.0
    %1043 = vmatpush2.msra.mxu0 0.0
    %1044 = vmatprep.subr.mxu0 0.0
    %1045 = vmatpush2.msra.mxu0 0.0
    %1046 = vmatprep.subr.mxu0 0.0
    %1047 = vmatpush2.msra.mxu0 0.0
    %1048 = vmatprep.subr.mxu0 0.0
    %1049 = vmatpush2.msra.mxu0 0.0
    %1050 = vmatprep.subr.mxu0 0.0
    %1051 = vmatpush2.msra.mxu0 0.0
    %1052 = vmatprep.subr.mxu0 0.0
    %1053 = vmatpush2.msra.mxu0 0.0
    %1054 = vmatprep.subr.mxu0 0.0
    %1055 = vmatpush2.msra.mxu0 0.0
    %1056 = vmatprep.subr.mxu0 0.0
    %1057 = vmatpush2.msra.mxu0 0.0
    %1058 = vmatprep.subr.mxu0 0.0
    %1059 = vmatpush2.msra.mxu0 0.0
    %1060 = vmatprep.subr.mxu0 0.0
    %1061 = vmatpush2.msra.mxu0 0.0
    %1062 = vmatprep.subr.mxu0 0.0
    %1063 = vmatpush2.msra.mxu0 0.0
    %1064 = vmatprep.subr.mxu0 0.0
    %1065 = vmatpush2.msra.mxu0 0.0
    %1066 = vmatprep.subr.mxu0 0.0
    %1067 = vmatpush2.msra.mxu0 0.0
    %1068 = vmatprep.subr.mxu0 0.0
    %1069 = vmatpush2.msra.mxu0 0.0
    %1070 = vmatprep.subr.mxu0 0.0
    %1071 = vmatpush2.msra.mxu0 0.0
    %1072 = vmatprep.subr.mxu0 0.0
    %1073 = vmatpush2.msra.mxu0 0.0
    %1074 = vmatprep.mubr.f32.mxu0 0.0
    %v1075 = vand.u32 %v1004, 4294901760
    %v1076 = vsub.f32 %v1004, %v1075
    %v1077 = vand.u32 %v1076, 4294901760
    %v1078 = vsub.f32 %v1076, %v1077
    %v1079 = vand.u32 %v1078, 4294901760
    %1080 = vmatmul.mubr.f32.gmra.mxu0 %v1079
    %v1081 = vpop.f32.mrf.mxu0
    %v1082 = vadd.f32 0.0, %v1081
    %v1083 = vpop.f32.mrf.mxu0
    %1084 = vdwg.mxu0
    %1085 = vmatprep.subr.mxu0 0.0
    %1086 = vmatpush1.msra.mxu0 0.0
    %1087 = vmatprep.subr.mxu0 0.0
    %1088 = vmatpush1.msra.mxu0 0.0
    %1089 = vmatprep.subr.mxu0 0.0
    %1090 = vmatpush1.msra.mxu0 0.0
    %1091 = vmatprep.subr.mxu0 0.0
    %1092 = vmatpush1.msra.mxu0 0.0
    %1093 = vmatprep.subr.mxu0 0.0
    %1094 = vmatpush1.msra.mxu0 0.0
    %1095 = vmatprep.subr.mxu0 0.0
    %1096 = vmatpush1.msra.mxu0 0.0
    %1097 = vmatprep.subr.mxu0 0.0
    %1098 = vmatpush1.msra.mxu0 0.0
    %1099 = vmatprep.subr.mxu0 0.0
    %1100 = vmatpush1.msra.mxu0 0.0
    %1101 = vmatprep.subr.mxu0 0.0
    %1102 = vmatpush1.msra.mxu0 0.0
    %1103 = vmatprep.subr.mxu0 0.0
    %1104 = vmatpush1.msra.mxu0 0.0
    %1105 = vmatprep.subr.mxu0 0.0
    %1106 = vmatpush1.msra.mxu0 0.0
    %1107 = vmatprep.subr.mxu0 0.0
    %1108 = vmatpush1.msra.mxu0 0.0
    %1109 = vmatprep.subr.mxu0 0.0
    %v1110 = vand.u32 %v998, 4294901760
    %v1111 = vsub.f32 %v998, %v1110
    %v1112 = vand.u32 %v1111, 4294901760
    %v1113 = vsub.f32 %v1111, %v1112
    %v1114 = vand.u32 %v1113, 4294901760
    %1115 = vmatpush1.msra.mxu0 %v1114
    %1116 = vmatprep.subr.mxu0 0.0
    %v1117 = vand.u32 %v997, 4294901760
    %v1118 = vsub.f32 %v997, %v1117
    %v1119 = vand.u32 %v1118, 4294901760
    %v1120 = vsub.f32 %v1118, %v1119
    %v1121 = vand.u32 %v1120, 4294901760
    %1122 = vmatpush1.msra.mxu0 %v1121
    %1123 = vmatprep.subr.mxu0 0.0
    %v1124 = vand.u32 %v996, 4294901760
    %v1125 = vsub.f32 %v996, %v1124
    %v1126 = vand.u32 %v1125, 4294901760
    %v1127 = vsub.f32 %v1125, %v1126
    %v1128 = vand.u32 %v1127, 4294901760
    %1129 = vmatpush1.msra.mxu0 %v1128
    %1130 = vmatprep.subr.mxu0 0.0
    %v1131 = vand.u32 %v995, 4294901760
    %v1132 = vsub.f32 %v995, %v1131
    %v1133 = vand.u32 %v1132, 4294901760
    %v1134 = vsub.f32 %v1132, %v1133
    %v1135 = vand.u32 %v1134, 4294901760
    %1136 = vmatpush1.msra.mxu0 %v1135
    %1137 = vmatprep.subr.mxu0 0.0
    %1138 = vmatpush2.msra.mxu0 0.0
    %1139 = vmatprep.subr.mxu0 0.0
    %1140 = vmatpush2.msra.mxu0 0.0
    %1141 = vmatprep.subr.mxu0 0.0
    %1142 = vmatpush2.msra.mxu0 0.0
    %1143 = vmatprep.subr.mxu0 0.0
    %1144 = vmatpush2.msra.mxu0 0.0
    %1145 = vmatprep.subr.mxu0 0.0
    %1146 = vmatpush2.msra.mxu0 0.0
    %1147 = vmatprep.subr.mxu0 0.0
    %1148 = vmatpush2.msra.mxu0 0.0
    %1149 = vmatprep.subr.mxu0 0.0
    %1150 = vmatpush2.msra.mxu0 0.0
    %1151 = vmatprep.subr.mxu0 0.0
    %1152 = vmatpush2.msra.mxu0 0.0
    %1153 = vmatprep.subr.mxu0 0.0
    %1154 = vmatpush2.msra.mxu0 0.0
    %1155 = vmatprep.subr.mxu0 0.0
    %1156 = vmatpush2.msra.mxu0 0.0
    %1157 = vmatprep.subr.mxu0 0.0
    %1158 = vmatpush2.msra.mxu0 0.0
    %1159 = vmatprep.subr.mxu0 0.0
    %1160 = vmatpush2.msra.mxu0 0.0
    %1161 = vmatprep.subr.mxu0 0.0
    %1162 = vmatpush2.msra.mxu0 0.0
    %1163 = vmatprep.subr.mxu0 0.0
    %1164 = vmatpush2.msra.mxu0 0.0
    %1165 = vmatprep.subr.mxu0 0.0
    %1166 = vmatpush2.msra.mxu0 0.0
    %1167 = vmatprep.subr.mxu0 0.0
    %1168 = vmatpush2.msra.mxu0 0.0
    %1169 = vmatprep.mubr.f32.mxu0 0.0
    %v1170 = vand.u32 %v1004, 4294901760
    %1171 = vmatmul.mubr.f32.gmra.mxu0 %v1170
    %v1172 = vpop.f32.mrf.mxu0
    %v1173 = vadd.f32 %v1082, %v1172
    %v1174 = vpop.f32.mrf.mxu0
    %1175 = vdwg.mxu0
    %1176 = vmatprep.subr.mxu0 0.0
    %1177 = vmatpush1.msra.mxu0 0.0
    %1178 = vmatprep.subr.mxu0 0.0
    %1179 = vmatpush1.msra.mxu0 0.0
    %1180 = vmatprep.subr.mxu0 0.0
    %1181 = vmatpush1.msra.mxu0 0.0
    %1182 = vmatprep.subr.mxu0 0.0
    %1183 = vmatpush1.msra.mxu0 0.0
    %1184 = vmatprep.subr.mxu0 0.0
    %1185 = vmatpush1.msra.mxu0 0.0
    %1186 = vmatprep.subr.mxu0 0.0
    %1187 = vmatpush1.msra.mxu0 0.0
    %1188 = vmatprep.subr.mxu0 0.0
    %1189 = vmatpush1.msra.mxu0 0.0
    %1190 = vmatprep.subr.mxu0 0.0
    %1191 = vmatpush1.msra.mxu0 0.0
    %1192 = vmatprep.subr.mxu0 0.0
    %1193 = vmatpush1.msra.mxu0 0.0
    %1194 = vmatprep.subr.mxu0 0.0
    %1195 = vmatpush1.msra.mxu0 0.0
    %1196 = vmatprep.subr.mxu0 0.0
    %1197 = vmatpush1.msra.mxu0 0.0
    %1198 = vmatprep.subr.mxu0 0.0
    %1199 = vmatpush1.msra.mxu0 0.0
    %1200 = vmatprep.subr.mxu0 0.0
    %v1201 = vand.u32 %v998, 4294901760
    %v1202 = vsub.f32 %v998, %v1201
    %1203 = vmatpush1.msra.mxu0 %v1202
    %1204 = vmatprep.subr.mxu0 0.0
    %v1205 = vand.u32 %v997, 4294901760
    %v1206 = vsub.f32 %v997, %v1205
    %1207 = vmatpush1.msra.mxu0 %v1206
    %1208 = vmatprep.subr.mxu0 0.0
    %v1209 = vand.u32 %v996, 4294901760
    %v1210 = vsub.f32 %v996, %v1209
    %1211 = vmatpush1.msra.mxu0 %v1210
    %1212 = vmatprep.subr.mxu0 0.0
    %v1213 = vand.u32 %v995, 4294901760
    %v1214 = vsub.f32 %v995, %v1213
    %1215 = vmatpush1.msra.mxu0 %v1214
    %1216 = vmatprep.subr.mxu0 0.0
    %1217 = vmatpush2.msra.mxu0 0.0
    %1218 = vmatprep.subr.mxu0 0.0
    %1219 = vmatpush2.msra.mxu0 0.0
    %1220 = vmatprep.subr.mxu0 0.0
    %1221 = vmatpush2.msra.mxu0 0.0
    %1222 = vmatprep.subr.mxu0 0.0
    %1223 = vmatpush2.msra.mxu0 0.0
    %1224 = vmatprep.subr.mxu0 0.0
    %1225 = vmatpush2.msra.mxu0 0.0
    %1226 = vmatprep.subr.mxu0 0.0
    %1227 = vmatpush2.msra.mxu0 0.0
    %1228 = vmatprep.subr.mxu0 0.0
    %1229 = vmatpush2.msra.mxu0 0.0
    %1230 = vmatprep.subr.mxu0 0.0
    %1231 = vmatpush2.msra.mxu0 0.0
    %1232 = vmatprep.subr.mxu0 0.0
    %1233 = vmatpush2.msra.mxu0 0.0
    %1234 = vmatprep.subr.mxu0 0.0
    %1235 = vmatpush2.msra.mxu0 0.0
    %1236 = vmatprep.subr.mxu0 0.0
    %1237 = vmatpush2.msra.mxu0 0.0
    %1238 = vmatprep.subr.mxu0 0.0
    %1239 = vmatpush2.msra.mxu0 0.0
    %1240 = vmatprep.subr.mxu0 0.0
    %1241 = vmatpush2.msra.mxu0 0.0
    %1242 = vmatprep.subr.mxu0 0.0
    %1243 = vmatpush2.msra.mxu0 0.0
    %1244 = vmatprep.subr.mxu0 0.0
    %1245 = vmatpush2.msra.mxu0 0.0
    %1246 = vmatprep.subr.mxu0 0.0
    %1247 = vmatpush2.msra.mxu0 0.0
    %1248 = vmatprep.mubr.f32.mxu0 0.0
    %v1249 = vand.u32 %v1004, 4294901760
    %v1250 = vsub.f32 %v1004, %v1249
    %1251 = vmatmul.mubr.f32.gmra.mxu0 %v1250
    %v1252 = vpop.f32.mrf.mxu0
    %v1253 = vadd.f32 %v1173, %v1252
    %v1254 = vpop.f32.mrf.mxu0
    %1255 = vdwg.mxu0
    %1256 = vmatprep.subr.mxu0 0.0
    %1257 = vmatpush1.msra.mxu0 0.0
    %1258 = vmatprep.subr.mxu0 0.0
    %1259 = vmatpush1.msra.mxu0 0.0
    %1260 = vmatprep.subr.mxu0 0.0
    %1261 = vmatpush1.msra.mxu0 0.0
    %1262 = vmatprep.subr.mxu0 0.0
    %1263 = vmatpush1.msra.mxu0 0.0
    %1264 = vmatprep.subr.mxu0 0.0
    %1265 = vmatpush1.msra.mxu0 0.0
    %1266 = vmatprep.subr.mxu0 0.0
    %1267 = vmatpush1.msra.mxu0 0.0
    %1268 = vmatprep.subr.mxu0 0.0
    %1269 = vmatpush1.msra.mxu0 0.0
    %1270 = vmatprep.subr.mxu0 0.0
    %1271 = vmatpush1.msra.mxu0 0.0
    %1272 = vmatprep.subr.mxu0 0.0
    %1273 = vmatpush1.msra.mxu0 0.0
    %1274 = vmatprep.subr.mxu0 0.0
    %1275 = vmatpush1.msra.mxu0 0.0
    %1276 = vmatprep.subr.mxu0 0.0
    %1277 = vmatpush1.msra.mxu0 0.0
    %1278 = vmatprep.subr.mxu0 0.0
    %1279 = vmatpush1.msra.mxu0 0.0
    %1280 = vmatprep.subr.mxu0 0.0
    %v1281 = vand.u32 %v998, 4294901760
    %1282 = vmatpush1.msra.mxu0 %v1281
    %1283 = vmatprep.subr.mxu0 0.0
    %v1284 = vand.u32 %v997, 4294901760
    %1285 = vmatpush1.msra.mxu0 %v1284
    %1286 = vmatprep.subr.mxu0 0.0
    %v1287 = vand.u32 %v996, 4294901760
    %1288 = vmatpush1.msra.mxu0 %v1287
    %1289 = vmatprep.subr.mxu0 0.0
    %v1290 = vand.u32 %v995, 4294901760
    %1291 = vmatpush1.msra.mxu0 %v1290
    %1292 = vmatprep.subr.mxu0 0.0
    %1293 = vmatpush2.msra.mxu0 0.0
    %1294 = vmatprep.subr.mxu0 0.0
    %1295 = vmatpush2.msra.mxu0 0.0
    %1296 = vmatprep.subr.mxu0 0.0
    %1297 = vmatpush2.msra.mxu0 0.0
    %1298 = vmatprep.subr.mxu0 0.0
    %1299 = vmatpush2.msra.mxu0 0.0
    %1300 = vmatprep.subr.mxu0 0.0
    %1301 = vmatpush2.msra.mxu0 0.0
    %1302 = vmatprep.subr.mxu0 0.0
    %1303 = vmatpush2.msra.mxu0 0.0
    %1304 = vmatprep.subr.mxu0 0.0
    %1305 = vmatpush2.msra.mxu0 0.0
    %1306 = vmatprep.subr.mxu0 0.0
    %1307 = vmatpush2.msra.mxu0 0.0
    %1308 = vmatprep.subr.mxu0 0.0
    %1309 = vmatpush2.msra.mxu0 0.0
    %1310 = vmatprep.subr.mxu0 0.0
    %1311 = vmatpush2.msra.mxu0 0.0
    %1312 = vmatprep.subr.mxu0 0.0
    %1313 = vmatpush2.msra.mxu0 0.0
    %1314 = vmatprep.subr.mxu0 0.0
    %1315 = vmatpush2.msra.mxu0 0.0
    %1316 = vmatprep.subr.mxu0 0.0
    %1317 = vmatpush2.msra.mxu0 0.0
    %1318 = vmatprep.subr.mxu0 0.0
    %1319 = vmatpush2.msra.mxu0 0.0
    %1320 = vmatprep.subr.mxu0 0.0
    %1321 = vmatpush2.msra.mxu0 0.0
    %1322 = vmatprep.subr.mxu0 0.0
    %1323 = vmatpush2.msra.mxu0 0.0
    %1324 = vmatprep.mubr.f32.mxu0 0.0
    %v1325 = vand.u32 %v1004, 4294901760
    %v1326 = vsub.f32 %v1004, %v1325
    %v1327 = vand.u32 %v1326, 4294901760
    %1328 = vmatmul.mubr.f32.gmra.mxu0 %v1327
    %v1329 = vpop.f32.mrf.mxu0
    %v1330 = vadd.f32 %v1253, %v1329
    %v1331 = vpop.f32.mrf.mxu0
    %1332 = vdwg.mxu0
    %1333 = vmatprep.subr.mxu0 0.0
    %1334 = vmatpush1.msra.mxu0 0.0
    %1335 = vmatprep.subr.mxu0 0.0
    %1336 = vmatpush1.msra.mxu0 0.0
    %1337 = vmatprep.subr.mxu0 0.0
    %1338 = vmatpush1.msra.mxu0 0.0
    %1339 = vmatprep.subr.mxu0 0.0
    %1340 = vmatpush1.msra.mxu0 0.0
    %1341 = vmatprep.subr.mxu0 0.0
    %1342 = vmatpush1.msra.mxu0 0.0
    %1343 = vmatprep.subr.mxu0 0.0
    %1344 = vmatpush1.msra.mxu0 0.0
    %1345 = vmatprep.subr.mxu0 0.0
    %1346 = vmatpush1.msra.mxu0 0.0
    %1347 = vmatprep.subr.mxu0 0.0
    %1348 = vmatpush1.msra.mxu0 0.0
    %1349 = vmatprep.subr.mxu0 0.0
    %1350 = vmatpush1.msra.mxu0 0.0
    %1351 = vmatprep.subr.mxu0 0.0
    %1352 = vmatpush1.msra.mxu0 0.0
    %1353 = vmatprep.subr.mxu0 0.0
    %1354 = vmatpush1.msra.mxu0 0.0
    %1355 = vmatprep.subr.mxu0 0.0
    %1356 = vmatpush1.msra.mxu0 0.0
    %1357 = vmatprep.subr.mxu0 0.0
    %v1358 = vand.u32 %v998, 4294901760
    %v1359 = vsub.f32 %v998, %v1358
    %v1360 = vand.u32 %v1359, 4294901760
    %1361 = vmatpush1.msra.mxu0 %v1360
    %1362 = vmatprep.subr.mxu0 0.0
    %v1363 = vand.u32 %v997, 4294901760
    %v1364 = vsub.f32 %v997, %v1363
    %v1365 = vand.u32 %v1364, 4294901760
    %1366 = vmatpush1.msra.mxu0 %v1365
    %1367 = vmatprep.subr.mxu0 0.0
    %v1368 = vand.u32 %v996, 4294901760
    %v1369 = vsub.f32 %v996, %v1368
    %v1370 = vand.u32 %v1369, 4294901760
    %1371 = vmatpush1.msra.mxu0 %v1370
    %1372 = vmatprep.subr.mxu0 0.0
    %v1373 = vand.u32 %v995, 4294901760
    %v1374 = vsub.f32 %v995, %v1373
    %v1375 = vand.u32 %v1374, 4294901760
    %1376 = vmatpush1.msra.mxu0 %v1375
    %1377 = vmatprep.subr.mxu0 0.0
    %1378 = vmatpush2.msra.mxu0 0.0
    %1379 = vmatprep.subr.mxu0 0.0
    %1380 = vmatpush2.msra.mxu0 0.0
    %1381 = vmatprep.subr.mxu0 0.0
    %1382 = vmatpush2.msra.mxu0 0.0
    %1383 = vmatprep.subr.mxu0 0.0
    %1384 = vmatpush2.msra.mxu0 0.0
    %1385 = vmatprep.subr.mxu0 0.0
    %1386 = vmatpush2.msra.mxu0 0.0
    %1387 = vmatprep.subr.mxu0 0.0
    %1388 = vmatpush2.msra.mxu0 0.0
    %1389 = vmatprep.subr.mxu0 0.0
    %1390 = vmatpush2.msra.mxu0 0.0
    %1391 = vmatprep.subr.mxu0 0.0
    %1392 = vmatpush2.msra.mxu0 0.0
    %1393 = vmatprep.subr.mxu0 0.0
    %1394 = vmatpush2.msra.mxu0 0.0
    %1395 = vmatprep.subr.mxu0 0.0
    %1396 = vmatpush2.msra.mxu0 0.0
    %1397 = vmatprep.subr.mxu0 0.0
    %1398 = vmatpush2.msra.mxu0 0.0
    %1399 = vmatprep.subr.mxu0 0.0
    %1400 = vmatpush2.msra.mxu0 0.0
    %1401 = vmatprep.subr.mxu0 0.0
    %1402 = vmatpush2.msra.mxu0 0.0
    %1403 = vmatprep.subr.mxu0 0.0
    %1404 = vmatpush2.msra.mxu0 0.0
    %1405 = vmatprep.subr.mxu0 0.0
    %1406 = vmatpush2.msra.mxu0 0.0
    %1407 = vmatprep.subr.mxu0 0.0
    %1408 = vmatpush2.msra.mxu0 0.0
    %1409 = vmatprep.mubr.f32.mxu0 0.0
    %v1410 = vand.u32 %v1004, 4294901760
    %1411 = vmatmul.mubr.f32.gmra.mxu0 %v1410
    %v1412 = vpop.f32.mrf.mxu0
    %v1413 = vadd.f32 %v1330, %v1412
    %v1414 = vpop.f32.mrf.mxu0
    %1415 = vdwg.mxu0
    %1416 = vmatprep.subr.mxu0 0.0
    %1417 = vmatpush1.msra.mxu0 0.0
    %1418 = vmatprep.subr.mxu0 0.0
    %1419 = vmatpush1.msra.mxu0 0.0
    %1420 = vmatprep.subr.mxu0 0.0
    %1421 = vmatpush1.msra.mxu0 0.0
    %1422 = vmatprep.subr.mxu0 0.0
    %1423 = vmatpush1.msra.mxu0 0.0
    %1424 = vmatprep.subr.mxu0 0.0
    %1425 = vmatpush1.msra.mxu0 0.0
    %1426 = vmatprep.subr.mxu0 0.0
    %1427 = vmatpush1.msra.mxu0 0.0
    %1428 = vmatprep.subr.mxu0 0.0
    %1429 = vmatpush1.msra.mxu0 0.0
    %1430 = vmatprep.subr.mxu0 0.0
    %1431 = vmatpush1.msra.mxu0 0.0
    %1432 = vmatprep.subr.mxu0 0.0
    %1433 = vmatpush1.msra.mxu0 0.0
    %1434 = vmatprep.subr.mxu0 0.0
    %1435 = vmatpush1.msra.mxu0 0.0
    %1436 = vmatprep.subr.mxu0 0.0
    %1437 = vmatpush1.msra.mxu0 0.0
    %1438 = vmatprep.subr.mxu0 0.0
    %1439 = vmatpush1.msra.mxu0 0.0
    %1440 = vmatprep.subr.mxu0 0.0
    %v1441 = vand.u32 %v998, 4294901760
    %1442 = vmatpush1.msra.mxu0 %v1441
    %1443 = vmatprep.subr.mxu0 0.0
    %v1444 = vand.u32 %v997, 4294901760
    %1445 = vmatpush1.msra.mxu0 %v1444
    %1446 = vmatprep.subr.mxu0 0.0
    %v1447 = vand.u32 %v996, 4294901760
    %1448 = vmatpush1.msra.mxu0 %v1447
    %1449 = vmatprep.subr.mxu0 0.0
    %v1450 = vand.u32 %v995, 4294901760
    %1451 = vmatpush1.msra.mxu0 %v1450
    %1452 = vmatprep.subr.mxu0 0.0
    %1453 = vmatpush2.msra.mxu0 0.0
    %1454 = vmatprep.subr.mxu0 0.0
    %1455 = vmatpush2.msra.mxu0 0.0
    %1456 = vmatprep.subr.mxu0 0.0
    %1457 = vmatpush2.msra.mxu0 0.0
    %1458 = vmatprep.subr.mxu0 0.0
    %1459 = vmatpush2.msra.mxu0 0.0
    %1460 = vmatprep.subr.mxu0 0.0
    %1461 = vmatpush2.msra.mxu0 0.0
    %1462 = vmatprep.subr.mxu0 0.0
    %1463 = vmatpush2.msra.mxu0 0.0
    %1464 = vmatprep.subr.mxu0 0.0
    %1465 = vmatpush2.msra.mxu0 0.0
    %1466 = vmatprep.subr.mxu0 0.0
    %1467 = vmatpush2.msra.mxu0 0.0
    %1468 = vmatprep.subr.mxu0 0.0
    %1469 = vmatpush2.msra.mxu0 0.0
    %1470 = vmatprep.subr.mxu0 0.0
    %1471 = vmatpush2.msra.mxu0 0.0
    %1472 = vmatprep.subr.mxu0 0.0
    %1473 = vmatpush2.msra.mxu0 0.0
    %1474 = vmatprep.subr.mxu0 0.0
    %1475 = vmatpush2.msra.mxu0 0.0
    %1476 = vmatprep.subr.mxu0 0.0
    %1477 = vmatpush2.msra.mxu0 0.0
    %1478 = vmatprep.subr.mxu0 0.0
    %1479 = vmatpush2.msra.mxu0 0.0
    %1480 = vmatprep.subr.mxu0 0.0
    %1481 = vmatpush2.msra.mxu0 0.0
    %1482 = vmatprep.subr.mxu0 0.0
    %1483 = vmatpush2.msra.mxu0 0.0
    %1484 = vmatprep.mubr.f32.mxu0 0.0
    %v1485 = vand.u32 %v1004, 4294901760
    %1486 = vmatmul.mubr.f32.gmra.mxu0 %v1485
    %v1487 = vpop.f32.mrf.mxu0
    %v1488 = vadd.f32 %v1413, %v1487
    %v1489 = vpop.f32.mrf.mxu0
    %1490 = vdwg.mxu0
    %v1491 = vadd.f32 %v1001, %v1488
    %v1492 = vxor.u32 %v1491, 2147483648
    %v1493 = vmul.f32 %v1492, 1.442695
    %v1494 = vpow.pop %v1493
    %v1495 = vadd.f32 %v1494, 1.0
    %v1496 = vrcp.pop %v1495
    %v1497 = vmul.f32 1.0, %v1496
    %v1498 = vtanh.pop %v1491
    %1500 = vrot.lane.b32.xlu0 %v1000, 32
    %v1501 = vpop.permute.xlu0 %1500
    %v1503 = vmul.f32 %v1497, %v1501
    %1505 = vrot.lane.b32.xlu0 %v1498, 32
    %v1506 = vpop.permute.xlu0 %1505
    %v1508 = vmul.f32 %v1497, %v1506
    %1510 = vrot.lane.b32.xlu0 %v1508, 32
    %v1511 = vpop.permute.xlu0 %1510
    %v1513 = vadd.f32 %v1503, %v1511
    %v1514 = vtanh.pop %v1513
    %1516 = vrot.lane.b32.xlu0 %v1514, 32
    %v1517 = vpop.permute.xlu0 %1516
    %v1519 = vmul.f32 %v1497, %v1517
    %s1520 = scalar_lea.vmem [#allocation2], 8
    %v1521 = vld [vmem:[%s1520] sm:$0xff]
    %1523 = vrot.lane.b32.xlu0 %v1519, 64
    %v1524 = vpop.permute.xlu0 %1523
    %v1525 = vsel %vm1002, %v1524, 0
    %1527 = vmatprep.subr.mxu0 0.0
    %1528 = vmatpush1.msra.mxu0 0.0
    %1529 = vmatprep.subr.mxu0 0.0
    %1530 = vmatpush1.msra.mxu0 0.0
    %1531 = vmatprep.subr.mxu0 0.0
    %1532 = vmatpush1.msra.mxu0 0.0
    %1533 = vmatprep.subr.mxu0 0.0
    %1534 = vmatpush1.msra.mxu0 0.0
    %1535 = vmatprep.subr.mxu0 0.0
    %1536 = vmatpush1.msra.mxu0 0.0
    %1537 = vmatprep.subr.mxu0 0.0
    %1538 = vmatpush1.msra.mxu0 0.0
    %1539 = vmatprep.subr.mxu0 0.0
    %1540 = vmatpush1.msra.mxu0 0.0
    %1541 = vmatprep.subr.mxu0 0.0
    %1542 = vmatpush1.msra.mxu0 0.0
    %1543 = vmatprep.subr.mxu0 0.0
    %1544 = vmatpush1.msra.mxu0 0.0
    %1545 = vmatprep.subr.mxu0 0.0
    %1546 = vmatpush1.msra.mxu0 0.0
    %1547 = vmatprep.subr.mxu0 0.0
    %1548 = vmatpush1.msra.mxu0 0.0
    %1549 = vmatprep.subr.mxu0 0.0
    %1550 = vmatpush1.msra.mxu0 0.0
    %1551 = vmatprep.subr.mxu0 0.0
    %v1552 = vand.u32 %v998, 4294901760
    %1553 = vmatpush1.msra.mxu0 %v1552
    %1554 = vmatprep.subr.mxu0 0.0
    %v1555 = vand.u32 %v997, 4294901760
    %1556 = vmatpush1.msra.mxu0 %v1555
    %1557 = vmatprep.subr.mxu0 0.0
    %v1558 = vand.u32 %v996, 4294901760
    %1559 = vmatpush1.msra.mxu0 %v1558
    %1560 = vmatprep.subr.mxu0 0.0
    %v1561 = vand.u32 %v995, 4294901760
    %1562 = vmatpush1.msra.mxu0 %v1561
    %1563 = vmatprep.subr.mxu0 0.0
    %1564 = vmatpush2.msra.mxu0 0.0
    %1565 = vmatprep.subr.mxu0 0.0
    %1566 = vmatpush2.msra.mxu0 0.0
    %1567 = vmatprep.subr.mxu0 0.0
    %1568 = vmatpush2.msra.mxu0 0.0
    %1569 = vmatprep.subr.mxu0 0.0
    %1570 = vmatpush2.msra.mxu0 0.0
    %1571 = vmatprep.subr.mxu0 0.0
    %1572 = vmatpush2.msra.mxu0 0.0
    %1573 = vmatprep.subr.mxu0 0.0
    %1574 = vmatpush2.msra.mxu0 0.0
    %1575 = vmatprep.subr.mxu0 0.0
    %1576 = vmatpush2.msra.mxu0 0.0
    %1577 = vmatprep.subr.mxu0 0.0
    %1578 = vmatpush2.msra.mxu0 0.0
    %1579 = vmatprep.subr.mxu0 0.0
    %1580 = vmatpush2.msra.mxu0 0.0
    %1581 = vmatprep.subr.mxu0 0.0
    %1582 = vmatpush2.msra.mxu0 0.0
    %1583 = vmatprep.subr.mxu0 0.0
    %1584 = vmatpush2.msra.mxu0 0.0
    %1585 = vmatprep.subr.mxu0 0.0
    %1586 = vmatpush2.msra.mxu0 0.0
    %1587 = vmatprep.subr.mxu0 0.0
    %1588 = vmatpush2.msra.mxu0 0.0
    %1589 = vmatprep.subr.mxu0 0.0
    %1590 = vmatpush2.msra.mxu0 0.0
    %1591 = vmatprep.subr.mxu0 0.0
    %1592 = vmatpush2.msra.mxu0 0.0
    %1593 = vmatprep.subr.mxu0 0.0
    %1594 = vmatpush2.msra.mxu0 0.0
    %1595 = vmatprep.mubr.f32.mxu0 0.0
    %v1596 = vand.u32 %v1525, 4294901760
    %v1597 = vsub.f32 %v1525, %v1596
    %v1598 = vand.u32 %v1597, 4294901760
    %v1599 = vsub.f32 %v1597, %v1598
    %v1600 = vand.u32 %v1599, 4294901760
    %1601 = vmatmul.mubr.f32.gmra.mxu0 %v1600
    %v1602 = vpop.f32.mrf.mxu0
    %v1603 = vadd.f32 0.0, %v1602
    %v1604 = vpop.f32.mrf.mxu0
    %1605 = vdwg.mxu0
    %1606 = vmatprep.subr.mxu0 0.0
    %1607 = vmatpush1.msra.mxu0 0.0
    %1608 = vmatprep.subr.mxu0 0.0
    %1609 = vmatpush1.msra.mxu0 0.0
    %1610 = vmatprep.subr.mxu0 0.0
    %1611 = vmatpush1.msra.mxu0 0.0
    %1612 = vmatprep.subr.mxu0 0.0
    %1613 = vmatpush1.msra.mxu0 0.0
    %1614 = vmatprep.subr.mxu0 0.0
    %1615 = vmatpush1.msra.mxu0 0.0
    %1616 = vmatprep.subr.mxu0 0.0
    %1617 = vmatpush1.msra.mxu0 0.0
    %1618 = vmatprep.subr.mxu0 0.0
    %1619 = vmatpush1.msra.mxu0 0.0
    %1620 = vmatprep.subr.mxu0 0.0
    %1621 = vmatpush1.msra.mxu0 0.0
    %1622 = vmatprep.subr.mxu0 0.0
    %1623 = vmatpush1.msra.mxu0 0.0
    %1624 = vmatprep.subr.mxu0 0.0
    %1625 = vmatpush1.msra.mxu0 0.0
    %1626 = vmatprep.subr.mxu0 0.0
    %1627 = vmatpush1.msra.mxu0 0.0
    %1628 = vmatprep.subr.mxu0 0.0
    %1629 = vmatpush1.msra.mxu0 0.0
    %1630 = vmatprep.subr.mxu0 0.0
    %v1631 = vand.u32 %v998, 4294901760
    %v1632 = vsub.f32 %v998, %v1631
    %v1633 = vand.u32 %v1632, 4294901760
    %v1634 = vsub.f32 %v1632, %v1633
    %v1635 = vand.u32 %v1634, 4294901760
    %1636 = vmatpush1.msra.mxu0 %v1635
    %1637 = vmatprep.subr.mxu0 0.0
    %v1638 = vand.u32 %v997, 4294901760
    %v1639 = vsub.f32 %v997, %v1638
    %v1640 = vand.u32 %v1639, 4294901760
    %v1641 = vsub.f32 %v1639, %v1640
    %v1642 = vand.u32 %v1641, 4294901760
    %1643 = vmatpush1.msra.mxu0 %v1642
    %1644 = vmatprep.subr.mxu0 0.0
    %v1645 = vand.u32 %v996, 4294901760
    %v1646 = vsub.f32 %v996, %v1645
    %v1647 = vand.u32 %v1646, 4294901760
    %v1648 = vsub.f32 %v1646, %v1647
    %v1649 = vand.u32 %v1648, 4294901760
    %1650 = vmatpush1.msra.mxu0 %v1649
    %1651 = vmatprep.subr.mxu0 0.0
    %v1652 = vand.u32 %v995, 4294901760
    %v1653 = vsub.f32 %v995, %v1652
    %v1654 = vand.u32 %v1653, 4294901760
    %v1655 = vsub.f32 %v1653, %v1654
    %v1656 = vand.u32 %v1655, 4294901760
    %1657 = vmatpush1.msra.mxu0 %v1656
    %1658 = vmatprep.subr.mxu0 0.0
    %1659 = vmatpush2.msra.mxu0 0.0
    %1660 = vmatprep.subr.mxu0 0.0
    %1661 = vmatpush2.msra.mxu0 0.0
    %1662 = vmatprep.subr.mxu0 0.0
    %1663 = vmatpush2.msra.mxu0 0.0
    %1664 = vmatprep.subr.mxu0 0.0
    %1665 = vmatpush2.msra.mxu0 0.0
    %1666 = vmatprep.subr.mxu0 0.0
    %1667 = vmatpush2.msra.mxu0 0.0
    %1668 = vmatprep.subr.mxu0 0.0
    %1669 = vmatpush2.msra.mxu0 0.0
    %1670 = vmatprep.subr.mxu0 0.0
    %1671 = vmatpush2.msra.mxu0 0.0
    %1672 = vmatprep.subr.mxu0 0.0
    %1673 = vmatpush2.msra.mxu0 0.0
    %1674 = vmatprep.subr.mxu0 0.0
    %1675 = vmatpush2.msra.mxu0 0.0
    %1676 = vmatprep.subr.mxu0 0.0
    %1677 = vmatpush2.msra.mxu0 0.0
    %1678 = vmatprep.subr.mxu0 0.0
    %1679 = vmatpush2.msra.mxu0 0.0
    %1680 = vmatprep.subr.mxu0 0.0
    %1681 = vmatpush2.msra.mxu0 0.0
    %1682 = vmatprep.subr.mxu0 0.0
    %1683 = vmatpush2.msra.mxu0 0.0
    %1684 = vmatprep.subr.mxu0 0.0
    %1685 = vmatpush2.msra.mxu0 0.0
    %1686 = vmatprep.subr.mxu0 0.0
    %1687 = vmatpush2.msra.mxu0 0.0
    %1688 = vmatprep.subr.mxu0 0.0
    %1689 = vmatpush2.msra.mxu0 0.0
    %1690 = vmatprep.mubr.f32.mxu0 0.0
    %v1691 = vand.u32 %v1525, 4294901760
    %1692 = vmatmul.mubr.f32.gmra.mxu0 %v1691
    %v1693 = vpop.f32.mrf.mxu0
    %v1694 = vadd.f32 %v1603, %v1693
    %v1695 = vpop.f32.mrf.mxu0
    %1696 = vdwg.mxu0
    %1697 = vmatprep.subr.mxu0 0.0
    %1698 = vmatpush1.msra.mxu0 0.0
    %1699 = vmatprep.subr.mxu0 0.0
    %1700 = vmatpush1.msra.mxu0 0.0
    %1701 = vmatprep.subr.mxu0 0.0
    %1702 = vmatpush1.msra.mxu0 0.0
    %1703 = vmatprep.subr.mxu0 0.0
    %1704 = vmatpush1.msra.mxu0 0.0
    %1705 = vmatprep.subr.mxu0 0.0
    %1706 = vmatpush1.msra.mxu0 0.0
    %1707 = vmatprep.subr.mxu0 0.0
    %1708 = vmatpush1.msra.mxu0 0.0
    %1709 = vmatprep.subr.mxu0 0.0
    %1710 = vmatpush1.msra.mxu0 0.0
    %1711 = vmatprep.subr.mxu0 0.0
    %1712 = vmatpush1.msra.mxu0 0.0
    %1713 = vmatprep.subr.mxu0 0.0
    %1714 = vmatpush1.msra.mxu0 0.0
    %1715 = vmatprep.subr.mxu0 0.0
    %1716 = vmatpush1.msra.mxu0 0.0
    %1717 = vmatprep.subr.mxu0 0.0
    %1718 = vmatpush1.msra.mxu0 0.0
    %1719 = vmatprep.subr.mxu0 0.0
    %1720 = vmatpush1.msra.mxu0 0.0
    %1721 = vmatprep.subr.mxu0 0.0
    %v1722 = vand.u32 %v998, 4294901760
    %v1723 = vsub.f32 %v998, %v1722
    %1724 = vmatpush1.msra.mxu0 %v1723
    %1725 = vmatprep.subr.mxu0 0.0
    %v1726 = vand.u32 %v997, 4294901760
    %v1727 = vsub.f32 %v997, %v1726
    %1728 = vmatpush1.msra.mxu0 %v1727
    %1729 = vmatprep.subr.mxu0 0.0
    %v1730 = vand.u32 %v996, 4294901760
    %v1731 = vsub.f32 %v996, %v1730
    %1732 = vmatpush1.msra.mxu0 %v1731
    %1733 = vmatprep.subr.mxu0 0.0
    %v1734 = vand.u32 %v995, 4294901760
    %v1735 = vsub.f32 %v995, %v1734
    %1736 = vmatpush1.msra.mxu0 %v1735
    %1737 = vmatprep.subr.mxu0 0.0
    %1738 = vmatpush2.msra.mxu0 0.0
    %1739 = vmatprep.subr.mxu0 0.0
    %1740 = vmatpush2.msra.mxu0 0.0
    %1741 = vmatprep.subr.mxu0 0.0
    %1742 = vmatpush2.msra.mxu0 0.0
    %1743 = vmatprep.subr.mxu0 0.0
    %1744 = vmatpush2.msra.mxu0 0.0
    %1745 = vmatprep.subr.mxu0 0.0
    %1746 = vmatpush2.msra.mxu0 0.0
    %1747 = vmatprep.subr.mxu0 0.0
    %1748 = vmatpush2.msra.mxu0 0.0
    %1749 = vmatprep.subr.mxu0 0.0
    %1750 = vmatpush2.msra.mxu0 0.0
    %1751 = vmatprep.subr.mxu0 0.0
    %1752 = vmatpush2.msra.mxu0 0.0
    %1753 = vmatprep.subr.mxu0 0.0
    %1754 = vmatpush2.msra.mxu0 0.0
    %1755 = vmatprep.subr.mxu0 0.0
    %1756 = vmatpush2.msra.mxu0 0.0
    %1757 = vmatprep.subr.mxu0 0.0
    %1758 = vmatpush2.msra.mxu0 0.0
    %1759 = vmatprep.subr.mxu0 0.0
    %1760 = vmatpush2.msra.mxu0 0.0
    %1761 = vmatprep.subr.mxu0 0.0
    %1762 = vmatpush2.msra.mxu0 0.0
    %1763 = vmatprep.subr.mxu0 0.0
    %1764 = vmatpush2.msra.mxu0 0.0
    %1765 = vmatprep.subr.mxu0 0.0
    %1766 = vmatpush2.msra.mxu0 0.0
    %1767 = vmatprep.subr.mxu0 0.0
    %1768 = vmatpush2.msra.mxu0 0.0
    %1769 = vmatprep.mubr.f32.mxu0 0.0
    %v1770 = vand.u32 %v1525, 4294901760
    %v1771 = vsub.f32 %v1525, %v1770
    %1772 = vmatmul.mubr.f32.gmra.mxu0 %v1771
    %v1773 = vpop.f32.mrf.mxu0
    %v1774 = vadd.f32 %v1694, %v1773
    %v1775 = vpop.f32.mrf.mxu0
    %1776 = vdwg.mxu0
    %1777 = vmatprep.subr.mxu0 0.0
    %1778 = vmatpush1.msra.mxu0 0.0
    %1779 = vmatprep.subr.mxu0 0.0
    %1780 = vmatpush1.msra.mxu0 0.0
    %1781 = vmatprep.subr.mxu0 0.0
    %1782 = vmatpush1.msra.mxu0 0.0
    %1783 = vmatprep.subr.mxu0 0.0
    %1784 = vmatpush1.msra.mxu0 0.0
    %1785 = vmatprep.subr.mxu0 0.0
    %1786 = vmatpush1.msra.mxu0 0.0
    %1787 = vmatprep.subr.mxu0 0.0
    %1788 = vmatpush1.msra.mxu0 0.0
    %1789 = vmatprep.subr.mxu0 0.0
    %1790 = vmatpush1.msra.mxu0 0.0
    %1791 = vmatprep.subr.mxu0 0.0
    %1792 = vmatpush1.msra.mxu0 0.0
    %1793 = vmatprep.subr.mxu0 0.0
    %1794 = vmatpush1.msra.mxu0 0.0
    %1795 = vmatprep.subr.mxu0 0.0
    %1796 = vmatpush1.msra.mxu0 0.0
    %1797 = vmatprep.subr.mxu0 0.0
    %1798 = vmatpush1.msra.mxu0 0.0
    %1799 = vmatprep.subr.mxu0 0.0
    %1800 = vmatpush1.msra.mxu0 0.0
    %1801 = vmatprep.subr.mxu0 0.0
    %v1802 = vand.u32 %v998, 4294901760
    %1803 = vmatpush1.msra.mxu0 %v1802
    %1804 = vmatprep.subr.mxu0 0.0
    %v1805 = vand.u32 %v997, 4294901760
    %1806 = vmatpush1.msra.mxu0 %v1805
    %1807 = vmatprep.subr.mxu0 0.0
    %v1808 = vand.u32 %v996, 4294901760
    %1809 = vmatpush1.msra.mxu0 %v1808
    %1810 = vmatprep.subr.mxu0 0.0
    %v1811 = vand.u32 %v995, 4294901760
    %1812 = vmatpush1.msra.mxu0 %v1811
    %1813 = vmatprep.subr.mxu0 0.0
    %1814 = vmatpush2.msra.mxu0 0.0
    %1815 = vmatprep.subr.mxu0 0.0
    %1816 = vmatpush2.msra.mxu0 0.0
    %1817 = vmatprep.subr.mxu0 0.0
    %1818 = vmatpush2.msra.mxu0 0.0
    %1819 = vmatprep.subr.mxu0 0.0
    %1820 = vmatpush2.msra.mxu0 0.0
    %1821 = vmatprep.subr.mxu0 0.0
    %1822 = vmatpush2.msra.mxu0 0.0
    %1823 = vmatprep.subr.mxu0 0.0
    %1824 = vmatpush2.msra.mxu0 0.0
    %1825 = vmatprep.subr.mxu0 0.0
    %1826 = vmatpush2.msra.mxu0 0.0
    %1827 = vmatprep.subr.mxu0 0.0
    %1828 = vmatpush2.msra.mxu0 0.0
    %1829 = vmatprep.subr.mxu0 0.0
    %1830 = vmatpush2.msra.mxu0 0.0
    %1831 = vmatprep.subr.mxu0 0.0
    %1832 = vmatpush2.msra.mxu0 0.0
    %1833 = vmatprep.subr.mxu0 0.0
    %1834 = vmatpush2.msra.mxu0 0.0
    %1835 = vmatprep.subr.mxu0 0.0
    %1836 = vmatpush2.msra.mxu0 0.0
    %1837 = vmatprep.subr.mxu0 0.0
    %1838 = vmatpush2.msra.mxu0 0.0
    %1839 = vmatprep.subr.mxu0 0.0
    %1840 = vmatpush2.msra.mxu0 0.0
    %1841 = vmatprep.subr.mxu0 0.0
    %1842 = vmatpush2.msra.mxu0 0.0
    %1843 = vmatprep.subr.mxu0 0.0
    %1844 = vmatpush2.msra.mxu0 0.0
    %1845 = vmatprep.mubr.f32.mxu0 0.0
    %v1846 = vand.u32 %v1525, 4294901760
    %v1847 = vsub.f32 %v1525, %v1846
    %v1848 = vand.u32 %v1847, 4294901760
    %1849 = vmatmul.mubr.f32.gmra.mxu0 %v1848
    %v1850 = vpop.f32.mrf.mxu0
    %v1851 = vadd.f32 %v1774, %v1850
    %v1852 = vpop.f32.mrf.mxu0
    %1853 = vdwg.mxu0
    %1854 = vmatprep.subr.mxu0 0.0
    %1855 = vmatpush1.msra.mxu0 0.0
    %1856 = vmatprep.subr.mxu0 0.0
    %1857 = vmatpush1.msra.mxu0 0.0
    %1858 = vmatprep.subr.mxu0 0.0
    %1859 = vmatpush1.msra.mxu0 0.0
    %1860 = vmatprep.subr.mxu0 0.0
    %1861 = vmatpush1.msra.mxu0 0.0
    %1862 = vmatprep.subr.mxu0 0.0
    %1863 = vmatpush1.msra.mxu0 0.0
    %1864 = vmatprep.subr.mxu0 0.0
    %1865 = vmatpush1.msra.mxu0 0.0
    %1866 = vmatprep.subr.mxu0 0.0
    %1867 = vmatpush1.msra.mxu0 0.0
    %1868 = vmatprep.subr.mxu0 0.0
    %1869 = vmatpush1.msra.mxu0 0.0
    %1870 = vmatprep.subr.mxu0 0.0
    %1871 = vmatpush1.msra.mxu0 0.0
    %1872 = vmatprep.subr.mxu0 0.0
    %1873 = vmatpush1.msra.mxu0 0.0
    %1874 = vmatprep.subr.mxu0 0.0
    %1875 = vmatpush1.msra.mxu0 0.0
    %1876 = vmatprep.subr.mxu0 0.0
    %1877 = vmatpush1.msra.mxu0 0.0
    %1878 = vmatprep.subr.mxu0 0.0
    %v1879 = vand.u32 %v998, 4294901760
    %v1880 = vsub.f32 %v998, %v1879
    %v1881 = vand.u32 %v1880, 4294901760
    %1882 = vmatpush1.msra.mxu0 %v1881
    %1883 = vmatprep.subr.mxu0 0.0
    %v1884 = vand.u32 %v997, 4294901760
    %v1885 = vsub.f32 %v997, %v1884
    %v1886 = vand.u32 %v1885, 4294901760
    %1887 = vmatpush1.msra.mxu0 %v1886
    %1888 = vmatprep.subr.mxu0 0.0
    %v1889 = vand.u32 %v996, 4294901760
    %v1890 = vsub.f32 %v996, %v1889
    %v1891 = vand.u32 %v1890, 4294901760
    %1892 = vmatpush1.msra.mxu0 %v1891
    %1893 = vmatprep.subr.mxu0 0.0
    %v1894 = vand.u32 %v995, 4294901760
    %v1895 = vsub.f32 %v995, %v1894
    %v1896 = vand.u32 %v1895, 4294901760
    %1897 = vmatpush1.msra.mxu0 %v1896
    %1898 = vmatprep.subr.mxu0 0.0
    %1899 = vmatpush2.msra.mxu0 0.0
    %1900 = vmatprep.subr.mxu0 0.0
    %1901 = vmatpush2.msra.mxu0 0.0
    %1902 = vmatprep.subr.mxu0 0.0
    %1903 = vmatpush2.msra.mxu0 0.0
    %1904 = vmatprep.subr.mxu0 0.0
    %1905 = vmatpush2.msra.mxu0 0.0
    %1906 = vmatprep.subr.mxu0 0.0
    %1907 = vmatpush2.msra.mxu0 0.0
    %1908 = vmatprep.subr.mxu0 0.0
    %1909 = vmatpush2.msra.mxu0 0.0
    %1910 = vmatprep.subr.mxu0 0.0
    %1911 = vmatpush2.msra.mxu0 0.0
    %1912 = vmatprep.subr.mxu0 0.0
    %1913 = vmatpush2.msra.mxu0 0.0
    %1914 = vmatprep.subr.mxu0 0.0
    %1915 = vmatpush2.msra.mxu0 0.0
    %1916 = vmatprep.subr.mxu0 0.0
    %1917 = vmatpush2.msra.mxu0 0.0
    %1918 = vmatprep.subr.mxu0 0.0
    %1919 = vmatpush2.msra.mxu0 0.0
    %1920 = vmatprep.subr.mxu0 0.0
    %1921 = vmatpush2.msra.mxu0 0.0
    %1922 = vmatprep.subr.mxu0 0.0
    %1923 = vmatpush2.msra.mxu0 0.0
    %1924 = vmatprep.subr.mxu0 0.0
    %1925 = vmatpush2.msra.mxu0 0.0
    %1926 = vmatprep.subr.mxu0 0.0
    %1927 = vmatpush2.msra.mxu0 0.0
    %1928 = vmatprep.subr.mxu0 0.0
    %1929 = vmatpush2.msra.mxu0 0.0
    %1930 = vmatprep.mubr.f32.mxu0 0.0
    %v1931 = vand.u32 %v1525, 4294901760
    %1932 = vmatmul.mubr.f32.gmra.mxu0 %v1931
    %v1933 = vpop.f32.mrf.mxu0
    %v1934 = vadd.f32 %v1851, %v1933
    %v1935 = vpop.f32.mrf.mxu0
    %1936 = vdwg.mxu0
    %1937 = vmatprep.subr.mxu0 0.0
    %1938 = vmatpush1.msra.mxu0 0.0
    %1939 = vmatprep.subr.mxu0 0.0
    %1940 = vmatpush1.msra.mxu0 0.0
    %1941 = vmatprep.subr.mxu0 0.0
    %1942 = vmatpush1.msra.mxu0 0.0
    %1943 = vmatprep.subr.mxu0 0.0
    %1944 = vmatpush1.msra.mxu0 0.0
    %1945 = vmatprep.subr.mxu0 0.0
    %1946 = vmatpush1.msra.mxu0 0.0
    %1947 = vmatprep.subr.mxu0 0.0
    %1948 = vmatpush1.msra.mxu0 0.0
    %1949 = vmatprep.subr.mxu0 0.0
    %1950 = vmatpush1.msra.mxu0 0.0
    %1951 = vmatprep.subr.mxu0 0.0
    %1952 = vmatpush1.msra.mxu0 0.0
    %1953 = vmatprep.subr.mxu0 0.0
    %1954 = vmatpush1.msra.mxu0 0.0
    %1955 = vmatprep.subr.mxu0 0.0
    %1956 = vmatpush1.msra.mxu0 0.0
    %1957 = vmatprep.subr.mxu0 0.0
    %1958 = vmatpush1.msra.mxu0 0.0
    %1959 = vmatprep.subr.mxu0 0.0
    %1960 = vmatpush1.msra.mxu0 0.0
    %1961 = vmatprep.subr.mxu0 0.0
    %v1962 = vand.u32 %v998, 4294901760
    %1963 = vmatpush1.msra.mxu0 %v1962
    %1964 = vmatprep.subr.mxu0 0.0
    %v1965 = vand.u32 %v997, 4294901760
    %1966 = vmatpush1.msra.mxu0 %v1965
    %1967 = vmatprep.subr.mxu0 0.0
    %v1968 = vand.u32 %v996, 4294901760
    %1969 = vmatpush1.msra.mxu0 %v1968
    %1970 = vmatprep.subr.mxu0 0.0
    %v1971 = vand.u32 %v995, 4294901760
    %1972 = vmatpush1.msra.mxu0 %v1971
    %1973 = vmatprep.subr.mxu0 0.0
    %1974 = vmatpush2.msra.mxu0 0.0
    %1975 = vmatprep.subr.mxu0 0.0
    %1976 = vmatpush2.msra.mxu0 0.0
    %1977 = vmatprep.subr.mxu0 0.0
    %1978 = vmatpush2.msra.mxu0 0.0
    %1979 = vmatprep.subr.mxu0 0.0
    %1980 = vmatpush2.msra.mxu0 0.0
    %1981 = vmatprep.subr.mxu0 0.0
    %1982 = vmatpush2.msra.mxu0 0.0
    %1983 = vmatprep.subr.mxu0 0.0
    %1984 = vmatpush2.msra.mxu0 0.0
    %1985 = vmatprep.subr.mxu0 0.0
    %1986 = vmatpush2.msra.mxu0 0.0
    %1987 = vmatprep.subr.mxu0 0.0
    %1988 = vmatpush2.msra.mxu0 0.0
    %1989 = vmatprep.subr.mxu0 0.0
    %1990 = vmatpush2.msra.mxu0 0.0
    %1991 = vmatprep.subr.mxu0 0.0
    %1992 = vmatpush2.msra.mxu0 0.0
    %1993 = vmatprep.subr.mxu0 0.0
    %1994 = vmatpush2.msra.mxu0 0.0
    %1995 = vmatprep.subr.mxu0 0.0
    %1996 = vmatpush2.msra.mxu0 0.0
    %1997 = vmatprep.subr.mxu0 0.0
    %1998 = vmatpush2.msra.mxu0 0.0
    %1999 = vmatprep.subr.mxu0 0.0
    %2000 = vmatpush2.msra.mxu0 0.0
    %2001 = vmatprep.subr.mxu0 0.0
    %2002 = vmatpush2.msra.mxu0 0.0
    %2003 = vmatprep.subr.mxu0 0.0
    %2004 = vmatpush2.msra.mxu0 0.0
    %2005 = vmatprep.mubr.f32.mxu0 0.0
    %v2006 = vand.u32 %v1525, 4294901760
    %2007 = vmatmul.mubr.f32.gmra.mxu0 %v2006
    %v2008 = vpop.f32.mrf.mxu0
    %v2009 = vadd.f32 %v1934, %v2008
    %v2010 = vpop.f32.mrf.mxu0
    %2011 = vdwg.mxu0
    %v2012 = vadd.f32 %v1521, %v2009
    %v2013 = vxor.u32 %v2012, 2147483648
    %v2014 = vmul.f32 %v2013, 1.442695
    %v2015 = vpow.pop %v2014
    %v2016 = vadd.f32 %v2015, 1.0
    %v2017 = vrcp.pop %v2016
    %v2018 = vmul.f32 1.0, %v2017
    %v2019 = vtanh.pop %v2012
    %v2020 = vmul.f32 %v2018, %v1513
    %2022 = vrot.lane.b32.xlu0 %v2019, 32
    %v2023 = vpop.permute.xlu0 %2022
    %v2025 = vmul.f32 %v2018, %v2023
    %2027 = vrot.lane.b32.xlu0 %v2025, 32
    %v2028 = vpop.permute.xlu0 %2027
    %v2030 = vadd.f32 %v2020, %v2028
    %v2031 = vtanh.pop %v2030
    %2033 = vrot.lane.b32.xlu0 %v2031, 32
    %v2034 = vpop.permute.xlu0 %2033
    %v2036 = vmul.f32 %v2018, %v2034
    %s2037 = scalar_lea.vmem [#allocation2], 16
    %v2038 = vld [vmem:[%s2037] sm:$0xff]
    %2040 = vrot.lane.b32.xlu0 %v2036, 64
    %v2041 = vpop.permute.xlu0 %2040
    %v2042 = vsel %vm1002, %v2041, 0
    %2044 = vmatprep.subr.mxu0 0.0
    %2045 = vmatpush1.msra.mxu0 0.0
    %2046 = vmatprep.subr.mxu0 0.0
    %2047 = vmatpush1.msra.mxu0 0.0
    %2048 = vmatprep.subr.mxu0 0.0
    %2049 = vmatpush1.msra.mxu0 0.0
    %2050 = vmatprep.subr.mxu0 0.0
    %2051 = vmatpush1.msra.mxu0 0.0
    %2052 = vmatprep.subr.mxu0 0.0
    %2053 = vmatpush1.msra.mxu0 0.0
    %2054 = vmatprep.subr.mxu0 0.0
    %2055 = vmatpush1.msra.mxu0 0.0
    %2056 = vmatprep.subr.mxu0 0.0
    %2057 = vmatpush1.msra.mxu0 0.0
    %2058 = vmatprep.subr.mxu0 0.0
    %2059 = vmatpush1.msra.mxu0 0.0
    %2060 = vmatprep.subr.mxu0 0.0
    %2061 = vmatpush1.msra.mxu0 0.0
    %2062 = vmatprep.subr.mxu0 0.0
    %2063 = vmatpush1.msra.mxu0 0.0
    %2064 = vmatprep.subr.mxu0 0.0
    %2065 = vmatpush1.msra.mxu0 0.0
    %2066 = vmatprep.subr.mxu0 0.0
    %2067 = vmatpush1.msra.mxu0 0.0
    %2068 = vmatprep.subr.mxu0 0.0
    %v2069 = vand.u32 %v998, 4294901760
    %2070 = vmatpush1.msra.mxu0 %v2069
    %2071 = vmatprep.subr.mxu0 0.0
    %v2072 = vand.u32 %v997, 4294901760
    %2073 = vmatpush1.msra.mxu0 %v2072
    %2074 = vmatprep.subr.mxu0 0.0
    %v2075 = vand.u32 %v996, 4294901760
    %2076 = vmatpush1.msra.mxu0 %v2075
    %2077 = vmatprep.subr.mxu0 0.0
    %v2078 = vand.u32 %v995, 4294901760
    %2079 = vmatpush1.msra.mxu0 %v2078
    %2080 = vmatprep.subr.mxu0 0.0
    %2081 = vmatpush2.msra.mxu0 0.0
    %2082 = vmatprep.subr.mxu0 0.0
    %2083 = vmatpush2.msra.mxu0 0.0
    %2084 = vmatprep.subr.mxu0 0.0
    %2085 = vmatpush2.msra.mxu0 0.0
    %2086 = vmatprep.subr.mxu0 0.0
    %2087 = vmatpush2.msra.mxu0 0.0
    %2088 = vmatprep.subr.mxu0 0.0
    %2089 = vmatpush2.msra.mxu0 0.0
    %2090 = vmatprep.subr.mxu0 0.0
    %2091 = vmatpush2.msra.mxu0 0.0
    %2092 = vmatprep.subr.mxu0 0.0
    %2093 = vmatpush2.msra.mxu0 0.0
    %2094 = vmatprep.subr.mxu0 0.0
    %2095 = vmatpush2.msra.mxu0 0.0
    %2096 = vmatprep.subr.mxu0 0.0
    %2097 = vmatpush2.msra.mxu0 0.0
    %2098 = vmatprep.subr.mxu0 0.0
    %2099 = vmatpush2.msra.mxu0 0.0
    %2100 = vmatprep.subr.mxu0 0.0
    %2101 = vmatpush2.msra.mxu0 0.0
    %2102 = vmatprep.subr.mxu0 0.0
    %2103 = vmatpush2.msra.mxu0 0.0
    %2104 = vmatprep.subr.mxu0 0.0
    %2105 = vmatpush2.msra.mxu0 0.0
    %2106 = vmatprep.subr.mxu0 0.0
    %2107 = vmatpush2.msra.mxu0 0.0
    %2108 = vmatprep.subr.mxu0 0.0
    %2109 = vmatpush2.msra.mxu0 0.0
    %2110 = vmatprep.subr.mxu0 0.0
    %2111 = vmatpush2.msra.mxu0 0.0
    %2112 = vmatprep.mubr.f32.mxu0 0.0
    %v2113 = vand.u32 %v2042, 4294901760
    %v2114 = vsub.f32 %v2042, %v2113
    %v2115 = vand.u32 %v2114, 4294901760
    %v2116 = vsub.f32 %v2114, %v2115
    %v2117 = vand.u32 %v2116, 4294901760
    %2118 = vmatmul.mubr.f32.gmra.mxu0 %v2117
    %v2119 = vpop.f32.mrf.mxu0
    %v2120 = vadd.f32 0.0, %v2119
    %v2121 = vpop.f32.mrf.mxu0
    %2122 = vdwg.mxu0
    %2123 = vmatprep.subr.mxu0 0.0
    %2124 = vmatpush1.msra.mxu0 0.0
    %2125 = vmatprep.subr.mxu0 0.0
    %2126 = vmatpush1.msra.mxu0 0.0
    %2127 = vmatprep.subr.mxu0 0.0
    %2128 = vmatpush1.msra.mxu0 0.0
    %2129 = vmatprep.subr.mxu0 0.0
    %2130 = vmatpush1.msra.mxu0 0.0
    %2131 = vmatprep.subr.mxu0 0.0
    %2132 = vmatpush1.msra.mxu0 0.0
    %2133 = vmatprep.subr.mxu0 0.0
    %2134 = vmatpush1.msra.mxu0 0.0
    %2135 = vmatprep.subr.mxu0 0.0
    %2136 = vmatpush1.msra.mxu0 0.0
    %2137 = vmatprep.subr.mxu0 0.0
    %2138 = vmatpush1.msra.mxu0 0.0
    %2139 = vmatprep.subr.mxu0 0.0
    %2140 = vmatpush1.msra.mxu0 0.0
    %2141 = vmatprep.subr.mxu0 0.0
    %2142 = vmatpush1.msra.mxu0 0.0
    %2143 = vmatprep.subr.mxu0 0.0
    %2144 = vmatpush1.msra.mxu0 0.0
    %2145 = vmatprep.subr.mxu0 0.0
    %2146 = vmatpush1.msra.mxu0 0.0
    %2147 = vmatprep.subr.mxu0 0.0
    %v2148 = vand.u32 %v998, 4294901760
    %v2149 = vsub.f32 %v998, %v2148
    %v2150 = vand.u32 %v2149, 4294901760
    %v2151 = vsub.f32 %v2149, %v2150
    %v2152 = vand.u32 %v2151, 4294901760
    %2153 = vmatpush1.msra.mxu0 %v2152
    %2154 = vmatprep.subr.mxu0 0.0
    %v2155 = vand.u32 %v997, 4294901760
    %v2156 = vsub.f32 %v997, %v2155
    %v2157 = vand.u32 %v2156, 4294901760
    %v2158 = vsub.f32 %v2156, %v2157
    %v2159 = vand.u32 %v2158, 4294901760
    %2160 = vmatpush1.msra.mxu0 %v2159
    %2161 = vmatprep.subr.mxu0 0.0
    %v2162 = vand.u32 %v996, 4294901760
    %v2163 = vsub.f32 %v996, %v2162
    %v2164 = vand.u32 %v2163, 4294901760
    %v2165 = vsub.f32 %v2163, %v2164
    %v2166 = vand.u32 %v2165, 4294901760
    %2167 = vmatpush1.msra.mxu0 %v2166
    %2168 = vmatprep.subr.mxu0 0.0
    %v2169 = vand.u32 %v995, 4294901760
    %v2170 = vsub.f32 %v995, %v2169
    %v2171 = vand.u32 %v2170, 4294901760
    %v2172 = vsub.f32 %v2170, %v2171
    %v2173 = vand.u32 %v2172, 4294901760
    %2174 = vmatpush1.msra.mxu0 %v2173
    %2175 = vmatprep.subr.mxu0 0.0
    %2176 = vmatpush2.msra.mxu0 0.0
    %2177 = vmatprep.subr.mxu0 0.0
    %2178 = vmatpush2.msra.mxu0 0.0
    %2179 = vmatprep.subr.mxu0 0.0
    %2180 = vmatpush2.msra.mxu0 0.0
    %2181 = vmatprep.subr.mxu0 0.0
    %2182 = vmatpush2.msra.mxu0 0.0
    %2183 = vmatprep.subr.mxu0 0.0
    %2184 = vmatpush2.msra.mxu0 0.0
    %2185 = vmatprep.subr.mxu0 0.0
    %2186 = vmatpush2.msra.mxu0 0.0
    %2187 = vmatprep.subr.mxu0 0.0
    %2188 = vmatpush2.msra.mxu0 0.0
    %2189 = vmatprep.subr.mxu0 0.0
    %2190 = vmatpush2.msra.mxu0 0.0
    %2191 = vmatprep.subr.mxu0 0.0
    %2192 = vmatpush2.msra.mxu0 0.0
    %2193 = vmatprep.subr.mxu0 0.0
    %2194 = vmatpush2.msra.mxu0 0.0
    %2195 = vmatprep.subr.mxu0 0.0
    %2196 = vmatpush2.msra.mxu0 0.0
    %2197 = vmatprep.subr.mxu0 0.0
    %2198 = vmatpush2.msra.mxu0 0.0
    %2199 = vmatprep.subr.mxu0 0.0
    %2200 = vmatpush2.msra.mxu0 0.0
    %2201 = vmatprep.subr.mxu0 0.0
    %2202 = vmatpush2.msra.mxu0 0.0
    %2203 = vmatprep.subr.mxu0 0.0
    %2204 = vmatpush2.msra.mxu0 0.0
    %2205 = vmatprep.subr.mxu0 0.0
    %2206 = vmatpush2.msra.mxu0 0.0
    %2207 = vmatprep.mubr.f32.mxu0 0.0
    %v2208 = vand.u32 %v2042, 4294901760
    %2209 = vmatmul.mubr.f32.gmra.mxu0 %v2208
    %v2210 = vpop.f32.mrf.mxu0
    %v2211 = vadd.f32 %v2120, %v2210
    %v2212 = vpop.f32.mrf.mxu0
    %2213 = vdwg.mxu0
    %2214 = vmatprep.subr.mxu0 0.0
    %2215 = vmatpush1.msra.mxu0 0.0
    %2216 = vmatprep.subr.mxu0 0.0
    %2217 = vmatpush1.msra.mxu0 0.0
    %2218 = vmatprep.subr.mxu0 0.0
    %2219 = vmatpush1.msra.mxu0 0.0
    %2220 = vmatprep.subr.mxu0 0.0
    %2221 = vmatpush1.msra.mxu0 0.0
    %2222 = vmatprep.subr.mxu0 0.0
    %2223 = vmatpush1.msra.mxu0 0.0
    %2224 = vmatprep.subr.mxu0 0.0
    %2225 = vmatpush1.msra.mxu0 0.0
    %2226 = vmatprep.subr.mxu0 0.0
    %2227 = vmatpush1.msra.mxu0 0.0
    %2228 = vmatprep.subr.mxu0 0.0
    %2229 = vmatpush1.msra.mxu0 0.0
    %2230 = vmatprep.subr.mxu0 0.0
    %2231 = vmatpush1.msra.mxu0 0.0
    %2232 = vmatprep.subr.mxu0 0.0
    %2233 = vmatpush1.msra.mxu0 0.0
    %2234 = vmatprep.subr.mxu0 0.0
    %2235 = vmatpush1.msra.mxu0 0.0
    %2236 = vmatprep.subr.mxu0 0.0
    %2237 = vmatpush1.msra.mxu0 0.0
    %2238 = vmatprep.subr.mxu0 0.0
    %v2239 = vand.u32 %v998, 4294901760
    %v2240 = vsub.f32 %v998, %v2239
    %2241 = vmatpush1.msra.mxu0 %v2240
    %2242 = vmatprep.subr.mxu0 0.0
    %v2243 = vand.u32 %v997, 4294901760
    %v2244 = vsub.f32 %v997, %v2243
    %2245 = vmatpush1.msra.mxu0 %v2244
    %2246 = vmatprep.subr.mxu0 0.0
    %v2247 = vand.u32 %v996, 4294901760
    %v2248 = vsub.f32 %v996, %v2247
    %2249 = vmatpush1.msra.mxu0 %v2248
    %2250 = vmatprep.subr.mxu0 0.0
    %v2251 = vand.u32 %v995, 4294901760
    %v2252 = vsub.f32 %v995, %v2251
    %2253 = vmatpush1.msra.mxu0 %v2252
    %2254 = vmatprep.subr.mxu0 0.0
    %2255 = vmatpush2.msra.mxu0 0.0
    %2256 = vmatprep.subr.mxu0 0.0
    %2257 = vmatpush2.msra.mxu0 0.0
    %2258 = vmatprep.subr.mxu0 0.0
    %2259 = vmatpush2.msra.mxu0 0.0
    %2260 = vmatprep.subr.mxu0 0.0
    %2261 = vmatpush2.msra.mxu0 0.0
    %2262 = vmatprep.subr.mxu0 0.0
    %2263 = vmatpush2.msra.mxu0 0.0
    %2264 = vmatprep.subr.mxu0 0.0
    %2265 = vmatpush2.msra.mxu0 0.0
    %2266 = vmatprep.subr.mxu0 0.0
    %2267 = vmatpush2.msra.mxu0 0.0
    %2268 = vmatprep.subr.mxu0 0.0
    %2269 = vmatpush2.msra.mxu0 0.0
    %2270 = vmatprep.subr.mxu0 0.0
    %2271 = vmatpush2.msra.mxu0 0.0
    %2272 = vmatprep.subr.mxu0 0.0
    %2273 = vmatpush2.msra.mxu0 0.0
    %2274 = vmatprep.subr.mxu0 0.0
    %2275 = vmatpush2.msra.mxu0 0.0
    %2276 = vmatprep.subr.mxu0 0.0
    %2277 = vmatpush2.msra.mxu0 0.0
    %2278 = vmatprep.subr.mxu0 0.0
    %2279 = vmatpush2.msra.mxu0 0.0
    %2280 = vmatprep.subr.mxu0 0.0
    %2281 = vmatpush2.msra.mxu0 0.0
    %2282 = vmatprep.subr.mxu0 0.0
    %2283 = vmatpush2.msra.mxu0 0.0
    %2284 = vmatprep.subr.mxu0 0.0
    %2285 = vmatpush2.msra.mxu0 0.0
    %2286 = vmatprep.mubr.f32.mxu0 0.0
    %v2287 = vand.u32 %v2042, 4294901760
    %v2288 = vsub.f32 %v2042, %v2287
    %2289 = vmatmul.mubr.f32.gmra.mxu0 %v2288
    %v2290 = vpop.f32.mrf.mxu0
    %v2291 = vadd.f32 %v2211, %v2290
    %v2292 = vpop.f32.mrf.mxu0
    %2293 = vdwg.mxu0
    %2294 = vmatprep.subr.mxu0 0.0
    %2295 = vmatpush1.msra.mxu0 0.0
    %2296 = vmatprep.subr.mxu0 0.0
    %2297 = vmatpush1.msra.mxu0 0.0
    %2298 = vmatprep.subr.mxu0 0.0
    %2299 = vmatpush1.msra.mxu0 0.0
    %2300 = vmatprep.subr.mxu0 0.0
    %2301 = vmatpush1.msra.mxu0 0.0
    %2302 = vmatprep.subr.mxu0 0.0
    %2303 = vmatpush1.msra.mxu0 0.0
    %2304 = vmatprep.subr.mxu0 0.0
    %2305 = vmatpush1.msra.mxu0 0.0
    %2306 = vmatprep.subr.mxu0 0.0
    %2307 = vmatpush1.msra.mxu0 0.0
    %2308 = vmatprep.subr.mxu0 0.0
    %2309 = vmatpush1.msra.mxu0 0.0
    %2310 = vmatprep.subr.mxu0 0.0
    %2311 = vmatpush1.msra.mxu0 0.0
    %2312 = vmatprep.subr.mxu0 0.0
    %2313 = vmatpush1.msra.mxu0 0.0
    %2314 = vmatprep.subr.mxu0 0.0
    %2315 = vmatpush1.msra.mxu0 0.0
    %2316 = vmatprep.subr.mxu0 0.0
    %2317 = vmatpush1.msra.mxu0 0.0
    %2318 = vmatprep.subr.mxu0 0.0
    %v2319 = vand.u32 %v998, 4294901760
    %2320 = vmatpush1.msra.mxu0 %v2319
    %2321 = vmatprep.subr.mxu0 0.0
    %v2322 = vand.u32 %v997, 4294901760
    %2323 = vmatpush1.msra.mxu0 %v2322
    %2324 = vmatprep.subr.mxu0 0.0
    %v2325 = vand.u32 %v996, 4294901760
    %2326 = vmatpush1.msra.mxu0 %v2325
    %2327 = vmatprep.subr.mxu0 0.0
    %v2328 = vand.u32 %v995, 4294901760
    %2329 = vmatpush1.msra.mxu0 %v2328
    %2330 = vmatprep.subr.mxu0 0.0
    %2331 = vmatpush2.msra.mxu0 0.0
    %2332 = vmatprep.subr.mxu0 0.0
    %2333 = vmatpush2.msra.mxu0 0.0
    %2334 = vmatprep.subr.mxu0 0.0
    %2335 = vmatpush2.msra.mxu0 0.0
    %2336 = vmatprep.subr.mxu0 0.0
    %2337 = vmatpush2.msra.mxu0 0.0
    %2338 = vmatprep.subr.mxu0 0.0
    %2339 = vmatpush2.msra.mxu0 0.0
    %2340 = vmatprep.subr.mxu0 0.0
    %2341 = vmatpush2.msra.mxu0 0.0
    %2342 = vmatprep.subr.mxu0 0.0
    %2343 = vmatpush2.msra.mxu0 0.0
    %2344 = vmatprep.subr.mxu0 0.0
    %2345 = vmatpush2.msra.mxu0 0.0
    %2346 = vmatprep.subr.mxu0 0.0
    %2347 = vmatpush2.msra.mxu0 0.0
    %2348 = vmatprep.subr.mxu0 0.0
    %2349 = vmatpush2.msra.mxu0 0.0
    %2350 = vmatprep.subr.mxu0 0.0
    %2351 = vmatpush2.msra.mxu0 0.0
    %2352 = vmatprep.subr.mxu0 0.0
    %2353 = vmatpush2.msra.mxu0 0.0
    %2354 = vmatprep.subr.mxu0 0.0
    %2355 = vmatpush2.msra.mxu0 0.0
    %2356 = vmatprep.subr.mxu0 0.0
    %2357 = vmatpush2.msra.mxu0 0.0
    %2358 = vmatprep.subr.mxu0 0.0
    %2359 = vmatpush2.msra.mxu0 0.0
    %2360 = vmatprep.subr.mxu0 0.0
    %2361 = vmatpush2.msra.mxu0 0.0
    %2362 = vmatprep.mubr.f32.mxu0 0.0
    %v2363 = vand.u32 %v2042, 4294901760
    %v2364 = vsub.f32 %v2042, %v2363
    %v2365 = vand.u32 %v2364, 4294901760
    %2366 = vmatmul.mubr.f32.gmra.mxu0 %v2365
    %v2367 = vpop.f32.mrf.mxu0
    %v2368 = vadd.f32 %v2291, %v2367
    %v2369 = vpop.f32.mrf.mxu0
    %2370 = vdwg.mxu0
    %2371 = vmatprep.subr.mxu0 0.0
    %2372 = vmatpush1.msra.mxu0 0.0
    %2373 = vmatprep.subr.mxu0 0.0
    %2374 = vmatpush1.msra.mxu0 0.0
    %2375 = vmatprep.subr.mxu0 0.0
    %2376 = vmatpush1.msra.mxu0 0.0
    %2377 = vmatprep.subr.mxu0 0.0
    %2378 = vmatpush1.msra.mxu0 0.0
    %2379 = vmatprep.subr.mxu0 0.0
    %2380 = vmatpush1.msra.mxu0 0.0
    %2381 = vmatprep.subr.mxu0 0.0
    %2382 = vmatpush1.msra.mxu0 0.0
    %2383 = vmatprep.subr.mxu0 0.0
    %2384 = vmatpush1.msra.mxu0 0.0
    %2385 = vmatprep.subr.mxu0 0.0
    %2386 = vmatpush1.msra.mxu0 0.0
    %2387 = vmatprep.subr.mxu0 0.0
    %2388 = vmatpush1.msra.mxu0 0.0
    %2389 = vmatprep.subr.mxu0 0.0
    %2390 = vmatpush1.msra.mxu0 0.0
    %2391 = vmatprep.subr.mxu0 0.0
    %2392 = vmatpush1.msra.mxu0 0.0
    %2393 = vmatprep.subr.mxu0 0.0
    %2394 = vmatpush1.msra.mxu0 0.0
    %2395 = vmatprep.subr.mxu0 0.0
    %v2396 = vand.u32 %v998, 4294901760
    %v2397 = vsub.f32 %v998, %v2396
    %v2398 = vand.u32 %v2397, 4294901760
    %2399 = vmatpush1.msra.mxu0 %v2398
    %2400 = vmatprep.subr.mxu0 0.0
    %v2401 = vand.u32 %v997, 4294901760
    %v2402 = vsub.f32 %v997, %v2401
    %v2403 = vand.u32 %v2402, 4294901760
    %2404 = vmatpush1.msra.mxu0 %v2403
    %2405 = vmatprep.subr.mxu0 0.0
    %v2406 = vand.u32 %v996, 4294901760
    %v2407 = vsub.f32 %v996, %v2406
    %v2408 = vand.u32 %v2407, 4294901760
    %2409 = vmatpush1.msra.mxu0 %v2408
    %2410 = vmatprep.subr.mxu0 0.0
    %v2411 = vand.u32 %v995, 4294901760
    %v2412 = vsub.f32 %v995, %v2411
    %v2413 = vand.u32 %v2412, 4294901760
    %2414 = vmatpush1.msra.mxu0 %v2413
    %2415 = vmatprep.subr.mxu0 0.0
    %2416 = vmatpush2.msra.mxu0 0.0
    %2417 = vmatprep.subr.mxu0 0.0
    %2418 = vmatpush2.msra.mxu0 0.0
    %2419 = vmatprep.subr.mxu0 0.0
    %2420 = vmatpush2.msra.mxu0 0.0
    %2421 = vmatprep.subr.mxu0 0.0
    %2422 = vmatpush2.msra.mxu0 0.0
    %2423 = vmatprep.subr.mxu0 0.0
    %2424 = vmatpush2.msra.mxu0 0.0
    %2425 = vmatprep.subr.mxu0 0.0
    %2426 = vmatpush2.msra.mxu0 0.0
    %2427 = vmatprep.subr.mxu0 0.0
    %2428 = vmatpush2.msra.mxu0 0.0
    %2429 = vmatprep.subr.mxu0 0.0
    %2430 = vmatpush2.msra.mxu0 0.0
    %2431 = vmatprep.subr.mxu0 0.0
    %2432 = vmatpush2.msra.mxu0 0.0
    %2433 = vmatprep.subr.mxu0 0.0
    %2434 = vmatpush2.msra.mxu0 0.0
    %2435 = vmatprep.subr.mxu0 0.0
    %2436 = vmatpush2.msra.mxu0 0.0
    %2437 = vmatprep.subr.mxu0 0.0
    %2438 = vmatpush2.msra.mxu0 0.0
    %2439 = vmatprep.subr.mxu0 0.0
    %2440 = vmatpush2.msra.mxu0 0.0
    %2441 = vmatprep.subr.mxu0 0.0
    %2442 = vmatpush2.msra.mxu0 0.0
    %2443 = vmatprep.subr.mxu0 0.0
    %2444 = vmatpush2.msra.mxu0 0.0
    %2445 = vmatprep.subr.mxu0 0.0
    %2446 = vmatpush2.msra.mxu0 0.0
    %2447 = vmatprep.mubr.f32.mxu0 0.0
    %v2448 = vand.u32 %v2042, 4294901760
    %2449 = vmatmul.mubr.f32.gmra.mxu0 %v2448
    %v2450 = vpop.f32.mrf.mxu0
    %v2451 = vadd.f32 %v2368, %v2450
    %v2452 = vpop.f32.mrf.mxu0
    %2453 = vdwg.mxu0
    %2454 = vmatprep.subr.mxu0 0.0
    %2455 = vmatpush1.msra.mxu0 0.0
    %2456 = vmatprep.subr.mxu0 0.0
    %2457 = vmatpush1.msra.mxu0 0.0
    %2458 = vmatprep.subr.mxu0 0.0
    %2459 = vmatpush1.msra.mxu0 0.0
    %2460 = vmatprep.subr.mxu0 0.0
    %2461 = vmatpush1.msra.mxu0 0.0
    %2462 = vmatprep.subr.mxu0 0.0
    %2463 = vmatpush1.msra.mxu0 0.0
    %2464 = vmatprep.subr.mxu0 0.0
    %2465 = vmatpush1.msra.mxu0 0.0
    %2466 = vmatprep.subr.mxu0 0.0
    %2467 = vmatpush1.msra.mxu0 0.0
    %2468 = vmatprep.subr.mxu0 0.0
    %2469 = vmatpush1.msra.mxu0 0.0
    %2470 = vmatprep.subr.mxu0 0.0
    %2471 = vmatpush1.msra.mxu0 0.0
    %2472 = vmatprep.subr.mxu0 0.0
    %2473 = vmatpush1.msra.mxu0 0.0
    %2474 = vmatprep.subr.mxu0 0.0
    %2475 = vmatpush1.msra.mxu0 0.0
    %2476 = vmatprep.subr.mxu0 0.0
    %2477 = vmatpush1.msra.mxu0 0.0
    %2478 = vmatprep.subr.mxu0 0.0
    %v2479 = vand.u32 %v998, 4294901760
    %2480 = vmatpush1.msra.mxu0 %v2479
    %2481 = vmatprep.subr.mxu0 0.0
    %v2482 = vand.u32 %v997, 4294901760
    %2483 = vmatpush1.msra.mxu0 %v2482
    %2484 = vmatprep.subr.mxu0 0.0
    %v2485 = vand.u32 %v996, 4294901760
    %2486 = vmatpush1.msra.mxu0 %v2485
    %2487 = vmatprep.subr.mxu0 0.0
    %v2488 = vand.u32 %v995, 4294901760
    %2489 = vmatpush1.msra.mxu0 %v2488
    %2490 = vmatprep.subr.mxu0 0.0
    %2491 = vmatpush2.msra.mxu0 0.0
    %2492 = vmatprep.subr.mxu0 0.0
    %2493 = vmatpush2.msra.mxu0 0.0
    %2494 = vmatprep.subr.mxu0 0.0
    %2495 = vmatpush2.msra.mxu0 0.0
    %2496 = vmatprep.subr.mxu0 0.0
    %2497 = vmatpush2.msra.mxu0 0.0
    %2498 = vmatprep.subr.mxu0 0.0
    %2499 = vmatpush2.msra.mxu0 0.0
    %2500 = vmatprep.subr.mxu0 0.0
    %2501 = vmatpush2.msra.mxu0 0.0
    %2502 = vmatprep.subr.mxu0 0.0
    %2503 = vmatpush2.msra.mxu0 0.0
    %2504 = vmatprep.subr.mxu0 0.0
    %2505 = vmatpush2.msra.mxu0 0.0
    %2506 = vmatprep.subr.mxu0 0.0
    %2507 = vmatpush2.msra.mxu0 0.0
    %2508 = vmatprep.subr.mxu0 0.0
    %2509 = vmatpush2.msra.mxu0 0.0
    %2510 = vmatprep.subr.mxu0 0.0
    %2511 = vmatpush2.msra.mxu0 0.0
    %2512 = vmatprep.subr.mxu0 0.0
    %2513 = vmatpush2.msra.mxu0 0.0
    %2514 = vmatprep.subr.mxu0 0.0
    %2515 = vmatpush2.msra.mxu0 0.0
    %2516 = vmatprep.subr.mxu0 0.0
    %2517 = vmatpush2.msra.mxu0 0.0
    %2518 = vmatprep.subr.mxu0 0.0
    %2519 = vmatpush2.msra.mxu0 0.0
    %2520 = vmatprep.subr.mxu0 0.0
    %2521 = vmatpush2.msra.mxu0 0.0
    %2522 = vmatprep.mubr.f32.mxu0 0.0
    %v2523 = vand.u32 %v2042, 4294901760
    %2524 = vmatmul.mubr.f32.gmra.mxu0 %v2523
    %v2525 = vpop.f32.mrf.mxu0
    %v2526 = vadd.f32 %v2451, %v2525
    %v2527 = vpop.f32.mrf.mxu0
    %2528 = vdwg.mxu0
    %v2529 = vadd.f32 %v2038, %v2526
    %v2530 = vxor.u32 %v2529, 2147483648
    %v2531 = vmul.f32 %v2530, 1.442695
    %v2532 = vpow.pop %v2531
    %v2533 = vadd.f32 %v2532, 1.0
    %v2534 = vrcp.pop %v2533
    %v2535 = vmul.f32 1.0, %v2534
    %v2536 = vtanh.pop %v2529
    %v2537 = vmul.f32 %v2535, %v2030
    %2539 = vrot.lane.b32.xlu0 %v2536, 32
    %v2540 = vpop.permute.xlu0 %2539
    %v2542 = vmul.f32 %v2535, %v2540
    %2544 = vrot.lane.b32.xlu0 %v2542, 32
    %v2545 = vpop.permute.xlu0 %2544
    %v2547 = vadd.f32 %v2537, %v2545
    %v2548 = vtanh.pop %v2547
    %2550 = vrot.lane.b32.xlu0 %v2548, 32
    %v2551 = vpop.permute.xlu0 %2550
    %v2553 = vmul.f32 %v2535, %v2551
    %s2554 = scalar_lea.vmem [#allocation2], 24
    %v2555 = vld [vmem:[%s2554] sm:$0xff]
    %2557 = vrot.lane.b32.xlu0 %v2553, 64
    %v2558 = vpop.permute.xlu0 %2557
    %v2559 = vsel %vm1002, %v2558, 0
    %2561 = vmatprep.subr.mxu0 0.0
    %2562 = vmatpush1.msra.mxu0 0.0
    %2563 = vmatprep.subr.mxu0 0.0
    %2564 = vmatpush1.msra.mxu0 0.0
    %2565 = vmatprep.subr.mxu0 0.0
    %2566 = vmatpush1.msra.mxu0 0.0
    %2567 = vmatprep.subr.mxu0 0.0
    %2568 = vmatpush1.msra.mxu0 0.0
    %2569 = vmatprep.subr.mxu0 0.0
    %2570 = vmatpush1.msra.mxu0 0.0
    %2571 = vmatprep.subr.mxu0 0.0
    %2572 = vmatpush1.msra.mxu0 0.0
    %2573 = vmatprep.subr.mxu0 0.0
    %2574 = vmatpush1.msra.mxu0 0.0
    %2575 = vmatprep.subr.mxu0 0.0
    %2576 = vmatpush1.msra.mxu0 0.0
    %2577 = vmatprep.subr.mxu0 0.0
    %2578 = vmatpush1.msra.mxu0 0.0
    %2579 = vmatprep.subr.mxu0 0.0
    %2580 = vmatpush1.msra.mxu0 0.0
    %2581 = vmatprep.subr.mxu0 0.0
    %2582 = vmatpush1.msra.mxu0 0.0
    %2583 = vmatprep.subr.mxu0 0.0
    %2584 = vmatpush1.msra.mxu0 0.0
    %2585 = vmatprep.subr.mxu0 0.0
    %v2586 = vand.u32 %v998, 4294901760
    %2587 = vmatpush1.msra.mxu0 %v2586
    %2588 = vmatprep.subr.mxu0 0.0
    %v2589 = vand.u32 %v997, 4294901760
    %2590 = vmatpush1.msra.mxu0 %v2589
    %2591 = vmatprep.subr.mxu0 0.0
    %v2592 = vand.u32 %v996, 4294901760
    %2593 = vmatpush1.msra.mxu0 %v2592
    %2594 = vmatprep.subr.mxu0 0.0
    %v2595 = vand.u32 %v995, 4294901760
    %2596 = vmatpush1.msra.mxu0 %v2595
    %2597 = vmatprep.subr.mxu0 0.0
    %2598 = vmatpush2.msra.mxu0 0.0
    %2599 = vmatprep.subr.mxu0 0.0
    %2600 = vmatpush2.msra.mxu0 0.0
    %2601 = vmatprep.subr.mxu0 0.0
    %2602 = vmatpush2.msra.mxu0 0.0
    %2603 = vmatprep.subr.mxu0 0.0
    %2604 = vmatpush2.msra.mxu0 0.0
    %2605 = vmatprep.subr.mxu0 0.0
    %2606 = vmatpush2.msra.mxu0 0.0
    %2607 = vmatprep.subr.mxu0 0.0
    %2608 = vmatpush2.msra.mxu0 0.0
    %2609 = vmatprep.subr.mxu0 0.0
    %2610 = vmatpush2.msra.mxu0 0.0
    %2611 = vmatprep.subr.mxu0 0.0
    %2612 = vmatpush2.msra.mxu0 0.0
    %2613 = vmatprep.subr.mxu0 0.0
    %2614 = vmatpush2.msra.mxu0 0.0
    %2615 = vmatprep.subr.mxu0 0.0
    %2616 = vmatpush2.msra.mxu0 0.0
    %2617 = vmatprep.subr.mxu0 0.0
    %2618 = vmatpush2.msra.mxu0 0.0
    %2619 = vmatprep.subr.mxu0 0.0
    %2620 = vmatpush2.msra.mxu0 0.0
    %2621 = vmatprep.subr.mxu0 0.0
    %2622 = vmatpush2.msra.mxu0 0.0
    %2623 = vmatprep.subr.mxu0 0.0
    %2624 = vmatpush2.msra.mxu0 0.0
    %2625 = vmatprep.subr.mxu0 0.0
    %2626 = vmatpush2.msra.mxu0 0.0
    %2627 = vmatprep.subr.mxu0 0.0
    %2628 = vmatpush2.msra.mxu0 0.0
    %2629 = vmatprep.mubr.f32.mxu0 0.0
    %v2630 = vand.u32 %v2559, 4294901760
    %v2631 = vsub.f32 %v2559, %v2630
    %v2632 = vand.u32 %v2631, 4294901760
    %v2633 = vsub.f32 %v2631, %v2632
    %v2634 = vand.u32 %v2633, 4294901760
    %2635 = vmatmul.mubr.f32.gmra.mxu0 %v2634
    %v2636 = vpop.f32.mrf.mxu0
    %v2637 = vadd.f32 0.0, %v2636
    %v2638 = vpop.f32.mrf.mxu0
    %2639 = vdwg.mxu0
    %2640 = vmatprep.subr.mxu0 0.0
    %2641 = vmatpush1.msra.mxu0 0.0
    %2642 = vmatprep.subr.mxu0 0.0
    %2643 = vmatpush1.msra.mxu0 0.0
    %2644 = vmatprep.subr.mxu0 0.0
    %2645 = vmatpush1.msra.mxu0 0.0
    %2646 = vmatprep.subr.mxu0 0.0
    %2647 = vmatpush1.msra.mxu0 0.0
    %2648 = vmatprep.subr.mxu0 0.0
    %2649 = vmatpush1.msra.mxu0 0.0
    %2650 = vmatprep.subr.mxu0 0.0
    %2651 = vmatpush1.msra.mxu0 0.0
    %2652 = vmatprep.subr.mxu0 0.0
    %2653 = vmatpush1.msra.mxu0 0.0
    %2654 = vmatprep.subr.mxu0 0.0
    %2655 = vmatpush1.msra.mxu0 0.0
    %2656 = vmatprep.subr.mxu0 0.0
    %2657 = vmatpush1.msra.mxu0 0.0
    %2658 = vmatprep.subr.mxu0 0.0
    %2659 = vmatpush1.msra.mxu0 0.0
    %2660 = vmatprep.subr.mxu0 0.0
    %2661 = vmatpush1.msra.mxu0 0.0
    %2662 = vmatprep.subr.mxu0 0.0
    %2663 = vmatpush1.msra.mxu0 0.0
    %2664 = vmatprep.subr.mxu0 0.0
    %v2665 = vand.u32 %v998, 4294901760
    %v2666 = vsub.f32 %v998, %v2665
    %v2667 = vand.u32 %v2666, 4294901760
    %v2668 = vsub.f32 %v2666, %v2667
    %v2669 = vand.u32 %v2668, 4294901760
    %2670 = vmatpush1.msra.mxu0 %v2669
    %2671 = vmatprep.subr.mxu0 0.0
    %v2672 = vand.u32 %v997, 4294901760
    %v2673 = vsub.f32 %v997, %v2672
    %v2674 = vand.u32 %v2673, 4294901760
    %v2675 = vsub.f32 %v2673, %v2674
    %v2676 = vand.u32 %v2675, 4294901760
    %2677 = vmatpush1.msra.mxu0 %v2676
    %2678 = vmatprep.subr.mxu0 0.0
    %v2679 = vand.u32 %v996, 4294901760
    %v2680 = vsub.f32 %v996, %v2679
    %v2681 = vand.u32 %v2680, 4294901760
    %v2682 = vsub.f32 %v2680, %v2681
    %v2683 = vand.u32 %v2682, 4294901760
    %2684 = vmatpush1.msra.mxu0 %v2683
    %2685 = vmatprep.subr.mxu0 0.0
    %v2686 = vand.u32 %v995, 4294901760
    %v2687 = vsub.f32 %v995, %v2686
    %v2688 = vand.u32 %v2687, 4294901760
    %v2689 = vsub.f32 %v2687, %v2688
    %v2690 = vand.u32 %v2689, 4294901760
    %2691 = vmatpush1.msra.mxu0 %v2690
    %2692 = vmatprep.subr.mxu0 0.0
    %2693 = vmatpush2.msra.mxu0 0.0
    %2694 = vmatprep.subr.mxu0 0.0
    %2695 = vmatpush2.msra.mxu0 0.0
    %2696 = vmatprep.subr.mxu0 0.0
    %2697 = vmatpush2.msra.mxu0 0.0
    %2698 = vmatprep.subr.mxu0 0.0
    %2699 = vmatpush2.msra.mxu0 0.0
    %2700 = vmatprep.subr.mxu0 0.0
    %2701 = vmatpush2.msra.mxu0 0.0
    %2702 = vmatprep.subr.mxu0 0.0
    %2703 = vmatpush2.msra.mxu0 0.0
    %2704 = vmatprep.subr.mxu0 0.0
    %2705 = vmatpush2.msra.mxu0 0.0
    %2706 = vmatprep.subr.mxu0 0.0
    %2707 = vmatpush2.msra.mxu0 0.0
    %2708 = vmatprep.subr.mxu0 0.0
    %2709 = vmatpush2.msra.mxu0 0.0
    %2710 = vmatprep.subr.mxu0 0.0
    %2711 = vmatpush2.msra.mxu0 0.0
    %2712 = vmatprep.subr.mxu0 0.0
    %2713 = vmatpush2.msra.mxu0 0.0
    %2714 = vmatprep.subr.mxu0 0.0
    %2715 = vmatpush2.msra.mxu0 0.0
    %2716 = vmatprep.subr.mxu0 0.0
    %2717 = vmatpush2.msra.mxu0 0.0
    %2718 = vmatprep.subr.mxu0 0.0
    %2719 = vmatpush2.msra.mxu0 0.0
    %2720 = vmatprep.subr.mxu0 0.0
    %2721 = vmatpush2.msra.mxu0 0.0
    %2722 = vmatprep.subr.mxu0 0.0
    %2723 = vmatpush2.msra.mxu0 0.0
    %2724 = vmatprep.mubr.f32.mxu0 0.0
    %v2725 = vand.u32 %v2559, 4294901760
    %2726 = vmatmul.mubr.f32.gmra.mxu0 %v2725
    %v2727 = vpop.f32.mrf.mxu0
    %v2728 = vadd.f32 %v2637, %v2727
    %v2729 = vpop.f32.mrf.mxu0
    %2730 = vdwg.mxu0
    %2731 = vmatprep.subr.mxu0 0.0
    %2732 = vmatpush1.msra.mxu0 0.0
    %2733 = vmatprep.subr.mxu0 0.0
    %2734 = vmatpush1.msra.mxu0 0.0
    %2735 = vmatprep.subr.mxu0 0.0
    %2736 = vmatpush1.msra.mxu0 0.0
    %2737 = vmatprep.subr.mxu0 0.0
    %2738 = vmatpush1.msra.mxu0 0.0
    %2739 = vmatprep.subr.mxu0 0.0
    %2740 = vmatpush1.msra.mxu0 0.0
    %2741 = vmatprep.subr.mxu0 0.0
    %2742 = vmatpush1.msra.mxu0 0.0
    %2743 = vmatprep.subr.mxu0 0.0
    %2744 = vmatpush1.msra.mxu0 0.0
    %2745 = vmatprep.subr.mxu0 0.0
    %2746 = vmatpush1.msra.mxu0 0.0
    %2747 = vmatprep.subr.mxu0 0.0
    %2748 = vmatpush1.msra.mxu0 0.0
    %2749 = vmatprep.subr.mxu0 0.0
    %2750 = vmatpush1.msra.mxu0 0.0
    %2751 = vmatprep.subr.mxu0 0.0
    %2752 = vmatpush1.msra.mxu0 0.0
    %2753 = vmatprep.subr.mxu0 0.0
    %2754 = vmatpush1.msra.mxu0 0.0
    %2755 = vmatprep.subr.mxu0 0.0
    %v2756 = vand.u32 %v998, 4294901760
    %v2757 = vsub.f32 %v998, %v2756
    %2758 = vmatpush1.msra.mxu0 %v2757
    %2759 = vmatprep.subr.mxu0 0.0
    %v2760 = vand.u32 %v997, 4294901760
    %v2761 = vsub.f32 %v997, %v2760
    %2762 = vmatpush1.msra.mxu0 %v2761
    %2763 = vmatprep.subr.mxu0 0.0
    %v2764 = vand.u32 %v996, 4294901760
    %v2765 = vsub.f32 %v996, %v2764
    %2766 = vmatpush1.msra.mxu0 %v2765
    %2767 = vmatprep.subr.mxu0 0.0
    %v2768 = vand.u32 %v995, 4294901760
    %v2769 = vsub.f32 %v995, %v2768
    %2770 = vmatpush1.msra.mxu0 %v2769
    %2771 = vmatprep.subr.mxu0 0.0
    %2772 = vmatpush2.msra.mxu0 0.0
    %2773 = vmatprep.subr.mxu0 0.0
    %2774 = vmatpush2.msra.mxu0 0.0
    %2775 = vmatprep.subr.mxu0 0.0
    %2776 = vmatpush2.msra.mxu0 0.0
    %2777 = vmatprep.subr.mxu0 0.0
    %2778 = vmatpush2.msra.mxu0 0.0
    %2779 = vmatprep.subr.mxu0 0.0
    %2780 = vmatpush2.msra.mxu0 0.0
    %2781 = vmatprep.subr.mxu0 0.0
    %2782 = vmatpush2.msra.mxu0 0.0
    %2783 = vmatprep.subr.mxu0 0.0
    %2784 = vmatpush2.msra.mxu0 0.0
    %2785 = vmatprep.subr.mxu0 0.0
    %2786 = vmatpush2.msra.mxu0 0.0
    %2787 = vmatprep.subr.mxu0 0.0
    %2788 = vmatpush2.msra.mxu0 0.0
    %2789 = vmatprep.subr.mxu0 0.0
    %2790 = vmatpush2.msra.mxu0 0.0
    %2791 = vmatprep.subr.mxu0 0.0
    %2792 = vmatpush2.msra.mxu0 0.0
    %2793 = vmatprep.subr.mxu0 0.0
    %2794 = vmatpush2.msra.mxu0 0.0
    %2795 = vmatprep.subr.mxu0 0.0
    %2796 = vmatpush2.msra.mxu0 0.0
    %2797 = vmatprep.subr.mxu0 0.0
    %2798 = vmatpush2.msra.mxu0 0.0
    %2799 = vmatprep.subr.mxu0 0.0
    %2800 = vmatpush2.msra.mxu0 0.0
    %2801 = vmatprep.subr.mxu0 0.0
    %2802 = vmatpush2.msra.mxu0 0.0
    %2803 = vmatprep.mubr.f32.mxu0 0.0
    %v2804 = vand.u32 %v2559, 4294901760
    %v2805 = vsub.f32 %v2559, %v2804
    %2806 = vmatmul.mubr.f32.gmra.mxu0 %v2805
    %v2807 = vpop.f32.mrf.mxu0
    %v2808 = vadd.f32 %v2728, %v2807
    %v2809 = vpop.f32.mrf.mxu0
    %2810 = vdwg.mxu0
    %2811 = vmatprep.subr.mxu0 0.0
    %2812 = vmatpush1.msra.mxu0 0.0
    %2813 = vmatprep.subr.mxu0 0.0
    %2814 = vmatpush1.msra.mxu0 0.0
    %2815 = vmatprep.subr.mxu0 0.0
    %2816 = vmatpush1.msra.mxu0 0.0
    %2817 = vmatprep.subr.mxu0 0.0
    %2818 = vmatpush1.msra.mxu0 0.0
    %2819 = vmatprep.subr.mxu0 0.0
    %2820 = vmatpush1.msra.mxu0 0.0
    %2821 = vmatprep.subr.mxu0 0.0
    %2822 = vmatpush1.msra.mxu0 0.0
    %2823 = vmatprep.subr.mxu0 0.0
    %2824 = vmatpush1.msra.mxu0 0.0
    %2825 = vmatprep.subr.mxu0 0.0
    %2826 = vmatpush1.msra.mxu0 0.0
    %2827 = vmatprep.subr.mxu0 0.0
    %2828 = vmatpush1.msra.mxu0 0.0
    %2829 = vmatprep.subr.mxu0 0.0
    %2830 = vmatpush1.msra.mxu0 0.0
    %2831 = vmatprep.subr.mxu0 0.0
    %2832 = vmatpush1.msra.mxu0 0.0
    %2833 = vmatprep.subr.mxu0 0.0
    %2834 = vmatpush1.msra.mxu0 0.0
    %2835 = vmatprep.subr.mxu0 0.0
    %v2836 = vand.u32 %v998, 4294901760
    %2837 = vmatpush1.msra.mxu0 %v2836
    %2838 = vmatprep.subr.mxu0 0.0
    %v2839 = vand.u32 %v997, 4294901760
    %2840 = vmatpush1.msra.mxu0 %v2839
    %2841 = vmatprep.subr.mxu0 0.0
    %v2842 = vand.u32 %v996, 4294901760
    %2843 = vmatpush1.msra.mxu0 %v2842
    %2844 = vmatprep.subr.mxu0 0.0
    %v2845 = vand.u32 %v995, 4294901760
    %2846 = vmatpush1.msra.mxu0 %v2845
    %2847 = vmatprep.subr.mxu0 0.0
    %2848 = vmatpush2.msra.mxu0 0.0
    %2849 = vmatprep.subr.mxu0 0.0
    %2850 = vmatpush2.msra.mxu0 0.0
    %2851 = vmatprep.subr.mxu0 0.0
    %2852 = vmatpush2.msra.mxu0 0.0
    %2853 = vmatprep.subr.mxu0 0.0
    %2854 = vmatpush2.msra.mxu0 0.0
    %2855 = vmatprep.subr.mxu0 0.0
    %2856 = vmatpush2.msra.mxu0 0.0
    %2857 = vmatprep.subr.mxu0 0.0
    %2858 = vmatpush2.msra.mxu0 0.0
    %2859 = vmatprep.subr.mxu0 0.0
    %2860 = vmatpush2.msra.mxu0 0.0
    %2861 = vmatprep.subr.mxu0 0.0
    %2862 = vmatpush2.msra.mxu0 0.0
    %2863 = vmatprep.subr.mxu0 0.0
    %2864 = vmatpush2.msra.mxu0 0.0
    %2865 = vmatprep.subr.mxu0 0.0
    %2866 = vmatpush2.msra.mxu0 0.0
    %2867 = vmatprep.subr.mxu0 0.0
    %2868 = vmatpush2.msra.mxu0 0.0
    %2869 = vmatprep.subr.mxu0 0.0
    %2870 = vmatpush2.msra.mxu0 0.0
    %2871 = vmatprep.subr.mxu0 0.0
    %2872 = vmatpush2.msra.mxu0 0.0
    %2873 = vmatprep.subr.mxu0 0.0
    %2874 = vmatpush2.msra.mxu0 0.0
    %2875 = vmatprep.subr.mxu0 0.0
    %2876 = vmatpush2.msra.mxu0 0.0
    %2877 = vmatprep.subr.mxu0 0.0
    %2878 = vmatpush2.msra.mxu0 0.0
    %2879 = vmatprep.mubr.f32.mxu0 0.0
    %v2880 = vand.u32 %v2559, 4294901760
    %v2881 = vsub.f32 %v2559, %v2880
    %v2882 = vand.u32 %v2881, 4294901760
    %2883 = vmatmul.mubr.f32.gmra.mxu0 %v2882
    %v2884 = vpop.f32.mrf.mxu0
    %v2885 = vadd.f32 %v2808, %v2884
    %v2886 = vpop.f32.mrf.mxu0
    %2887 = vdwg.mxu0
    %2888 = vmatprep.subr.mxu0 0.0
    %2889 = vmatpush1.msra.mxu0 0.0
    %2890 = vmatprep.subr.mxu0 0.0
    %2891 = vmatpush1.msra.mxu0 0.0
    %2892 = vmatprep.subr.mxu0 0.0
    %2893 = vmatpush1.msra.mxu0 0.0
    %2894 = vmatprep.subr.mxu0 0.0
    %2895 = vmatpush1.msra.mxu0 0.0
    %2896 = vmatprep.subr.mxu0 0.0
    %2897 = vmatpush1.msra.mxu0 0.0
    %2898 = vmatprep.subr.mxu0 0.0
    %2899 = vmatpush1.msra.mxu0 0.0
    %2900 = vmatprep.subr.mxu0 0.0
    %2901 = vmatpush1.msra.mxu0 0.0
    %2902 = vmatprep.subr.mxu0 0.0
    %2903 = vmatpush1.msra.mxu0 0.0
    %2904 = vmatprep.subr.mxu0 0.0
    %2905 = vmatpush1.msra.mxu0 0.0
    %2906 = vmatprep.subr.mxu0 0.0
    %2907 = vmatpush1.msra.mxu0 0.0
    %2908 = vmatprep.subr.mxu0 0.0
    %2909 = vmatpush1.msra.mxu0 0.0
    %2910 = vmatprep.subr.mxu0 0.0
    %2911 = vmatpush1.msra.mxu0 0.0
    %2912 = vmatprep.subr.mxu0 0.0
    %v2913 = vand.u32 %v998, 4294901760
    %v2914 = vsub.f32 %v998, %v2913
    %v2915 = vand.u32 %v2914, 4294901760
    %2916 = vmatpush1.msra.mxu0 %v2915
    %2917 = vmatprep.subr.mxu0 0.0
    %v2918 = vand.u32 %v997, 4294901760
    %v2919 = vsub.f32 %v997, %v2918
    %v2920 = vand.u32 %v2919, 4294901760
    %2921 = vmatpush1.msra.mxu0 %v2920
    %2922 = vmatprep.subr.mxu0 0.0
    %v2923 = vand.u32 %v996, 4294901760
    %v2924 = vsub.f32 %v996, %v2923
    %v2925 = vand.u32 %v2924, 4294901760
    %2926 = vmatpush1.msra.mxu0 %v2925
    %2927 = vmatprep.subr.mxu0 0.0
    %v2928 = vand.u32 %v995, 4294901760
    %v2929 = vsub.f32 %v995, %v2928
    %v2930 = vand.u32 %v2929, 4294901760
    %2931 = vmatpush1.msra.mxu0 %v2930
    %2932 = vmatprep.subr.mxu0 0.0
    %2933 = vmatpush2.msra.mxu0 0.0
    %2934 = vmatprep.subr.mxu0 0.0
    %2935 = vmatpush2.msra.mxu0 0.0
    %2936 = vmatprep.subr.mxu0 0.0
    %2937 = vmatpush2.msra.mxu0 0.0
    %2938 = vmatprep.subr.mxu0 0.0
    %2939 = vmatpush2.msra.mxu0 0.0
    %2940 = vmatprep.subr.mxu0 0.0
    %2941 = vmatpush2.msra.mxu0 0.0
    %2942 = vmatprep.subr.mxu0 0.0
    %2943 = vmatpush2.msra.mxu0 0.0
    %2944 = vmatprep.subr.mxu0 0.0
    %2945 = vmatpush2.msra.mxu0 0.0
    %2946 = vmatprep.subr.mxu0 0.0
    %2947 = vmatpush2.msra.mxu0 0.0
    %2948 = vmatprep.subr.mxu0 0.0
    %2949 = vmatpush2.msra.mxu0 0.0
    %2950 = vmatprep.subr.mxu0 0.0
    %2951 = vmatpush2.msra.mxu0 0.0
    %2952 = vmatprep.subr.mxu0 0.0
    %2953 = vmatpush2.msra.mxu0 0.0
    %2954 = vmatprep.subr.mxu0 0.0
    %2955 = vmatpush2.msra.mxu0 0.0
    %2956 = vmatprep.subr.mxu0 0.0
    %2957 = vmatpush2.msra.mxu0 0.0
    %2958 = vmatprep.subr.mxu0 0.0
    %2959 = vmatpush2.msra.mxu0 0.0
    %2960 = vmatprep.subr.mxu0 0.0
    %2961 = vmatpush2.msra.mxu0 0.0
    %2962 = vmatprep.subr.mxu0 0.0
    %2963 = vmatpush2.msra.mxu0 0.0
    %2964 = vmatprep.mubr.f32.mxu0 0.0
    %v2965 = vand.u32 %v2559, 4294901760
    %2966 = vmatmul.mubr.f32.gmra.mxu0 %v2965
    %v2967 = vpop.f32.mrf.mxu0
    %v2968 = vadd.f32 %v2885, %v2967
    %v2969 = vpop.f32.mrf.mxu0
    %2970 = vdwg.mxu0
    %2971 = vmatprep.subr.mxu0 0.0
    %2972 = vmatpush1.msra.mxu0 0.0
    %2973 = vmatprep.subr.mxu0 0.0
    %2974 = vmatpush1.msra.mxu0 0.0
    %2975 = vmatprep.subr.mxu0 0.0
    %2976 = vmatpush1.msra.mxu0 0.0
    %2977 = vmatprep.subr.mxu0 0.0
    %2978 = vmatpush1.msra.mxu0 0.0
    %2979 = vmatprep.subr.mxu0 0.0
    %2980 = vmatpush1.msra.mxu0 0.0
    %2981 = vmatprep.subr.mxu0 0.0
    %2982 = vmatpush1.msra.mxu0 0.0
    %2983 = vmatprep.subr.mxu0 0.0
    %2984 = vmatpush1.msra.mxu0 0.0
    %2985 = vmatprep.subr.mxu0 0.0
    %2986 = vmatpush1.msra.mxu0 0.0
    %2987 = vmatprep.subr.mxu0 0.0
    %2988 = vmatpush1.msra.mxu0 0.0
    %2989 = vmatprep.subr.mxu0 0.0
    %2990 = vmatpush1.msra.mxu0 0.0
    %2991 = vmatprep.subr.mxu0 0.0
    %2992 = vmatpush1.msra.mxu0 0.0
    %2993 = vmatprep.subr.mxu0 0.0
    %2994 = vmatpush1.msra.mxu0 0.0
    %2995 = vmatprep.subr.mxu0 0.0
    %v2996 = vand.u32 %v998, 4294901760
    %2997 = vmatpush1.msra.mxu0 %v2996
    %2998 = vmatprep.subr.mxu0 0.0
    %v2999 = vand.u32 %v997, 4294901760
    %3000 = vmatpush1.msra.mxu0 %v2999
    %3001 = vmatprep.subr.mxu0 0.0
    %v3002 = vand.u32 %v996, 4294901760
    %3003 = vmatpush1.msra.mxu0 %v3002
    %3004 = vmatprep.subr.mxu0 0.0
    %v3005 = vand.u32 %v995, 4294901760
    %3006 = vmatpush1.msra.mxu0 %v3005
    %3007 = vmatprep.subr.mxu0 0.0
    %3008 = vmatpush2.msra.mxu0 0.0
    %3009 = vmatprep.subr.mxu0 0.0
    %3010 = vmatpush2.msra.mxu0 0.0
    %3011 = vmatprep.subr.mxu0 0.0
    %3012 = vmatpush2.msra.mxu0 0.0
    %3013 = vmatprep.subr.mxu0 0.0
    %3014 = vmatpush2.msra.mxu0 0.0
    %3015 = vmatprep.subr.mxu0 0.0
    %3016 = vmatpush2.msra.mxu0 0.0
    %3017 = vmatprep.subr.mxu0 0.0
    %3018 = vmatpush2.msra.mxu0 0.0
    %3019 = vmatprep.subr.mxu0 0.0
    %3020 = vmatpush2.msra.mxu0 0.0
    %3021 = vmatprep.subr.mxu0 0.0
    %3022 = vmatpush2.msra.mxu0 0.0
    %3023 = vmatprep.subr.mxu0 0.0
    %3024 = vmatpush2.msra.mxu0 0.0
    %3025 = vmatprep.subr.mxu0 0.0
    %3026 = vmatpush2.msra.mxu0 0.0
    %3027 = vmatprep.subr.mxu0 0.0
    %3028 = vmatpush2.msra.mxu0 0.0
    %3029 = vmatprep.subr.mxu0 0.0
    %3030 = vmatpush2.msra.mxu0 0.0
    %3031 = vmatprep.subr.mxu0 0.0
    %3032 = vmatpush2.msra.mxu0 0.0
    %3033 = vmatprep.subr.mxu0 0.0
    %3034 = vmatpush2.msra.mxu0 0.0
    %3035 = vmatprep.subr.mxu0 0.0
    %3036 = vmatpush2.msra.mxu0 0.0
    %3037 = vmatprep.subr.mxu0 0.0
    %3038 = vmatpush2.msra.mxu0 0.0
    %3039 = vmatprep.mubr.f32.mxu0 0.0
    %v3040 = vand.u32 %v2559, 4294901760
    %3041 = vmatmul.mubr.f32.gmra.mxu0 %v3040
    %v3042 = vpop.f32.mrf.mxu0
    %v3043 = vadd.f32 %v2968, %v3042
    %v3044 = vpop.f32.mrf.mxu0
    %3045 = vdwg.mxu0
    %v3046 = vadd.f32 %v2555, %v3043
    %v3047 = vxor.u32 %v3046, 2147483648
    %v3048 = vmul.f32 %v3047, 1.442695
    %v3049 = vpow.pop %v3048
    %v3050 = vadd.f32 %v3049, 1.0
    %v3051 = vrcp.pop %v3050
    %v3052 = vmul.f32 1.0, %v3051
    %v3053 = vtanh.pop %v3046
    %v3054 = vmul.f32 %v3052, %v2547
    %3056 = vrot.lane.b32.xlu0 %v3053, 32
    %v3057 = vpop.permute.xlu0 %3056
    %v3059 = vmul.f32 %v3052, %v3057
    %3061 = vrot.lane.b32.xlu0 %v3059, 32
    %v3062 = vpop.permute.xlu0 %3061
    %v3064 = vadd.f32 %v3054, %v3062
    %v3065 = vtanh.pop %v3064
    %3067 = vrot.lane.b32.xlu0 %v3065, 32
    %v3068 = vpop.permute.xlu0 %3067
    %v3070 = vmul.f32 %v3052, %v3068
    %s3071 = scalar_lea.vmem [#allocation2], 32
    %v3072 = vld [vmem:[%s3071] sm:$0xff]
    %3074 = vrot.lane.b32.xlu0 %v3070, 64
    %v3075 = vpop.permute.xlu0 %3074
    %v3076 = vsel %vm1002, %v3075, 0
    %3078 = vmatprep.subr.mxu0 0.0
    %3079 = vmatpush1.msra.mxu0 0.0
    %3080 = vmatprep.subr.mxu0 0.0
    %3081 = vmatpush1.msra.mxu0 0.0
    %3082 = vmatprep.subr.mxu0 0.0
    %3083 = vmatpush1.msra.mxu0 0.0
    %3084 = vmatprep.subr.mxu0 0.0
    %3085 = vmatpush1.msra.mxu0 0.0
    %3086 = vmatprep.subr.mxu0 0.0
    %3087 = vmatpush1.msra.mxu0 0.0
    %3088 = vmatprep.subr.mxu0 0.0
    %3089 = vmatpush1.msra.mxu0 0.0
    %3090 = vmatprep.subr.mxu0 0.0
    %3091 = vmatpush1.msra.mxu0 0.0
    %3092 = vmatprep.subr.mxu0 0.0
    %3093 = vmatpush1.msra.mxu0 0.0
    %3094 = vmatprep.subr.mxu0 0.0
    %3095 = vmatpush1.msra.mxu0 0.0
    %3096 = vmatprep.subr.mxu0 0.0
    %3097 = vmatpush1.msra.mxu0 0.0
    %3098 = vmatprep.subr.mxu0 0.0
    %3099 = vmatpush1.msra.mxu0 0.0
    %3100 = vmatprep.subr.mxu0 0.0
    %3101 = vmatpush1.msra.mxu0 0.0
    %3102 = vmatprep.subr.mxu0 0.0
    %v3103 = vand.u32 %v998, 4294901760
    %3104 = vmatpush1.msra.mxu0 %v3103
    %3105 = vmatprep.subr.mxu0 0.0
    %v3106 = vand.u32 %v997, 4294901760
    %3107 = vmatpush1.msra.mxu0 %v3106
    %3108 = vmatprep.subr.mxu0 0.0
    %v3109 = vand.u32 %v996, 4294901760
    %3110 = vmatpush1.msra.mxu0 %v3109
    %3111 = vmatprep.subr.mxu0 0.0
    %v3112 = vand.u32 %v995, 4294901760
    %3113 = vmatpush1.msra.mxu0 %v3112
    %3114 = vmatprep.subr.mxu0 0.0
    %3115 = vmatpush2.msra.mxu0 0.0
    %3116 = vmatprep.subr.mxu0 0.0
    %3117 = vmatpush2.msra.mxu0 0.0
    %3118 = vmatprep.subr.mxu0 0.0
    %3119 = vmatpush2.msra.mxu0 0.0
    %3120 = vmatprep.subr.mxu0 0.0
    %3121 = vmatpush2.msra.mxu0 0.0
    %3122 = vmatprep.subr.mxu0 0.0
    %3123 = vmatpush2.msra.mxu0 0.0
    %3124 = vmatprep.subr.mxu0 0.0
    %3125 = vmatpush2.msra.mxu0 0.0
    %3126 = vmatprep.subr.mxu0 0.0
    %3127 = vmatpush2.msra.mxu0 0.0
    %3128 = vmatprep.subr.mxu0 0.0
    %3129 = vmatpush2.msra.mxu0 0.0
    %3130 = vmatprep.subr.mxu0 0.0
    %3131 = vmatpush2.msra.mxu0 0.0
    %3132 = vmatprep.subr.mxu0 0.0
    %3133 = vmatpush2.msra.mxu0 0.0
    %3134 = vmatprep.subr.mxu0 0.0
    %3135 = vmatpush2.msra.mxu0 0.0
    %3136 = vmatprep.subr.mxu0 0.0
    %3137 = vmatpush2.msra.mxu0 0.0
    %3138 = vmatprep.subr.mxu0 0.0
    %3139 = vmatpush2.msra.mxu0 0.0
    %3140 = vmatprep.subr.mxu0 0.0
    %3141 = vmatpush2.msra.mxu0 0.0
    %3142 = vmatprep.subr.mxu0 0.0
    %3143 = vmatpush2.msra.mxu0 0.0
    %3144 = vmatprep.subr.mxu0 0.0
    %3145 = vmatpush2.msra.mxu0 0.0
    %3146 = vmatprep.mubr.f32.mxu0 0.0
    %v3147 = vand.u32 %v3076, 4294901760
    %v3148 = vsub.f32 %v3076, %v3147
    %v3149 = vand.u32 %v3148, 4294901760
    %v3150 = vsub.f32 %v3148, %v3149
    %v3151 = vand.u32 %v3150, 4294901760
    %3152 = vmatmul.mubr.f32.gmra.mxu0 %v3151
    %v3153 = vpop.f32.mrf.mxu0
    %v3154 = vadd.f32 0.0, %v3153
    %v3155 = vpop.f32.mrf.mxu0
    %3156 = vdwg.mxu0
    %3157 = vmatprep.subr.mxu0 0.0
    %3158 = vmatpush1.msra.mxu0 0.0
    %3159 = vmatprep.subr.mxu0 0.0
    %3160 = vmatpush1.msra.mxu0 0.0
    %3161 = vmatprep.subr.mxu0 0.0
    %3162 = vmatpush1.msra.mxu0 0.0
    %3163 = vmatprep.subr.mxu0 0.0
    %3164 = vmatpush1.msra.mxu0 0.0
    %3165 = vmatprep.subr.mxu0 0.0
    %3166 = vmatpush1.msra.mxu0 0.0
    %3167 = vmatprep.subr.mxu0 0.0
    %3168 = vmatpush1.msra.mxu0 0.0
    %3169 = vmatprep.subr.mxu0 0.0
    %3170 = vmatpush1.msra.mxu0 0.0
    %3171 = vmatprep.subr.mxu0 0.0
    %3172 = vmatpush1.msra.mxu0 0.0
    %3173 = vmatprep.subr.mxu0 0.0
    %3174 = vmatpush1.msra.mxu0 0.0
    %3175 = vmatprep.subr.mxu0 0.0
    %3176 = vmatpush1.msra.mxu0 0.0
    %3177 = vmatprep.subr.mxu0 0.0
    %3178 = vmatpush1.msra.mxu0 0.0
    %3179 = vmatprep.subr.mxu0 0.0
    %3180 = vmatpush1.msra.mxu0 0.0
    %3181 = vmatprep.subr.mxu0 0.0
    %v3182 = vand.u32 %v998, 4294901760
    %v3183 = vsub.f32 %v998, %v3182
    %v3184 = vand.u32 %v3183, 4294901760
    %v3185 = vsub.f32 %v3183, %v3184
    %v3186 = vand.u32 %v3185, 4294901760
    %3187 = vmatpush1.msra.mxu0 %v3186
    %3188 = vmatprep.subr.mxu0 0.0
    %v3189 = vand.u32 %v997, 4294901760
    %v3190 = vsub.f32 %v997, %v3189
    %v3191 = vand.u32 %v3190, 4294901760
    %v3192 = vsub.f32 %v3190, %v3191
    %v3193 = vand.u32 %v3192, 4294901760
    %3194 = vmatpush1.msra.mxu0 %v3193
    %3195 = vmatprep.subr.mxu0 0.0
    %v3196 = vand.u32 %v996, 4294901760
    %v3197 = vsub.f32 %v996, %v3196
    %v3198 = vand.u32 %v3197, 4294901760
    %v3199 = vsub.f32 %v3197, %v3198
    %v3200 = vand.u32 %v3199, 4294901760
    %3201 = vmatpush1.msra.mxu0 %v3200
    %3202 = vmatprep.subr.mxu0 0.0
    %v3203 = vand.u32 %v995, 4294901760
    %v3204 = vsub.f32 %v995, %v3203
    %v3205 = vand.u32 %v3204, 4294901760
    %v3206 = vsub.f32 %v3204, %v3205
    %v3207 = vand.u32 %v3206, 4294901760
    %3208 = vmatpush1.msra.mxu0 %v3207
    %3209 = vmatprep.subr.mxu0 0.0
    %3210 = vmatpush2.msra.mxu0 0.0
    %3211 = vmatprep.subr.mxu0 0.0
    %3212 = vmatpush2.msra.mxu0 0.0
    %3213 = vmatprep.subr.mxu0 0.0
    %3214 = vmatpush2.msra.mxu0 0.0
    %3215 = vmatprep.subr.mxu0 0.0
    %3216 = vmatpush2.msra.mxu0 0.0
    %3217 = vmatprep.subr.mxu0 0.0
    %3218 = vmatpush2.msra.mxu0 0.0
    %3219 = vmatprep.subr.mxu0 0.0
    %3220 = vmatpush2.msra.mxu0 0.0
    %3221 = vmatprep.subr.mxu0 0.0
    %3222 = vmatpush2.msra.mxu0 0.0
    %3223 = vmatprep.subr.mxu0 0.0
    %3224 = vmatpush2.msra.mxu0 0.0
    %3225 = vmatprep.subr.mxu0 0.0
    %3226 = vmatpush2.msra.mxu0 0.0
    %3227 = vmatprep.subr.mxu0 0.0
    %3228 = vmatpush2.msra.mxu0 0.0
    %3229 = vmatprep.subr.mxu0 0.0
    %3230 = vmatpush2.msra.mxu0 0.0
    %3231 = vmatprep.subr.mxu0 0.0
    %3232 = vmatpush2.msra.mxu0 0.0
    %3233 = vmatprep.subr.mxu0 0.0
    %3234 = vmatpush2.msra.mxu0 0.0
    %3235 = vmatprep.subr.mxu0 0.0
    %3236 = vmatpush2.msra.mxu0 0.0
    %3237 = vmatprep.subr.mxu0 0.0
    %3238 = vmatpush2.msra.mxu0 0.0
    %3239 = vmatprep.subr.mxu0 0.0
    %3240 = vmatpush2.msra.mxu0 0.0
    %3241 = vmatprep.mubr.f32.mxu0 0.0
    %v3242 = vand.u32 %v3076, 4294901760
    %3243 = vmatmul.mubr.f32.gmra.mxu0 %v3242
    %v3244 = vpop.f32.mrf.mxu0
    %v3245 = vadd.f32 %v3154, %v3244
    %v3246 = vpop.f32.mrf.mxu0
    %3247 = vdwg.mxu0
    %3248 = vmatprep.subr.mxu0 0.0
    %3249 = vmatpush1.msra.mxu0 0.0
    %3250 = vmatprep.subr.mxu0 0.0
    %3251 = vmatpush1.msra.mxu0 0.0
    %3252 = vmatprep.subr.mxu0 0.0
    %3253 = vmatpush1.msra.mxu0 0.0
    %3254 = vmatprep.subr.mxu0 0.0
    %3255 = vmatpush1.msra.mxu0 0.0
    %3256 = vmatprep.subr.mxu0 0.0
    %3257 = vmatpush1.msra.mxu0 0.0
    %3258 = vmatprep.subr.mxu0 0.0
    %3259 = vmatpush1.msra.mxu0 0.0
    %3260 = vmatprep.subr.mxu0 0.0
    %3261 = vmatpush1.msra.mxu0 0.0
    %3262 = vmatprep.subr.mxu0 0.0
    %3263 = vmatpush1.msra.mxu0 0.0
    %3264 = vmatprep.subr.mxu0 0.0
    %3265 = vmatpush1.msra.mxu0 0.0
    %3266 = vmatprep.subr.mxu0 0.0
    %3267 = vmatpush1.msra.mxu0 0.0
    %3268 = vmatprep.subr.mxu0 0.0
    %3269 = vmatpush1.msra.mxu0 0.0
    %3270 = vmatprep.subr.mxu0 0.0
    %3271 = vmatpush1.msra.mxu0 0.0
    %3272 = vmatprep.subr.mxu0 0.0
    %v3273 = vand.u32 %v998, 4294901760
    %v3274 = vsub.f32 %v998, %v3273
    %3275 = vmatpush1.msra.mxu0 %v3274
    %3276 = vmatprep.subr.mxu0 0.0
    %v3277 = vand.u32 %v997, 4294901760
    %v3278 = vsub.f32 %v997, %v3277
    %3279 = vmatpush1.msra.mxu0 %v3278
    %3280 = vmatprep.subr.mxu0 0.0
    %v3281 = vand.u32 %v996, 4294901760
    %v3282 = vsub.f32 %v996, %v3281
    %3283 = vmatpush1.msra.mxu0 %v3282
    %3284 = vmatprep.subr.mxu0 0.0
    %v3285 = vand.u32 %v995, 4294901760
    %v3286 = vsub.f32 %v995, %v3285
    %3287 = vmatpush1.msra.mxu0 %v3286
    %3288 = vmatprep.subr.mxu0 0.0
    %3289 = vmatpush2.msra.mxu0 0.0
    %3290 = vmatprep.subr.mxu0 0.0
    %3291 = vmatpush2.msra.mxu0 0.0
    %3292 = vmatprep.subr.mxu0 0.0
    %3293 = vmatpush2.msra.mxu0 0.0
    %3294 = vmatprep.subr.mxu0 0.0
    %3295 = vmatpush2.msra.mxu0 0.0
    %3296 = vmatprep.subr.mxu0 0.0
    %3297 = vmatpush2.msra.mxu0 0.0
    %3298 = vmatprep.subr.mxu0 0.0
    %3299 = vmatpush2.msra.mxu0 0.0
    %3300 = vmatprep.subr.mxu0 0.0
    %3301 = vmatpush2.msra.mxu0 0.0
    %3302 = vmatprep.subr.mxu0 0.0
    %3303 = vmatpush2.msra.mxu0 0.0
    %3304 = vmatprep.subr.mxu0 0.0
    %3305 = vmatpush2.msra.mxu0 0.0
    %3306 = vmatprep.subr.mxu0 0.0
    %3307 = vmatpush2.msra.mxu0 0.0
    %3308 = vmatprep.subr.mxu0 0.0
    %3309 = vmatpush2.msra.mxu0 0.0
    %3310 = vmatprep.subr.mxu0 0.0
    %3311 = vmatpush2.msra.mxu0 0.0
    %3312 = vmatprep.subr.mxu0 0.0
    %3313 = vmatpush2.msra.mxu0 0.0
    %3314 = vmatprep.subr.mxu0 0.0
    %3315 = vmatpush2.msra.mxu0 0.0
    %3316 = vmatprep.subr.mxu0 0.0
    %3317 = vmatpush2.msra.mxu0 0.0
    %3318 = vmatprep.subr.mxu0 0.0
    %3319 = vmatpush2.msra.mxu0 0.0
    %3320 = vmatprep.mubr.f32.mxu0 0.0
    %v3321 = vand.u32 %v3076, 4294901760
    %v3322 = vsub.f32 %v3076, %v3321
    %3323 = vmatmul.mubr.f32.gmra.mxu0 %v3322
    %v3324 = vpop.f32.mrf.mxu0
    %v3325 = vadd.f32 %v3245, %v3324
    %v3326 = vpop.f32.mrf.mxu0
    %3327 = vdwg.mxu0
    %3328 = vmatprep.subr.mxu0 0.0
    %3329 = vmatpush1.msra.mxu0 0.0
    %3330 = vmatprep.subr.mxu0 0.0
    %3331 = vmatpush1.msra.mxu0 0.0
    %3332 = vmatprep.subr.mxu0 0.0
    %3333 = vmatpush1.msra.mxu0 0.0
    %3334 = vmatprep.subr.mxu0 0.0
    %3335 = vmatpush1.msra.mxu0 0.0
    %3336 = vmatprep.subr.mxu0 0.0
    %3337 = vmatpush1.msra.mxu0 0.0
    %3338 = vmatprep.subr.mxu0 0.0
    %3339 = vmatpush1.msra.mxu0 0.0
    %3340 = vmatprep.subr.mxu0 0.0
    %3341 = vmatpush1.msra.mxu0 0.0
    %3342 = vmatprep.subr.mxu0 0.0
    %3343 = vmatpush1.msra.mxu0 0.0
    %3344 = vmatprep.subr.mxu0 0.0
    %3345 = vmatpush1.msra.mxu0 0.0
    %3346 = vmatprep.subr.mxu0 0.0
    %3347 = vmatpush1.msra.mxu0 0.0
    %3348 = vmatprep.subr.mxu0 0.0
    %3349 = vmatpush1.msra.mxu0 0.0
    %3350 = vmatprep.subr.mxu0 0.0
    %3351 = vmatpush1.msra.mxu0 0.0
    %3352 = vmatprep.subr.mxu0 0.0
    %v3353 = vand.u32 %v998, 4294901760
    %3354 = vmatpush1.msra.mxu0 %v3353
    %3355 = vmatprep.subr.mxu0 0.0
    %v3356 = vand.u32 %v997, 4294901760
    %3357 = vmatpush1.msra.mxu0 %v3356
    %3358 = vmatprep.subr.mxu0 0.0
    %v3359 = vand.u32 %v996, 4294901760
    %3360 = vmatpush1.msra.mxu0 %v3359
    %3361 = vmatprep.subr.mxu0 0.0
    %v3362 = vand.u32 %v995, 4294901760
    %3363 = vmatpush1.msra.mxu0 %v3362
    %3364 = vmatprep.subr.mxu0 0.0
    %3365 = vmatpush2.msra.mxu0 0.0
    %3366 = vmatprep.subr.mxu0 0.0
    %3367 = vmatpush2.msra.mxu0 0.0
    %3368 = vmatprep.subr.mxu0 0.0
    %3369 = vmatpush2.msra.mxu0 0.0
    %3370 = vmatprep.subr.mxu0 0.0
    %3371 = vmatpush2.msra.mxu0 0.0
    %3372 = vmatprep.subr.mxu0 0.0
    %3373 = vmatpush2.msra.mxu0 0.0
    %3374 = vmatprep.subr.mxu0 0.0
    %3375 = vmatpush2.msra.mxu0 0.0
    %3376 = vmatprep.subr.mxu0 0.0
    %3377 = vmatpush2.msra.mxu0 0.0
    %3378 = vmatprep.subr.mxu0 0.0
    %3379 = vmatpush2.msra.mxu0 0.0
    %3380 = vmatprep.subr.mxu0 0.0
    %3381 = vmatpush2.msra.mxu0 0.0
    %3382 = vmatprep.subr.mxu0 0.0
    %3383 = vmatpush2.msra.mxu0 0.0
    %3384 = vmatprep.subr.mxu0 0.0
    %3385 = vmatpush2.msra.mxu0 0.0
    %3386 = vmatprep.subr.mxu0 0.0
    %3387 = vmatpush2.msra.mxu0 0.0
    %3388 = vmatprep.subr.mxu0 0.0
    %3389 = vmatpush2.msra.mxu0 0.0
    %3390 = vmatprep.subr.mxu0 0.0
    %3391 = vmatpush2.msra.mxu0 0.0
    %3392 = vmatprep.subr.mxu0 0.0
    %3393 = vmatpush2.msra.mxu0 0.0
    %3394 = vmatprep.subr.mxu0 0.0
    %3395 = vmatpush2.msra.mxu0 0.0
    %3396 = vmatprep.mubr.f32.mxu0 0.0
    %v3397 = vand.u32 %v3076, 4294901760
    %v3398 = vsub.f32 %v3076, %v3397
    %v3399 = vand.u32 %v3398, 4294901760
    %3400 = vmatmul.mubr.f32.gmra.mxu0 %v3399
    %v3401 = vpop.f32.mrf.mxu0
    %v3402 = vadd.f32 %v3325, %v3401
    %v3403 = vpop.f32.mrf.mxu0
    %3404 = vdwg.mxu0
    %3405 = vmatprep.subr.mxu0 0.0
    %3406 = vmatpush1.msra.mxu0 0.0
    %3407 = vmatprep.subr.mxu0 0.0
    %3408 = vmatpush1.msra.mxu0 0.0
    %3409 = vmatprep.subr.mxu0 0.0
    %3410 = vmatpush1.msra.mxu0 0.0
    %3411 = vmatprep.subr.mxu0 0.0
    %3412 = vmatpush1.msra.mxu0 0.0
    %3413 = vmatprep.subr.mxu0 0.0
    %3414 = vmatpush1.msra.mxu0 0.0
    %3415 = vmatprep.subr.mxu0 0.0
    %3416 = vmatpush1.msra.mxu0 0.0
    %3417 = vmatprep.subr.mxu0 0.0
    %3418 = vmatpush1.msra.mxu0 0.0
    %3419 = vmatprep.subr.mxu0 0.0
    %3420 = vmatpush1.msra.mxu0 0.0
    %3421 = vmatprep.subr.mxu0 0.0
    %3422 = vmatpush1.msra.mxu0 0.0
    %3423 = vmatprep.subr.mxu0 0.0
    %3424 = vmatpush1.msra.mxu0 0.0
    %3425 = vmatprep.subr.mxu0 0.0
    %3426 = vmatpush1.msra.mxu0 0.0
    %3427 = vmatprep.subr.mxu0 0.0
    %3428 = vmatpush1.msra.mxu0 0.0
    %3429 = vmatprep.subr.mxu0 0.0
    %v3430 = vand.u32 %v998, 4294901760
    %v3431 = vsub.f32 %v998, %v3430
    %v3432 = vand.u32 %v3431, 4294901760
    %3433 = vmatpush1.msra.mxu0 %v3432
    %3434 = vmatprep.subr.mxu0 0.0
    %v3435 = vand.u32 %v997, 4294901760
    %v3436 = vsub.f32 %v997, %v3435
    %v3437 = vand.u32 %v3436, 4294901760
    %3438 = vmatpush1.msra.mxu0 %v3437
    %3439 = vmatprep.subr.mxu0 0.0
    %v3440 = vand.u32 %v996, 4294901760
    %v3441 = vsub.f32 %v996, %v3440
    %v3442 = vand.u32 %v3441, 4294901760
    %3443 = vmatpush1.msra.mxu0 %v3442
    %3444 = vmatprep.subr.mxu0 0.0
    %v3445 = vand.u32 %v995, 4294901760
    %v3446 = vsub.f32 %v995, %v3445
    %v3447 = vand.u32 %v3446, 4294901760
    %3448 = vmatpush1.msra.mxu0 %v3447
    %3449 = vmatprep.subr.mxu0 0.0
    %3450 = vmatpush2.msra.mxu0 0.0
    %3451 = vmatprep.subr.mxu0 0.0
    %3452 = vmatpush2.msra.mxu0 0.0
    %3453 = vmatprep.subr.mxu0 0.0
    %3454 = vmatpush2.msra.mxu0 0.0
    %3455 = vmatprep.subr.mxu0 0.0
    %3456 = vmatpush2.msra.mxu0 0.0
    %3457 = vmatprep.subr.mxu0 0.0
    %3458 = vmatpush2.msra.mxu0 0.0
    %3459 = vmatprep.subr.mxu0 0.0
    %3460 = vmatpush2.msra.mxu0 0.0
    %3461 = vmatprep.subr.mxu0 0.0
    %3462 = vmatpush2.msra.mxu0 0.0
    %3463 = vmatprep.subr.mxu0 0.0
    %3464 = vmatpush2.msra.mxu0 0.0
    %3465 = vmatprep.subr.mxu0 0.0
    %3466 = vmatpush2.msra.mxu0 0.0
    %3467 = vmatprep.subr.mxu0 0.0
    %3468 = vmatpush2.msra.mxu0 0.0
    %3469 = vmatprep.subr.mxu0 0.0
    %3470 = vmatpush2.msra.mxu0 0.0
    %3471 = vmatprep.subr.mxu0 0.0
    %3472 = vmatpush2.msra.mxu0 0.0
    %3473 = vmatprep.subr.mxu0 0.0
    %3474 = vmatpush2.msra.mxu0 0.0
    %3475 = vmatprep.subr.mxu0 0.0
    %3476 = vmatpush2.msra.mxu0 0.0
    %3477 = vmatprep.subr.mxu0 0.0
    %3478 = vmatpush2.msra.mxu0 0.0
    %3479 = vmatprep.subr.mxu0 0.0
    %3480 = vmatpush2.msra.mxu0 0.0
    %3481 = vmatprep.mubr.f32.mxu0 0.0
    %v3482 = vand.u32 %v3076, 4294901760
    %3483 = vmatmul.mubr.f32.gmra.mxu0 %v3482
    %v3484 = vpop.f32.mrf.mxu0
    %v3485 = vadd.f32 %v3402, %v3484
    %v3486 = vpop.f32.mrf.mxu0
    %3487 = vdwg.mxu0
    %3488 = vmatprep.subr.mxu0 0.0
    %3489 = vmatpush1.msra.mxu0 0.0
    %3490 = vmatprep.subr.mxu0 0.0
    %3491 = vmatpush1.msra.mxu0 0.0
    %3492 = vmatprep.subr.mxu0 0.0
    %3493 = vmatpush1.msra.mxu0 0.0
    %3494 = vmatprep.subr.mxu0 0.0
    %3495 = vmatpush1.msra.mxu0 0.0
    %3496 = vmatprep.subr.mxu0 0.0
    %3497 = vmatpush1.msra.mxu0 0.0
    %3498 = vmatprep.subr.mxu0 0.0
    %3499 = vmatpush1.msra.mxu0 0.0
    %3500 = vmatprep.subr.mxu0 0.0
    %3501 = vmatpush1.msra.mxu0 0.0
    %3502 = vmatprep.subr.mxu0 0.0
    %3503 = vmatpush1.msra.mxu0 0.0
    %3504 = vmatprep.subr.mxu0 0.0
    %3505 = vmatpush1.msra.mxu0 0.0
    %3506 = vmatprep.subr.mxu0 0.0
    %3507 = vmatpush1.msra.mxu0 0.0
    %3508 = vmatprep.subr.mxu0 0.0
    %3509 = vmatpush1.msra.mxu0 0.0
    %3510 = vmatprep.subr.mxu0 0.0
    %3511 = vmatpush1.msra.mxu0 0.0
    %3512 = vmatprep.subr.mxu0 0.0
    %v3513 = vand.u32 %v998, 4294901760
    %3514 = vmatpush1.msra.mxu0 %v3513
    %3515 = vmatprep.subr.mxu0 0.0
    %v3516 = vand.u32 %v997, 4294901760
    %3517 = vmatpush1.msra.mxu0 %v3516
    %3518 = vmatprep.subr.mxu0 0.0
    %v3519 = vand.u32 %v996, 4294901760
    %3520 = vmatpush1.msra.mxu0 %v3519
    %3521 = vmatprep.subr.mxu0 0.0
    %v3522 = vand.u32 %v995, 4294901760
    %3523 = vmatpush1.msra.mxu0 %v3522
    %3524 = vmatprep.subr.mxu0 0.0
    %3525 = vmatpush2.msra.mxu0 0.0
    %3526 = vmatprep.subr.mxu0 0.0
    %3527 = vmatpush2.msra.mxu0 0.0
    %3528 = vmatprep.subr.mxu0 0.0
    %3529 = vmatpush2.msra.mxu0 0.0
    %3530 = vmatprep.subr.mxu0 0.0
    %3531 = vmatpush2.msra.mxu0 0.0
    %3532 = vmatprep.subr.mxu0 0.0
    %3533 = vmatpush2.msra.mxu0 0.0
    %3534 = vmatprep.subr.mxu0 0.0
    %3535 = vmatpush2.msra.mxu0 0.0
    %3536 = vmatprep.subr.mxu0 0.0
    %3537 = vmatpush2.msra.mxu0 0.0
    %3538 = vmatprep.subr.mxu0 0.0
    %3539 = vmatpush2.msra.mxu0 0.0
    %3540 = vmatprep.subr.mxu0 0.0
    %3541 = vmatpush2.msra.mxu0 0.0
    %3542 = vmatprep.subr.mxu0 0.0
    %3543 = vmatpush2.msra.mxu0 0.0
    %3544 = vmatprep.subr.mxu0 0.0
    %3545 = vmatpush2.msra.mxu0 0.0
    %3546 = vmatprep.subr.mxu0 0.0
    %3547 = vmatpush2.msra.mxu0 0.0
    %3548 = vmatprep.subr.mxu0 0.0
    %3549 = vmatpush2.msra.mxu0 0.0
    %3550 = vmatprep.subr.mxu0 0.0
    %3551 = vmatpush2.msra.mxu0 0.0
    %3552 = vmatprep.subr.mxu0 0.0
    %3553 = vmatpush2.msra.mxu0 0.0
    %3554 = vmatprep.subr.mxu0 0.0
    %3555 = vmatpush2.msra.mxu0 0.0
    %3556 = vmatprep.mubr.f32.mxu0 0.0
    %v3557 = vand.u32 %v3076, 4294901760
    %3558 = vmatmul.mubr.f32.gmra.mxu0 %v3557
    %v3559 = vpop.f32.mrf.mxu0
    %v3560 = vadd.f32 %v3485, %v3559
    %v3561 = vpop.f32.mrf.mxu0
    %3562 = vdwg.mxu0
    %v3563 = vadd.f32 %v3072, %v3560
    %v3564 = vxor.u32 %v3563, 2147483648
    %v3565 = vmul.f32 %v3564, 1.442695
    %v3566 = vpow.pop %v3565
    %v3567 = vadd.f32 %v3566, 1.0
    %v3568 = vrcp.pop %v3567
    %v3569 = vmul.f32 1.0, %v3568
    %v3570 = vtanh.pop %v3563
    %v3571 = vmul.f32 %v3569, %v3064
    %3573 = vrot.lane.b32.xlu0 %v3570, 32
    %v3574 = vpop.permute.xlu0 %3573
    %v3576 = vmul.f32 %v3569, %v3574
    %3578 = vrot.lane.b32.xlu0 %v3576, 32
    %v3579 = vpop.permute.xlu0 %3578
    %v3581 = vadd.f32 %v3571, %v3579
    %v3582 = vtanh.pop %v3581
    %3584 = vrot.lane.b32.xlu0 %v3582, 32
    %v3585 = vpop.permute.xlu0 %3584
    %v3587 = vmul.f32 %v3569, %v3585
    %s3588 = scalar_lea.vmem [#allocation2], 40
    %v3589 = vld [vmem:[%s3588] sm:$0xff]
    %3591 = vrot.lane.b32.xlu0 %v3587, 64
    %v3592 = vpop.permute.xlu0 %3591
    %v3593 = vsel %vm1002, %v3592, 0
    %3595 = vmatprep.subr.mxu0 0.0
    %3596 = vmatpush1.msra.mxu0 0.0
    %3597 = vmatprep.subr.mxu0 0.0
    %3598 = vmatpush1.msra.mxu0 0.0
    %3599 = vmatprep.subr.mxu0 0.0
    %3600 = vmatpush1.msra.mxu0 0.0
    %3601 = vmatprep.subr.mxu0 0.0
    %3602 = vmatpush1.msra.mxu0 0.0
    %3603 = vmatprep.subr.mxu0 0.0
    %3604 = vmatpush1.msra.mxu0 0.0
    %3605 = vmatprep.subr.mxu0 0.0
    %3606 = vmatpush1.msra.mxu0 0.0
    %3607 = vmatprep.subr.mxu0 0.0
    %3608 = vmatpush1.msra.mxu0 0.0
    %3609 = vmatprep.subr.mxu0 0.0
    %3610 = vmatpush1.msra.mxu0 0.0
    %3611 = vmatprep.subr.mxu0 0.0
    %3612 = vmatpush1.msra.mxu0 0.0
    %3613 = vmatprep.subr.mxu0 0.0
    %3614 = vmatpush1.msra.mxu0 0.0
    %3615 = vmatprep.subr.mxu0 0.0
    %3616 = vmatpush1.msra.mxu0 0.0
    %3617 = vmatprep.subr.mxu0 0.0
    %3618 = vmatpush1.msra.mxu0 0.0
    %3619 = vmatprep.subr.mxu0 0.0
    %v3620 = vand.u32 %v998, 4294901760
    %3621 = vmatpush1.msra.mxu0 %v3620
    %3622 = vmatprep.subr.mxu0 0.0
    %v3623 = vand.u32 %v997, 4294901760
    %3624 = vmatpush1.msra.mxu0 %v3623
    %3625 = vmatprep.subr.mxu0 0.0
    %v3626 = vand.u32 %v996, 4294901760
    %3627 = vmatpush1.msra.mxu0 %v3626
    %3628 = vmatprep.subr.mxu0 0.0
    %v3629 = vand.u32 %v995, 4294901760
    %3630 = vmatpush1.msra.mxu0 %v3629
    %3631 = vmatprep.subr.mxu0 0.0
    %3632 = vmatpush2.msra.mxu0 0.0
    %3633 = vmatprep.subr.mxu0 0.0
    %3634 = vmatpush2.msra.mxu0 0.0
    %3635 = vmatprep.subr.mxu0 0.0
    %3636 = vmatpush2.msra.mxu0 0.0
    %3637 = vmatprep.subr.mxu0 0.0
    %3638 = vmatpush2.msra.mxu0 0.0
    %3639 = vmatprep.subr.mxu0 0.0
    %3640 = vmatpush2.msra.mxu0 0.0
    %3641 = vmatprep.subr.mxu0 0.0
    %3642 = vmatpush2.msra.mxu0 0.0
    %3643 = vmatprep.subr.mxu0 0.0
    %3644 = vmatpush2.msra.mxu0 0.0
    %3645 = vmatprep.subr.mxu0 0.0
    %3646 = vmatpush2.msra.mxu0 0.0
    %3647 = vmatprep.subr.mxu0 0.0
    %3648 = vmatpush2.msra.mxu0 0.0
    %3649 = vmatprep.subr.mxu0 0.0
    %3650 = vmatpush2.msra.mxu0 0.0
    %3651 = vmatprep.subr.mxu0 0.0
    %3652 = vmatpush2.msra.mxu0 0.0
    %3653 = vmatprep.subr.mxu0 0.0
    %3654 = vmatpush2.msra.mxu0 0.0
    %3655 = vmatprep.subr.mxu0 0.0
    %3656 = vmatpush2.msra.mxu0 0.0
    %3657 = vmatprep.subr.mxu0 0.0
    %3658 = vmatpush2.msra.mxu0 0.0
    %3659 = vmatprep.subr.mxu0 0.0
    %3660 = vmatpush2.msra.mxu0 0.0
    %3661 = vmatprep.subr.mxu0 0.0
    %3662 = vmatpush2.msra.mxu0 0.0
    %3663 = vmatprep.mubr.f32.mxu0 0.0
    %v3664 = vand.u32 %v3593, 4294901760
    %v3665 = vsub.f32 %v3593, %v3664
    %v3666 = vand.u32 %v3665, 4294901760
    %v3667 = vsub.f32 %v3665, %v3666
    %v3668 = vand.u32 %v3667, 4294901760
    %3669 = vmatmul.mubr.f32.gmra.mxu0 %v3668
    %v3670 = vpop.f32.mrf.mxu0
    %v3671 = vadd.f32 0.0, %v3670
    %v3672 = vpop.f32.mrf.mxu0
    %3673 = vdwg.mxu0
    %3674 = vmatprep.subr.mxu0 0.0
    %3675 = vmatpush1.msra.mxu0 0.0
    %3676 = vmatprep.subr.mxu0 0.0
    %3677 = vmatpush1.msra.mxu0 0.0
    %3678 = vmatprep.subr.mxu0 0.0
    %3679 = vmatpush1.msra.mxu0 0.0
    %3680 = vmatprep.subr.mxu0 0.0
    %3681 = vmatpush1.msra.mxu0 0.0
    %3682 = vmatprep.subr.mxu0 0.0
    %3683 = vmatpush1.msra.mxu0 0.0
    %3684 = vmatprep.subr.mxu0 0.0
    %3685 = vmatpush1.msra.mxu0 0.0
    %3686 = vmatprep.subr.mxu0 0.0
    %3687 = vmatpush1.msra.mxu0 0.0
    %3688 = vmatprep.subr.mxu0 0.0
    %3689 = vmatpush1.msra.mxu0 0.0
    %3690 = vmatprep.subr.mxu0 0.0
    %3691 = vmatpush1.msra.mxu0 0.0
    %3692 = vmatprep.subr.mxu0 0.0
    %3693 = vmatpush1.msra.mxu0 0.0
    %3694 = vmatprep.subr.mxu0 0.0
    %3695 = vmatpush1.msra.mxu0 0.0
    %3696 = vmatprep.subr.mxu0 0.0
    %3697 = vmatpush1.msra.mxu0 0.0
    %3698 = vmatprep.subr.mxu0 0.0
    %v3699 = vand.u32 %v998, 4294901760
    %v3700 = vsub.f32 %v998, %v3699
    %v3701 = vand.u32 %v3700, 4294901760
    %v3702 = vsub.f32 %v3700, %v3701
    %v3703 = vand.u32 %v3702, 4294901760
    %3704 = vmatpush1.msra.mxu0 %v3703
    %3705 = vmatprep.subr.mxu0 0.0
    %v3706 = vand.u32 %v997, 4294901760
    %v3707 = vsub.f32 %v997, %v3706
    %v3708 = vand.u32 %v3707, 4294901760
    %v3709 = vsub.f32 %v3707, %v3708
    %v3710 = vand.u32 %v3709, 4294901760
    %3711 = vmatpush1.msra.mxu0 %v3710
    %3712 = vmatprep.subr.mxu0 0.0
    %v3713 = vand.u32 %v996, 4294901760
    %v3714 = vsub.f32 %v996, %v3713
    %v3715 = vand.u32 %v3714, 4294901760
    %v3716 = vsub.f32 %v3714, %v3715
    %v3717 = vand.u32 %v3716, 4294901760
    %3718 = vmatpush1.msra.mxu0 %v3717
    %3719 = vmatprep.subr.mxu0 0.0
    %v3720 = vand.u32 %v995, 4294901760
    %v3721 = vsub.f32 %v995, %v3720
    %v3722 = vand.u32 %v3721, 4294901760
    %v3723 = vsub.f32 %v3721, %v3722
    %v3724 = vand.u32 %v3723, 4294901760
    %3725 = vmatpush1.msra.mxu0 %v3724
    %3726 = vmatprep.subr.mxu0 0.0
    %3727 = vmatpush2.msra.mxu0 0.0
    %3728 = vmatprep.subr.mxu0 0.0
    %3729 = vmatpush2.msra.mxu0 0.0
    %3730 = vmatprep.subr.mxu0 0.0
    %3731 = vmatpush2.msra.mxu0 0.0
    %3732 = vmatprep.subr.mxu0 0.0
    %3733 = vmatpush2.msra.mxu0 0.0
    %3734 = vmatprep.subr.mxu0 0.0
    %3735 = vmatpush2.msra.mxu0 0.0
    %3736 = vmatprep.subr.mxu0 0.0
    %3737 = vmatpush2.msra.mxu0 0.0
    %3738 = vmatprep.subr.mxu0 0.0
    %3739 = vmatpush2.msra.mxu0 0.0
    %3740 = vmatprep.subr.mxu0 0.0
    %3741 = vmatpush2.msra.mxu0 0.0
    %3742 = vmatprep.subr.mxu0 0.0
    %3743 = vmatpush2.msra.mxu0 0.0
    %3744 = vmatprep.subr.mxu0 0.0
    %3745 = vmatpush2.msra.mxu0 0.0
    %3746 = vmatprep.subr.mxu0 0.0
    %3747 = vmatpush2.msra.mxu0 0.0
    %3748 = vmatprep.subr.mxu0 0.0
    %3749 = vmatpush2.msra.mxu0 0.0
    %3750 = vmatprep.subr.mxu0 0.0
    %3751 = vmatpush2.msra.mxu0 0.0
    %3752 = vmatprep.subr.mxu0 0.0
    %3753 = vmatpush2.msra.mxu0 0.0
    %3754 = vmatprep.subr.mxu0 0.0
    %3755 = vmatpush2.msra.mxu0 0.0
    %3756 = vmatprep.subr.mxu0 0.0
    %3757 = vmatpush2.msra.mxu0 0.0
    %3758 = vmatprep.mubr.f32.mxu0 0.0
    %v3759 = vand.u32 %v3593, 4294901760
    %3760 = vmatmul.mubr.f32.gmra.mxu0 %v3759
    %v3761 = vpop.f32.mrf.mxu0
    %v3762 = vadd.f32 %v3671, %v3761
    %v3763 = vpop.f32.mrf.mxu0
    %3764 = vdwg.mxu0
    %3765 = vmatprep.subr.mxu0 0.0
    %3766 = vmatpush1.msra.mxu0 0.0
    %3767 = vmatprep.subr.mxu0 0.0
    %3768 = vmatpush1.msra.mxu0 0.0
    %3769 = vmatprep.subr.mxu0 0.0
    %3770 = vmatpush1.msra.mxu0 0.0
    %3771 = vmatprep.subr.mxu0 0.0
    %3772 = vmatpush1.msra.mxu0 0.0
    %3773 = vmatprep.subr.mxu0 0.0
    %3774 = vmatpush1.msra.mxu0 0.0
    %3775 = vmatprep.subr.mxu0 0.0
    %3776 = vmatpush1.msra.mxu0 0.0
    %3777 = vmatprep.subr.mxu0 0.0
    %3778 = vmatpush1.msra.mxu0 0.0
    %3779 = vmatprep.subr.mxu0 0.0
    %3780 = vmatpush1.msra.mxu0 0.0
    %3781 = vmatprep.subr.mxu0 0.0
    %3782 = vmatpush1.msra.mxu0 0.0
    %3783 = vmatprep.subr.mxu0 0.0
    %3784 = vmatpush1.msra.mxu0 0.0
    %3785 = vmatprep.subr.mxu0 0.0
    %3786 = vmatpush1.msra.mxu0 0.0
    %3787 = vmatprep.subr.mxu0 0.0
    %3788 = vmatpush1.msra.mxu0 0.0
    %3789 = vmatprep.subr.mxu0 0.0
    %v3790 = vand.u32 %v998, 4294901760
    %v3791 = vsub.f32 %v998, %v3790
    %3792 = vmatpush1.msra.mxu0 %v3791
    %3793 = vmatprep.subr.mxu0 0.0
    %v3794 = vand.u32 %v997, 4294901760
    %v3795 = vsub.f32 %v997, %v3794
    %3796 = vmatpush1.msra.mxu0 %v3795
    %3797 = vmatprep.subr.mxu0 0.0
    %v3798 = vand.u32 %v996, 4294901760
    %v3799 = vsub.f32 %v996, %v3798
    %3800 = vmatpush1.msra.mxu0 %v3799
    %3801 = vmatprep.subr.mxu0 0.0
    %v3802 = vand.u32 %v995, 4294901760
    %v3803 = vsub.f32 %v995, %v3802
    %3804 = vmatpush1.msra.mxu0 %v3803
    %3805 = vmatprep.subr.mxu0 0.0
    %3806 = vmatpush2.msra.mxu0 0.0
    %3807 = vmatprep.subr.mxu0 0.0
    %3808 = vmatpush2.msra.mxu0 0.0
    %3809 = vmatprep.subr.mxu0 0.0
    %3810 = vmatpush2.msra.mxu0 0.0
    %3811 = vmatprep.subr.mxu0 0.0
    %3812 = vmatpush2.msra.mxu0 0.0
    %3813 = vmatprep.subr.mxu0 0.0
    %3814 = vmatpush2.msra.mxu0 0.0
    %3815 = vmatprep.subr.mxu0 0.0
    %3816 = vmatpush2.msra.mxu0 0.0
    %3817 = vmatprep.subr.mxu0 0.0
    %3818 = vmatpush2.msra.mxu0 0.0
    %3819 = vmatprep.subr.mxu0 0.0
    %3820 = vmatpush2.msra.mxu0 0.0
    %3821 = vmatprep.subr.mxu0 0.0
    %3822 = vmatpush2.msra.mxu0 0.0
    %3823 = vmatprep.subr.mxu0 0.0
    %3824 = vmatpush2.msra.mxu0 0.0
    %3825 = vmatprep.subr.mxu0 0.0
    %3826 = vmatpush2.msra.mxu0 0.0
    %3827 = vmatprep.subr.mxu0 0.0
    %3828 = vmatpush2.msra.mxu0 0.0
    %3829 = vmatprep.subr.mxu0 0.0
    %3830 = vmatpush2.msra.mxu0 0.0
    %3831 = vmatprep.subr.mxu0 0.0
    %3832 = vmatpush2.msra.mxu0 0.0
    %3833 = vmatprep.subr.mxu0 0.0
    %3834 = vmatpush2.msra.mxu0 0.0
    %3835 = vmatprep.subr.mxu0 0.0
    %3836 = vmatpush2.msra.mxu0 0.0
    %3837 = vmatprep.mubr.f32.mxu0 0.0
    %v3838 = vand.u32 %v3593, 4294901760
    %v3839 = vsub.f32 %v3593, %v3838
    %3840 = vmatmul.mubr.f32.gmra.mxu0 %v3839
    %v3841 = vpop.f32.mrf.mxu0
    %v3842 = vadd.f32 %v3762, %v3841
    %v3843 = vpop.f32.mrf.mxu0
    %3844 = vdwg.mxu0
    %3845 = vmatprep.subr.mxu0 0.0
    %3846 = vmatpush1.msra.mxu0 0.0
    %3847 = vmatprep.subr.mxu0 0.0
    %3848 = vmatpush1.msra.mxu0 0.0
    %3849 = vmatprep.subr.mxu0 0.0
    %3850 = vmatpush1.msra.mxu0 0.0
    %3851 = vmatprep.subr.mxu0 0.0
    %3852 = vmatpush1.msra.mxu0 0.0
    %3853 = vmatprep.subr.mxu0 0.0
    %3854 = vmatpush1.msra.mxu0 0.0
    %3855 = vmatprep.subr.mxu0 0.0
    %3856 = vmatpush1.msra.mxu0 0.0
    %3857 = vmatprep.subr.mxu0 0.0
    %3858 = vmatpush1.msra.mxu0 0.0
    %3859 = vmatprep.subr.mxu0 0.0
    %3860 = vmatpush1.msra.mxu0 0.0
    %3861 = vmatprep.subr.mxu0 0.0
    %3862 = vmatpush1.msra.mxu0 0.0
    %3863 = vmatprep.subr.mxu0 0.0
    %3864 = vmatpush1.msra.mxu0 0.0
    %3865 = vmatprep.subr.mxu0 0.0
    %3866 = vmatpush1.msra.mxu0 0.0
    %3867 = vmatprep.subr.mxu0 0.0
    %3868 = vmatpush1.msra.mxu0 0.0
    %3869 = vmatprep.subr.mxu0 0.0
    %v3870 = vand.u32 %v998, 4294901760
    %3871 = vmatpush1.msra.mxu0 %v3870
    %3872 = vmatprep.subr.mxu0 0.0
    %v3873 = vand.u32 %v997, 4294901760
    %3874 = vmatpush1.msra.mxu0 %v3873
    %3875 = vmatprep.subr.mxu0 0.0
    %v3876 = vand.u32 %v996, 4294901760
    %3877 = vmatpush1.msra.mxu0 %v3876
    %3878 = vmatprep.subr.mxu0 0.0
    %v3879 = vand.u32 %v995, 4294901760
    %3880 = vmatpush1.msra.mxu0 %v3879
    %3881 = vmatprep.subr.mxu0 0.0
    %3882 = vmatpush2.msra.mxu0 0.0
    %3883 = vmatprep.subr.mxu0 0.0
    %3884 = vmatpush2.msra.mxu0 0.0
    %3885 = vmatprep.subr.mxu0 0.0
    %3886 = vmatpush2.msra.mxu0 0.0
    %3887 = vmatprep.subr.mxu0 0.0
    %3888 = vmatpush2.msra.mxu0 0.0
    %3889 = vmatprep.subr.mxu0 0.0
    %3890 = vmatpush2.msra.mxu0 0.0
    %3891 = vmatprep.subr.mxu0 0.0
    %3892 = vmatpush2.msra.mxu0 0.0
    %3893 = vmatprep.subr.mxu0 0.0
    %3894 = vmatpush2.msra.mxu0 0.0
    %3895 = vmatprep.subr.mxu0 0.0
    %3896 = vmatpush2.msra.mxu0 0.0
    %3897 = vmatprep.subr.mxu0 0.0
    %3898 = vmatpush2.msra.mxu0 0.0
    %3899 = vmatprep.subr.mxu0 0.0
    %3900 = vmatpush2.msra.mxu0 0.0
    %3901 = vmatprep.subr.mxu0 0.0
    %3902 = vmatpush2.msra.mxu0 0.0
    %3903 = vmatprep.subr.mxu0 0.0
    %3904 = vmatpush2.msra.mxu0 0.0
    %3905 = vmatprep.subr.mxu0 0.0
    %3906 = vmatpush2.msra.mxu0 0.0
    %3907 = vmatprep.subr.mxu0 0.0
    %3908 = vmatpush2.msra.mxu0 0.0
    %3909 = vmatprep.subr.mxu0 0.0
    %3910 = vmatpush2.msra.mxu0 0.0
    %3911 = vmatprep.subr.mxu0 0.0
    %3912 = vmatpush2.msra.mxu0 0.0
    %3913 = vmatprep.mubr.f32.mxu0 0.0
    %v3914 = vand.u32 %v3593, 4294901760
    %v3915 = vsub.f32 %v3593, %v3914
    %v3916 = vand.u32 %v3915, 4294901760
    %3917 = vmatmul.mubr.f32.gmra.mxu0 %v3916
    %v3918 = vpop.f32.mrf.mxu0
    %v3919 = vadd.f32 %v3842, %v3918
    %v3920 = vpop.f32.mrf.mxu0
    %3921 = vdwg.mxu0
    %3922 = vmatprep.subr.mxu0 0.0
    %3923 = vmatpush1.msra.mxu0 0.0
    %3924 = vmatprep.subr.mxu0 0.0
    %3925 = vmatpush1.msra.mxu0 0.0
    %3926 = vmatprep.subr.mxu0 0.0
    %3927 = vmatpush1.msra.mxu0 0.0
    %3928 = vmatprep.subr.mxu0 0.0
    %3929 = vmatpush1.msra.mxu0 0.0
    %3930 = vmatprep.subr.mxu0 0.0
    %3931 = vmatpush1.msra.mxu0 0.0
    %3932 = vmatprep.subr.mxu0 0.0
    %3933 = vmatpush1.msra.mxu0 0.0
    %3934 = vmatprep.subr.mxu0 0.0
    %3935 = vmatpush1.msra.mxu0 0.0
    %3936 = vmatprep.subr.mxu0 0.0
    %3937 = vmatpush1.msra.mxu0 0.0
    %3938 = vmatprep.subr.mxu0 0.0
    %3939 = vmatpush1.msra.mxu0 0.0
    %3940 = vmatprep.subr.mxu0 0.0
    %3941 = vmatpush1.msra.mxu0 0.0
    %3942 = vmatprep.subr.mxu0 0.0
    %3943 = vmatpush1.msra.mxu0 0.0
    %3944 = vmatprep.subr.mxu0 0.0
    %3945 = vmatpush1.msra.mxu0 0.0
    %3946 = vmatprep.subr.mxu0 0.0
    %v3947 = vand.u32 %v998, 4294901760
    %v3948 = vsub.f32 %v998, %v3947
    %v3949 = vand.u32 %v3948, 4294901760
    %3950 = vmatpush1.msra.mxu0 %v3949
    %3951 = vmatprep.subr.mxu0 0.0
    %v3952 = vand.u32 %v997, 4294901760
    %v3953 = vsub.f32 %v997, %v3952
    %v3954 = vand.u32 %v3953, 4294901760
    %3955 = vmatpush1.msra.mxu0 %v3954
    %3956 = vmatprep.subr.mxu0 0.0
    %v3957 = vand.u32 %v996, 4294901760
    %v3958 = vsub.f32 %v996, %v3957
    %v3959 = vand.u32 %v3958, 4294901760
    %3960 = vmatpush1.msra.mxu0 %v3959
    %3961 = vmatprep.subr.mxu0 0.0
    %v3962 = vand.u32 %v995, 4294901760
    %v3963 = vsub.f32 %v995, %v3962
    %v3964 = vand.u32 %v3963, 4294901760
    %3965 = vmatpush1.msra.mxu0 %v3964
    %3966 = vmatprep.subr.mxu0 0.0
    %3967 = vmatpush2.msra.mxu0 0.0
    %3968 = vmatprep.subr.mxu0 0.0
    %3969 = vmatpush2.msra.mxu0 0.0
    %3970 = vmatprep.subr.mxu0 0.0
    %3971 = vmatpush2.msra.mxu0 0.0
    %3972 = vmatprep.subr.mxu0 0.0
    %3973 = vmatpush2.msra.mxu0 0.0
    %3974 = vmatprep.subr.mxu0 0.0
    %3975 = vmatpush2.msra.mxu0 0.0
    %3976 = vmatprep.subr.mxu0 0.0
    %3977 = vmatpush2.msra.mxu0 0.0
    %3978 = vmatprep.subr.mxu0 0.0
    %3979 = vmatpush2.msra.mxu0 0.0
    %3980 = vmatprep.subr.mxu0 0.0
    %3981 = vmatpush2.msra.mxu0 0.0
    %3982 = vmatprep.subr.mxu0 0.0
    %3983 = vmatpush2.msra.mxu0 0.0
    %3984 = vmatprep.subr.mxu0 0.0
    %3985 = vmatpush2.msra.mxu0 0.0
    %3986 = vmatprep.subr.mxu0 0.0
    %3987 = vmatpush2.msra.mxu0 0.0
    %3988 = vmatprep.subr.mxu0 0.0
    %3989 = vmatpush2.msra.mxu0 0.0
    %3990 = vmatprep.subr.mxu0 0.0
    %3991 = vmatpush2.msra.mxu0 0.0
    %3992 = vmatprep.subr.mxu0 0.0
    %3993 = vmatpush2.msra.mxu0 0.0
    %3994 = vmatprep.subr.mxu0 0.0
    %3995 = vmatpush2.msra.mxu0 0.0
    %3996 = vmatprep.subr.mxu0 0.0
    %3997 = vmatpush2.msra.mxu0 0.0
    %3998 = vmatprep.mubr.f32.mxu0 0.0
    %v3999 = vand.u32 %v3593, 4294901760
    %4000 = vmatmul.mubr.f32.gmra.mxu0 %v3999
    %v4001 = vpop.f32.mrf.mxu0
    %v4002 = vadd.f32 %v3919, %v4001
    %v4003 = vpop.f32.mrf.mxu0
    %4004 = vdwg.mxu0
    %4005 = vmatprep.subr.mxu0 0.0
    %4006 = vmatpush1.msra.mxu0 0.0
    %4007 = vmatprep.subr.mxu0 0.0
    %4008 = vmatpush1.msra.mxu0 0.0
    %4009 = vmatprep.subr.mxu0 0.0
    %4010 = vmatpush1.msra.mxu0 0.0
    %4011 = vmatprep.subr.mxu0 0.0
    %4012 = vmatpush1.msra.mxu0 0.0
    %4013 = vmatprep.subr.mxu0 0.0
    %4014 = vmatpush1.msra.mxu0 0.0
    %4015 = vmatprep.subr.mxu0 0.0
    %4016 = vmatpush1.msra.mxu0 0.0
    %4017 = vmatprep.subr.mxu0 0.0
    %4018 = vmatpush1.msra.mxu0 0.0
    %4019 = vmatprep.subr.mxu0 0.0
    %4020 = vmatpush1.msra.mxu0 0.0
    %4021 = vmatprep.subr.mxu0 0.0
    %4022 = vmatpush1.msra.mxu0 0.0
    %4023 = vmatprep.subr.mxu0 0.0
    %4024 = vmatpush1.msra.mxu0 0.0
    %4025 = vmatprep.subr.mxu0 0.0
    %4026 = vmatpush1.msra.mxu0 0.0
    %4027 = vmatprep.subr.mxu0 0.0
    %4028 = vmatpush1.msra.mxu0 0.0
    %4029 = vmatprep.subr.mxu0 0.0
    %v4030 = vand.u32 %v998, 4294901760
    %4031 = vmatpush1.msra.mxu0 %v4030
    %4032 = vmatprep.subr.mxu0 0.0
    %v4033 = vand.u32 %v997, 4294901760
    %4034 = vmatpush1.msra.mxu0 %v4033
    %4035 = vmatprep.subr.mxu0 0.0
    %v4036 = vand.u32 %v996, 4294901760
    %4037 = vmatpush1.msra.mxu0 %v4036
    %4038 = vmatprep.subr.mxu0 0.0
    %v4039 = vand.u32 %v995, 4294901760
    %4040 = vmatpush1.msra.mxu0 %v4039
    %4041 = vmatprep.subr.mxu0 0.0
    %4042 = vmatpush2.msra.mxu0 0.0
    %4043 = vmatprep.subr.mxu0 0.0
    %4044 = vmatpush2.msra.mxu0 0.0
    %4045 = vmatprep.subr.mxu0 0.0
    %4046 = vmatpush2.msra.mxu0 0.0
    %4047 = vmatprep.subr.mxu0 0.0
    %4048 = vmatpush2.msra.mxu0 0.0
    %4049 = vmatprep.subr.mxu0 0.0
    %4050 = vmatpush2.msra.mxu0 0.0
    %4051 = vmatprep.subr.mxu0 0.0
    %4052 = vmatpush2.msra.mxu0 0.0
    %4053 = vmatprep.subr.mxu0 0.0
    %4054 = vmatpush2.msra.mxu0 0.0
    %4055 = vmatprep.subr.mxu0 0.0
    %4056 = vmatpush2.msra.mxu0 0.0
    %4057 = vmatprep.subr.mxu0 0.0
    %4058 = vmatpush2.msra.mxu0 0.0
    %4059 = vmatprep.subr.mxu0 0.0
    %4060 = vmatpush2.msra.mxu0 0.0
    %4061 = vmatprep.subr.mxu0 0.0
    %4062 = vmatpush2.msra.mxu0 0.0
    %4063 = vmatprep.subr.mxu0 0.0
    %4064 = vmatpush2.msra.mxu0 0.0
    %4065 = vmatprep.subr.mxu0 0.0
    %4066 = vmatpush2.msra.mxu0 0.0
    %4067 = vmatprep.subr.mxu0 0.0
    %4068 = vmatpush2.msra.mxu0 0.0
    %4069 = vmatprep.subr.mxu0 0.0
    %4070 = vmatpush2.msra.mxu0 0.0
    %4071 = vmatprep.subr.mxu0 0.0
    %4072 = vmatpush2.msra.mxu0 0.0
    %4073 = vmatprep.mubr.f32.mxu0 0.0
    %v4074 = vand.u32 %v3593, 4294901760
    %4075 = vmatmul.mubr.f32.gmra.mxu0 %v4074
    %v4076 = vpop.f32.mrf.mxu0
    %v4077 = vadd.f32 %v4002, %v4076
    %v4078 = vpop.f32.mrf.mxu0
    %4079 = vdwg.mxu0
    %v4080 = vadd.f32 %v3589, %v4077
    %v4081 = vxor.u32 %v4080, 2147483648
    %v4082 = vmul.f32 %v4081, 1.442695
    %v4083 = vpow.pop %v4082
    %v4084 = vadd.f32 %v4083, 1.0
    %v4085 = vrcp.pop %v4084
    %v4086 = vmul.f32 1.0, %v4085
    %v4087 = vtanh.pop %v4080
    %v4088 = vmul.f32 %v4086, %v3581
    %4090 = vrot.lane.b32.xlu0 %v4087, 32
    %v4091 = vpop.permute.xlu0 %4090
    %v4093 = vmul.f32 %v4086, %v4091
    %4095 = vrot.lane.b32.xlu0 %v4093, 32
    %v4096 = vpop.permute.xlu0 %4095
    %v4098 = vadd.f32 %v4088, %v4096
    %v4099 = vtanh.pop %v4098
    %4101 = vrot.lane.b32.xlu0 %v4099, 32
    %v4102 = vpop.permute.xlu0 %4101
    %v4104 = vmul.f32 %v4086, %v4102
    %s4105 = scalar_lea.vmem [#allocation2], 48
    %v4106 = vld [vmem:[%s4105] sm:$0xff]
    %4108 = vrot.lane.b32.xlu0 %v4104, 64
    %v4109 = vpop.permute.xlu0 %4108
    %v4110 = vsel %vm1002, %v4109, 0
    %4112 = vmatprep.subr.mxu0 0.0
    %4113 = vmatpush1.msra.mxu0 0.0
    %4114 = vmatprep.subr.mxu0 0.0
    %4115 = vmatpush1.msra.mxu0 0.0
    %4116 = vmatprep.subr.mxu0 0.0
    %4117 = vmatpush1.msra.mxu0 0.0
    %4118 = vmatprep.subr.mxu0 0.0
    %4119 = vmatpush1.msra.mxu0 0.0
    %4120 = vmatprep.subr.mxu0 0.0
    %4121 = vmatpush1.msra.mxu0 0.0
    %4122 = vmatprep.subr.mxu0 0.0
    %4123 = vmatpush1.msra.mxu0 0.0
    %4124 = vmatprep.subr.mxu0 0.0
    %4125 = vmatpush1.msra.mxu0 0.0
    %4126 = vmatprep.subr.mxu0 0.0
    %4127 = vmatpush1.msra.mxu0 0.0
    %4128 = vmatprep.subr.mxu0 0.0
    %4129 = vmatpush1.msra.mxu0 0.0
    %4130 = vmatprep.subr.mxu0 0.0
    %4131 = vmatpush1.msra.mxu0 0.0
    %4132 = vmatprep.subr.mxu0 0.0
    %4133 = vmatpush1.msra.mxu0 0.0
    %4134 = vmatprep.subr.mxu0 0.0
    %4135 = vmatpush1.msra.mxu0 0.0
    %4136 = vmatprep.subr.mxu0 0.0
    %v4137 = vand.u32 %v998, 4294901760
    %4138 = vmatpush1.msra.mxu0 %v4137
    %4139 = vmatprep.subr.mxu0 0.0
    %v4140 = vand.u32 %v997, 4294901760
    %4141 = vmatpush1.msra.mxu0 %v4140
    %4142 = vmatprep.subr.mxu0 0.0
    %v4143 = vand.u32 %v996, 4294901760
    %4144 = vmatpush1.msra.mxu0 %v4143
    %4145 = vmatprep.subr.mxu0 0.0
    %v4146 = vand.u32 %v995, 4294901760
    %4147 = vmatpush1.msra.mxu0 %v4146
    %4148 = vmatprep.subr.mxu0 0.0
    %4149 = vmatpush2.msra.mxu0 0.0
    %4150 = vmatprep.subr.mxu0 0.0
    %4151 = vmatpush2.msra.mxu0 0.0
    %4152 = vmatprep.subr.mxu0 0.0
    %4153 = vmatpush2.msra.mxu0 0.0
    %4154 = vmatprep.subr.mxu0 0.0
    %4155 = vmatpush2.msra.mxu0 0.0
    %4156 = vmatprep.subr.mxu0 0.0
    %4157 = vmatpush2.msra.mxu0 0.0
    %4158 = vmatprep.subr.mxu0 0.0
    %4159 = vmatpush2.msra.mxu0 0.0
    %4160 = vmatprep.subr.mxu0 0.0
    %4161 = vmatpush2.msra.mxu0 0.0
    %4162 = vmatprep.subr.mxu0 0.0
    %4163 = vmatpush2.msra.mxu0 0.0
    %4164 = vmatprep.subr.mxu0 0.0
    %4165 = vmatpush2.msra.mxu0 0.0
    %4166 = vmatprep.subr.mxu0 0.0
    %4167 = vmatpush2.msra.mxu0 0.0
    %4168 = vmatprep.subr.mxu0 0.0
    %4169 = vmatpush2.msra.mxu0 0.0
    %4170 = vmatprep.subr.mxu0 0.0
    %4171 = vmatpush2.msra.mxu0 0.0
    %4172 = vmatprep.subr.mxu0 0.0
    %4173 = vmatpush2.msra.mxu0 0.0
    %4174 = vmatprep.subr.mxu0 0.0
    %4175 = vmatpush2.msra.mxu0 0.0
    %4176 = vmatprep.subr.mxu0 0.0
    %4177 = vmatpush2.msra.mxu0 0.0
    %4178 = vmatprep.subr.mxu0 0.0
    %4179 = vmatpush2.msra.mxu0 0.0
    %4180 = vmatprep.mubr.f32.mxu0 0.0
    %v4181 = vand.u32 %v4110, 4294901760
    %v4182 = vsub.f32 %v4110, %v4181
    %v4183 = vand.u32 %v4182, 4294901760
    %v4184 = vsub.f32 %v4182, %v4183
    %v4185 = vand.u32 %v4184, 4294901760
    %4186 = vmatmul.mubr.f32.gmra.mxu0 %v4185
    %v4187 = vpop.f32.mrf.mxu0
    %v4188 = vadd.f32 0.0, %v4187
    %v4189 = vpop.f32.mrf.mxu0
    %4190 = vdwg.mxu0
    %4191 = vmatprep.subr.mxu0 0.0
    %4192 = vmatpush1.msra.mxu0 0.0
    %4193 = vmatprep.subr.mxu0 0.0
    %4194 = vmatpush1.msra.mxu0 0.0
    %4195 = vmatprep.subr.mxu0 0.0
    %4196 = vmatpush1.msra.mxu0 0.0
    %4197 = vmatprep.subr.mxu0 0.0
    %4198 = vmatpush1.msra.mxu0 0.0
    %4199 = vmatprep.subr.mxu0 0.0
    %4200 = vmatpush1.msra.mxu0 0.0
    %4201 = vmatprep.subr.mxu0 0.0
    %4202 = vmatpush1.msra.mxu0 0.0
    %4203 = vmatprep.subr.mxu0 0.0
    %4204 = vmatpush1.msra.mxu0 0.0
    %4205 = vmatprep.subr.mxu0 0.0
    %4206 = vmatpush1.msra.mxu0 0.0
    %4207 = vmatprep.subr.mxu0 0.0
    %4208 = vmatpush1.msra.mxu0 0.0
    %4209 = vmatprep.subr.mxu0 0.0
    %4210 = vmatpush1.msra.mxu0 0.0
    %4211 = vmatprep.subr.mxu0 0.0
    %4212 = vmatpush1.msra.mxu0 0.0
    %4213 = vmatprep.subr.mxu0 0.0
    %4214 = vmatpush1.msra.mxu0 0.0
    %4215 = vmatprep.subr.mxu0 0.0
    %v4216 = vand.u32 %v998, 4294901760
    %v4217 = vsub.f32 %v998, %v4216
    %v4218 = vand.u32 %v4217, 4294901760
    %v4219 = vsub.f32 %v4217, %v4218
    %v4220 = vand.u32 %v4219, 4294901760
    %4221 = vmatpush1.msra.mxu0 %v4220
    %4222 = vmatprep.subr.mxu0 0.0
    %v4223 = vand.u32 %v997, 4294901760
    %v4224 = vsub.f32 %v997, %v4223
    %v4225 = vand.u32 %v4224, 4294901760
    %v4226 = vsub.f32 %v4224, %v4225
    %v4227 = vand.u32 %v4226, 4294901760
    %4228 = vmatpush1.msra.mxu0 %v4227
    %4229 = vmatprep.subr.mxu0 0.0
    %v4230 = vand.u32 %v996, 4294901760
    %v4231 = vsub.f32 %v996, %v4230
    %v4232 = vand.u32 %v4231, 4294901760
    %v4233 = vsub.f32 %v4231, %v4232
    %v4234 = vand.u32 %v4233, 4294901760
    %4235 = vmatpush1.msra.mxu0 %v4234
    %4236 = vmatprep.subr.mxu0 0.0
    %v4237 = vand.u32 %v995, 4294901760
    %v4238 = vsub.f32 %v995, %v4237
    %v4239 = vand.u32 %v4238, 4294901760
    %v4240 = vsub.f32 %v4238, %v4239
    %v4241 = vand.u32 %v4240, 4294901760
    %4242 = vmatpush1.msra.mxu0 %v4241
    %4243 = vmatprep.subr.mxu0 0.0
    %4244 = vmatpush2.msra.mxu0 0.0
    %4245 = vmatprep.subr.mxu0 0.0
    %4246 = vmatpush2.msra.mxu0 0.0
    %4247 = vmatprep.subr.mxu0 0.0
    %4248 = vmatpush2.msra.mxu0 0.0
    %4249 = vmatprep.subr.mxu0 0.0
    %4250 = vmatpush2.msra.mxu0 0.0
    %4251 = vmatprep.subr.mxu0 0.0
    %4252 = vmatpush2.msra.mxu0 0.0
    %4253 = vmatprep.subr.mxu0 0.0
    %4254 = vmatpush2.msra.mxu0 0.0
    %4255 = vmatprep.subr.mxu0 0.0
    %4256 = vmatpush2.msra.mxu0 0.0
    %4257 = vmatprep.subr.mxu0 0.0
    %4258 = vmatpush2.msra.mxu0 0.0
    %4259 = vmatprep.subr.mxu0 0.0
    %4260 = vmatpush2.msra.mxu0 0.0
    %4261 = vmatprep.subr.mxu0 0.0
    %4262 = vmatpush2.msra.mxu0 0.0
    %4263 = vmatprep.subr.mxu0 0.0
    %4264 = vmatpush2.msra.mxu0 0.0
    %4265 = vmatprep.subr.mxu0 0.0
    %4266 = vmatpush2.msra.mxu0 0.0
    %4267 = vmatprep.subr.mxu0 0.0
    %4268 = vmatpush2.msra.mxu0 0.0
    %4269 = vmatprep.subr.mxu0 0.0
    %4270 = vmatpush2.msra.mxu0 0.0
    %4271 = vmatprep.subr.mxu0 0.0
    %4272 = vmatpush2.msra.mxu0 0.0
    %4273 = vmatprep.subr.mxu0 0.0
    %4274 = vmatpush2.msra.mxu0 0.0
    %4275 = vmatprep.mubr.f32.mxu0 0.0
    %v4276 = vand.u32 %v4110, 4294901760
    %4277 = vmatmul.mubr.f32.gmra.mxu0 %v4276
    %v4278 = vpop.f32.mrf.mxu0
    %v4279 = vadd.f32 %v4188, %v4278
    %v4280 = vpop.f32.mrf.mxu0
    %4281 = vdwg.mxu0
    %4282 = vmatprep.subr.mxu0 0.0
    %4283 = vmatpush1.msra.mxu0 0.0
    %4284 = vmatprep.subr.mxu0 0.0
    %4285 = vmatpush1.msra.mxu0 0.0
    %4286 = vmatprep.subr.mxu0 0.0
    %4287 = vmatpush1.msra.mxu0 0.0
    %4288 = vmatprep.subr.mxu0 0.0
    %4289 = vmatpush1.msra.mxu0 0.0
    %4290 = vmatprep.subr.mxu0 0.0
    %4291 = vmatpush1.msra.mxu0 0.0
    %4292 = vmatprep.subr.mxu0 0.0
    %4293 = vmatpush1.msra.mxu0 0.0
    %4294 = vmatprep.subr.mxu0 0.0
    %4295 = vmatpush1.msra.mxu0 0.0
    %4296 = vmatprep.subr.mxu0 0.0
    %4297 = vmatpush1.msra.mxu0 0.0
    %4298 = vmatprep.subr.mxu0 0.0
    %4299 = vmatpush1.msra.mxu0 0.0
    %4300 = vmatprep.subr.mxu0 0.0
    %4301 = vmatpush1.msra.mxu0 0.0
    %4302 = vmatprep.subr.mxu0 0.0
    %4303 = vmatpush1.msra.mxu0 0.0
    %4304 = vmatprep.subr.mxu0 0.0
    %4305 = vmatpush1.msra.mxu0 0.0
    %4306 = vmatprep.subr.mxu0 0.0
    %v4307 = vand.u32 %v998, 4294901760
    %v4308 = vsub.f32 %v998, %v4307
    %4309 = vmatpush1.msra.mxu0 %v4308
    %4310 = vmatprep.subr.mxu0 0.0
    %v4311 = vand.u32 %v997, 4294901760
    %v4312 = vsub.f32 %v997, %v4311
    %4313 = vmatpush1.msra.mxu0 %v4312
    %4314 = vmatprep.subr.mxu0 0.0
    %v4315 = vand.u32 %v996, 4294901760
    %v4316 = vsub.f32 %v996, %v4315
    %4317 = vmatpush1.msra.mxu0 %v4316
    %4318 = vmatprep.subr.mxu0 0.0
    %v4319 = vand.u32 %v995, 4294901760
    %v4320 = vsub.f32 %v995, %v4319
    %4321 = vmatpush1.msra.mxu0 %v4320
    %4322 = vmatprep.subr.mxu0 0.0
    %4323 = vmatpush2.msra.mxu0 0.0
    %4324 = vmatprep.subr.mxu0 0.0
    %4325 = vmatpush2.msra.mxu0 0.0
    %4326 = vmatprep.subr.mxu0 0.0
    %4327 = vmatpush2.msra.mxu0 0.0
    %4328 = vmatprep.subr.mxu0 0.0
    %4329 = vmatpush2.msra.mxu0 0.0
    %4330 = vmatprep.subr.mxu0 0.0
    %4331 = vmatpush2.msra.mxu0 0.0
    %4332 = vmatprep.subr.mxu0 0.0
    %4333 = vmatpush2.msra.mxu0 0.0
    %4334 = vmatprep.subr.mxu0 0.0
    %4335 = vmatpush2.msra.mxu0 0.0
    %4336 = vmatprep.subr.mxu0 0.0
    %4337 = vmatpush2.msra.mxu0 0.0
    %4338 = vmatprep.subr.mxu0 0.0
    %4339 = vmatpush2.msra.mxu0 0.0
    %4340 = vmatprep.subr.mxu0 0.0
    %4341 = vmatpush2.msra.mxu0 0.0
    %4342 = vmatprep.subr.mxu0 0.0
    %4343 = vmatpush2.msra.mxu0 0.0
    %4344 = vmatprep.subr.mxu0 0.0
    %4345 = vmatpush2.msra.mxu0 0.0
    %4346 = vmatprep.subr.mxu0 0.0
    %4347 = vmatpush2.msra.mxu0 0.0
    %4348 = vmatprep.subr.mxu0 0.0
    %4349 = vmatpush2.msra.mxu0 0.0
    %4350 = vmatprep.subr.mxu0 0.0
    %4351 = vmatpush2.msra.mxu0 0.0
    %4352 = vmatprep.subr.mxu0 0.0
    %4353 = vmatpush2.msra.mxu0 0.0
    %4354 = vmatprep.mubr.f32.mxu0 0.0
    %v4355 = vand.u32 %v4110, 4294901760
    %v4356 = vsub.f32 %v4110, %v4355
    %4357 = vmatmul.mubr.f32.gmra.mxu0 %v4356
    %v4358 = vpop.f32.mrf.mxu0
    %v4359 = vadd.f32 %v4279, %v4358
    %v4360 = vpop.f32.mrf.mxu0
    %4361 = vdwg.mxu0
    %4362 = vmatprep.subr.mxu0 0.0
    %4363 = vmatpush1.msra.mxu0 0.0
    %4364 = vmatprep.subr.mxu0 0.0
    %4365 = vmatpush1.msra.mxu0 0.0
    %4366 = vmatprep.subr.mxu0 0.0
    %4367 = vmatpush1.msra.mxu0 0.0
    %4368 = vmatprep.subr.mxu0 0.0
    %4369 = vmatpush1.msra.mxu0 0.0
    %4370 = vmatprep.subr.mxu0 0.0
    %4371 = vmatpush1.msra.mxu0 0.0
    %4372 = vmatprep.subr.mxu0 0.0
    %4373 = vmatpush1.msra.mxu0 0.0
    %4374 = vmatprep.subr.mxu0 0.0
    %4375 = vmatpush1.msra.mxu0 0.0
    %4376 = vmatprep.subr.mxu0 0.0
    %4377 = vmatpush1.msra.mxu0 0.0
    %4378 = vmatprep.subr.mxu0 0.0
    %4379 = vmatpush1.msra.mxu0 0.0
    %4380 = vmatprep.subr.mxu0 0.0
    %4381 = vmatpush1.msra.mxu0 0.0
    %4382 = vmatprep.subr.mxu0 0.0
    %4383 = vmatpush1.msra.mxu0 0.0
    %4384 = vmatprep.subr.mxu0 0.0
    %4385 = vmatpush1.msra.mxu0 0.0
    %4386 = vmatprep.subr.mxu0 0.0
    %v4387 = vand.u32 %v998, 4294901760
    %4388 = vmatpush1.msra.mxu0 %v4387
    %4389 = vmatprep.subr.mxu0 0.0
    %v4390 = vand.u32 %v997, 4294901760
    %4391 = vmatpush1.msra.mxu0 %v4390
    %4392 = vmatprep.subr.mxu0 0.0
    %v4393 = vand.u32 %v996, 4294901760
    %4394 = vmatpush1.msra.mxu0 %v4393
    %4395 = vmatprep.subr.mxu0 0.0
    %v4396 = vand.u32 %v995, 4294901760
    %4397 = vmatpush1.msra.mxu0 %v4396
    %4398 = vmatprep.subr.mxu0 0.0
    %4399 = vmatpush2.msra.mxu0 0.0
    %4400 = vmatprep.subr.mxu0 0.0
    %4401 = vmatpush2.msra.mxu0 0.0
    %4402 = vmatprep.subr.mxu0 0.0
    %4403 = vmatpush2.msra.mxu0 0.0
    %4404 = vmatprep.subr.mxu0 0.0
    %4405 = vmatpush2.msra.mxu0 0.0
    %4406 = vmatprep.subr.mxu0 0.0
    %4407 = vmatpush2.msra.mxu0 0.0
    %4408 = vmatprep.subr.mxu0 0.0
    %4409 = vmatpush2.msra.mxu0 0.0
    %4410 = vmatprep.subr.mxu0 0.0
    %4411 = vmatpush2.msra.mxu0 0.0
    %4412 = vmatprep.subr.mxu0 0.0
    %4413 = vmatpush2.msra.mxu0 0.0
    %4414 = vmatprep.subr.mxu0 0.0
    %4415 = vmatpush2.msra.mxu0 0.0
    %4416 = vmatprep.subr.mxu0 0.0
    %4417 = vmatpush2.msra.mxu0 0.0
    %4418 = vmatprep.subr.mxu0 0.0
    %4419 = vmatpush2.msra.mxu0 0.0
    %4420 = vmatprep.subr.mxu0 0.0
    %4421 = vmatpush2.msra.mxu0 0.0
    %4422 = vmatprep.subr.mxu0 0.0
    %4423 = vmatpush2.msra.mxu0 0.0
    %4424 = vmatprep.subr.mxu0 0.0
    %4425 = vmatpush2.msra.mxu0 0.0
    %4426 = vmatprep.subr.mxu0 0.0
    %4427 = vmatpush2.msra.mxu0 0.0
    %4428 = vmatprep.subr.mxu0 0.0
    %4429 = vmatpush2.msra.mxu0 0.0
    %4430 = vmatprep.mubr.f32.mxu0 0.0
    %v4431 = vand.u32 %v4110, 4294901760
    %v4432 = vsub.f32 %v4110, %v4431
    %v4433 = vand.u32 %v4432, 4294901760
    %4434 = vmatmul.mubr.f32.gmra.mxu0 %v4433
    %v4435 = vpop.f32.mrf.mxu0
    %v4436 = vadd.f32 %v4359, %v4435
    %v4437 = vpop.f32.mrf.mxu0
    %4438 = vdwg.mxu0
    %4439 = vmatprep.subr.mxu0 0.0
    %4440 = vmatpush1.msra.mxu0 0.0
    %4441 = vmatprep.subr.mxu0 0.0
    %4442 = vmatpush1.msra.mxu0 0.0
    %4443 = vmatprep.subr.mxu0 0.0
    %4444 = vmatpush1.msra.mxu0 0.0
    %4445 = vmatprep.subr.mxu0 0.0
    %4446 = vmatpush1.msra.mxu0 0.0
    %4447 = vmatprep.subr.mxu0 0.0
    %4448 = vmatpush1.msra.mxu0 0.0
    %4449 = vmatprep.subr.mxu0 0.0
    %4450 = vmatpush1.msra.mxu0 0.0
    %4451 = vmatprep.subr.mxu0 0.0
    %4452 = vmatpush1.msra.mxu0 0.0
    %4453 = vmatprep.subr.mxu0 0.0
    %4454 = vmatpush1.msra.mxu0 0.0
    %4455 = vmatprep.subr.mxu0 0.0
    %4456 = vmatpush1.msra.mxu0 0.0
    %4457 = vmatprep.subr.mxu0 0.0
    %4458 = vmatpush1.msra.mxu0 0.0
    %4459 = vmatprep.subr.mxu0 0.0
    %4460 = vmatpush1.msra.mxu0 0.0
    %4461 = vmatprep.subr.mxu0 0.0
    %4462 = vmatpush1.msra.mxu0 0.0
    %4463 = vmatprep.subr.mxu0 0.0
    %v4464 = vand.u32 %v998, 4294901760
    %v4465 = vsub.f32 %v998, %v4464
    %v4466 = vand.u32 %v4465, 4294901760
    %4467 = vmatpush1.msra.mxu0 %v4466
    %4468 = vmatprep.subr.mxu0 0.0
    %v4469 = vand.u32 %v997, 4294901760
    %v4470 = vsub.f32 %v997, %v4469
    %v4471 = vand.u32 %v4470, 4294901760
    %4472 = vmatpush1.msra.mxu0 %v4471
    %4473 = vmatprep.subr.mxu0 0.0
    %v4474 = vand.u32 %v996, 4294901760
    %v4475 = vsub.f32 %v996, %v4474
    %v4476 = vand.u32 %v4475, 4294901760
    %4477 = vmatpush1.msra.mxu0 %v4476
    %4478 = vmatprep.subr.mxu0 0.0
    %v4479 = vand.u32 %v995, 4294901760
    %v4480 = vsub.f32 %v995, %v4479
    %v4481 = vand.u32 %v4480, 4294901760
    %4482 = vmatpush1.msra.mxu0 %v4481
    %4483 = vmatprep.subr.mxu0 0.0
    %4484 = vmatpush2.msra.mxu0 0.0
    %4485 = vmatprep.subr.mxu0 0.0
    %4486 = vmatpush2.msra.mxu0 0.0
    %4487 = vmatprep.subr.mxu0 0.0
    %4488 = vmatpush2.msra.mxu0 0.0
    %4489 = vmatprep.subr.mxu0 0.0
    %4490 = vmatpush2.msra.mxu0 0.0
    %4491 = vmatprep.subr.mxu0 0.0
    %4492 = vmatpush2.msra.mxu0 0.0
    %4493 = vmatprep.subr.mxu0 0.0
    %4494 = vmatpush2.msra.mxu0 0.0
    %4495 = vmatprep.subr.mxu0 0.0
    %4496 = vmatpush2.msra.mxu0 0.0
    %4497 = vmatprep.subr.mxu0 0.0
    %4498 = vmatpush2.msra.mxu0 0.0
    %4499 = vmatprep.subr.mxu0 0.0
    %4500 = vmatpush2.msra.mxu0 0.0
    %4501 = vmatprep.subr.mxu0 0.0
    %4502 = vmatpush2.msra.mxu0 0.0
    %4503 = vmatprep.subr.mxu0 0.0
    %4504 = vmatpush2.msra.mxu0 0.0
    %4505 = vmatprep.subr.mxu0 0.0
    %4506 = vmatpush2.msra.mxu0 0.0
    %4507 = vmatprep.subr.mxu0 0.0
    %4508 = vmatpush2.msra.mxu0 0.0
    %4509 = vmatprep.subr.mxu0 0.0
    %4510 = vmatpush2.msra.mxu0 0.0
    %4511 = vmatprep.subr.mxu0 0.0
    %4512 = vmatpush2.msra.mxu0 0.0
    %4513 = vmatprep.subr.mxu0 0.0
    %4514 = vmatpush2.msra.mxu0 0.0
    %4515 = vmatprep.mubr.f32.mxu0 0.0
    %v4516 = vand.u32 %v4110, 4294901760
    %4517 = vmatmul.mubr.f32.gmra.mxu0 %v4516
    %v4518 = vpop.f32.mrf.mxu0
    %v4519 = vadd.f32 %v4436, %v4518
    %v4520 = vpop.f32.mrf.mxu0
    %4521 = vdwg.mxu0
    %4522 = vmatprep.subr.mxu0 0.0
    %4523 = vmatpush1.msra.mxu0 0.0
    %4524 = vmatprep.subr.mxu0 0.0
    %4525 = vmatpush1.msra.mxu0 0.0
    %4526 = vmatprep.subr.mxu0 0.0
    %4527 = vmatpush1.msra.mxu0 0.0
    %4528 = vmatprep.subr.mxu0 0.0
    %4529 = vmatpush1.msra.mxu0 0.0
    %4530 = vmatprep.subr.mxu0 0.0
    %4531 = vmatpush1.msra.mxu0 0.0
    %4532 = vmatprep.subr.mxu0 0.0
    %4533 = vmatpush1.msra.mxu0 0.0
    %4534 = vmatprep.subr.mxu0 0.0
    %4535 = vmatpush1.msra.mxu0 0.0
    %4536 = vmatprep.subr.mxu0 0.0
    %4537 = vmatpush1.msra.mxu0 0.0
    %4538 = vmatprep.subr.mxu0 0.0
    %4539 = vmatpush1.msra.mxu0 0.0
    %4540 = vmatprep.subr.mxu0 0.0
    %4541 = vmatpush1.msra.mxu0 0.0
    %4542 = vmatprep.subr.mxu0 0.0
    %4543 = vmatpush1.msra.mxu0 0.0
    %4544 = vmatprep.subr.mxu0 0.0
    %4545 = vmatpush1.msra.mxu0 0.0
    %4546 = vmatprep.subr.mxu0 0.0
    %v4547 = vand.u32 %v998, 4294901760
    %4548 = vmatpush1.msra.mxu0 %v4547
    %4549 = vmatprep.subr.mxu0 0.0
    %v4550 = vand.u32 %v997, 4294901760
    %4551 = vmatpush1.msra.mxu0 %v4550
    %4552 = vmatprep.subr.mxu0 0.0
    %v4553 = vand.u32 %v996, 4294901760
    %4554 = vmatpush1.msra.mxu0 %v4553
    %4555 = vmatprep.subr.mxu0 0.0
    %v4556 = vand.u32 %v995, 4294901760
    %4557 = vmatpush1.msra.mxu0 %v4556
    %4558 = vmatprep.subr.mxu0 0.0
    %4559 = vmatpush2.msra.mxu0 0.0
    %4560 = vmatprep.subr.mxu0 0.0
    %4561 = vmatpush2.msra.mxu0 0.0
    %4562 = vmatprep.subr.mxu0 0.0
    %4563 = vmatpush2.msra.mxu0 0.0
    %4564 = vmatprep.subr.mxu0 0.0
    %4565 = vmatpush2.msra.mxu0 0.0
    %4566 = vmatprep.subr.mxu0 0.0
    %4567 = vmatpush2.msra.mxu0 0.0
    %4568 = vmatprep.subr.mxu0 0.0
    %4569 = vmatpush2.msra.mxu0 0.0
    %4570 = vmatprep.subr.mxu0 0.0
    %4571 = vmatpush2.msra.mxu0 0.0
    %4572 = vmatprep.subr.mxu0 0.0
    %4573 = vmatpush2.msra.mxu0 0.0
    %4574 = vmatprep.subr.mxu0 0.0
    %4575 = vmatpush2.msra.mxu0 0.0
    %4576 = vmatprep.subr.mxu0 0.0
    %4577 = vmatpush2.msra.mxu0 0.0
    %4578 = vmatprep.subr.mxu0 0.0
    %4579 = vmatpush2.msra.mxu0 0.0
    %4580 = vmatprep.subr.mxu0 0.0
    %4581 = vmatpush2.msra.mxu0 0.0
    %4582 = vmatprep.subr.mxu0 0.0
    %4583 = vmatpush2.msra.mxu0 0.0
    %4584 = vmatprep.subr.mxu0 0.0
    %4585 = vmatpush2.msra.mxu0 0.0
    %4586 = vmatprep.subr.mxu0 0.0
    %4587 = vmatpush2.msra.mxu0 0.0
    %4588 = vmatprep.subr.mxu0 0.0
    %4589 = vmatpush2.msra.mxu0 0.0
    %4590 = vmatprep.mubr.f32.mxu0 0.0
    %v4591 = vand.u32 %v4110, 4294901760
    %4592 = vmatmul.mubr.f32.gmra.mxu0 %v4591
    %v4593 = vpop.f32.mrf.mxu0
    %v4594 = vadd.f32 %v4519, %v4593
    %v4595 = vpop.f32.mrf.mxu0
    %4596 = vdwg.mxu0
    %v4597 = vadd.f32 %v4106, %v4594
    %v4598 = vxor.u32 %v4597, 2147483648
    %v4599 = vmul.f32 %v4598, 1.442695
    %v4600 = vpow.pop %v4599
    %v4601 = vadd.f32 %v4600, 1.0
    %v4602 = vrcp.pop %v4601
    %v4603 = vmul.f32 1.0, %v4602
    %v4604 = vtanh.pop %v4597
    %v4605 = vmul.f32 %v4603, %v4098
    %4607 = vrot.lane.b32.xlu0 %v4604, 32
    %v4608 = vpop.permute.xlu0 %4607
    %v4610 = vmul.f32 %v4603, %v4608
    %4612 = vrot.lane.b32.xlu0 %v4610, 32
    %v4613 = vpop.permute.xlu0 %4612
    %v4615 = vadd.f32 %v4605, %v4613
    %v4616 = vtanh.pop %v4615
    %4618 = vrot.lane.b32.xlu0 %v4616, 32
    %v4619 = vpop.permute.xlu0 %4618
    %v4621 = vmul.f32 %v4603, %v4619
    %s4622 = scalar_lea.vmem [#allocation2], 56
    %v4623 = vld [vmem:[%s4622] sm:$0xff]
    %4625 = vrot.lane.b32.xlu0 %v4621, 64
    %v4626 = vpop.permute.xlu0 %4625
    %v4627 = vsel %vm1002, %v4626, 0
    %4629 = vmatprep.subr.mxu0 0.0
    %4630 = vmatpush1.msra.mxu0 0.0
    %4631 = vmatprep.subr.mxu0 0.0
    %4632 = vmatpush1.msra.mxu0 0.0
    %4633 = vmatprep.subr.mxu0 0.0
    %4634 = vmatpush1.msra.mxu0 0.0
    %4635 = vmatprep.subr.mxu0 0.0
    %4636 = vmatpush1.msra.mxu0 0.0
    %4637 = vmatprep.subr.mxu0 0.0
    %4638 = vmatpush1.msra.mxu0 0.0
    %4639 = vmatprep.subr.mxu0 0.0
    %4640 = vmatpush1.msra.mxu0 0.0
    %4641 = vmatprep.subr.mxu0 0.0
    %4642 = vmatpush1.msra.mxu0 0.0
    %4643 = vmatprep.subr.mxu0 0.0
    %4644 = vmatpush1.msra.mxu0 0.0
    %4645 = vmatprep.subr.mxu0 0.0
    %4646 = vmatpush1.msra.mxu0 0.0
    %4647 = vmatprep.subr.mxu0 0.0
    %4648 = vmatpush1.msra.mxu0 0.0
    %4649 = vmatprep.subr.mxu0 0.0
    %4650 = vmatpush1.msra.mxu0 0.0
    %4651 = vmatprep.subr.mxu0 0.0
    %4652 = vmatpush1.msra.mxu0 0.0
    %4653 = vmatprep.subr.mxu0 0.0
    %v4654 = vand.u32 %v998, 4294901760
    %4655 = vmatpush1.msra.mxu0 %v4654
    %4656 = vmatprep.subr.mxu0 0.0
    %v4657 = vand.u32 %v997, 4294901760
    %4658 = vmatpush1.msra.mxu0 %v4657
    %4659 = vmatprep.subr.mxu0 0.0
    %v4660 = vand.u32 %v996, 4294901760
    %4661 = vmatpush1.msra.mxu0 %v4660
    %4662 = vmatprep.subr.mxu0 0.0
    %v4663 = vand.u32 %v995, 4294901760
    %4664 = vmatpush1.msra.mxu0 %v4663
    %4665 = vmatprep.subr.mxu0 0.0
    %4666 = vmatpush2.msra.mxu0 0.0
    %4667 = vmatprep.subr.mxu0 0.0
    %4668 = vmatpush2.msra.mxu0 0.0
    %4669 = vmatprep.subr.mxu0 0.0
    %4670 = vmatpush2.msra.mxu0 0.0
    %4671 = vmatprep.subr.mxu0 0.0
    %4672 = vmatpush2.msra.mxu0 0.0
    %4673 = vmatprep.subr.mxu0 0.0
    %4674 = vmatpush2.msra.mxu0 0.0
    %4675 = vmatprep.subr.mxu0 0.0
    %4676 = vmatpush2.msra.mxu0 0.0
    %4677 = vmatprep.subr.mxu0 0.0
    %4678 = vmatpush2.msra.mxu0 0.0
    %4679 = vmatprep.subr.mxu0 0.0
    %4680 = vmatpush2.msra.mxu0 0.0
    %4681 = vmatprep.subr.mxu0 0.0
    %4682 = vmatpush2.msra.mxu0 0.0
    %4683 = vmatprep.subr.mxu0 0.0
    %4684 = vmatpush2.msra.mxu0 0.0
    %4685 = vmatprep.subr.mxu0 0.0
    %4686 = vmatpush2.msra.mxu0 0.0
    %4687 = vmatprep.subr.mxu0 0.0
    %4688 = vmatpush2.msra.mxu0 0.0
    %4689 = vmatprep.subr.mxu0 0.0
    %4690 = vmatpush2.msra.mxu0 0.0
    %4691 = vmatprep.subr.mxu0 0.0
    %4692 = vmatpush2.msra.mxu0 0.0
    %4693 = vmatprep.subr.mxu0 0.0
    %4694 = vmatpush2.msra.mxu0 0.0
    %4695 = vmatprep.subr.mxu0 0.0
    %4696 = vmatpush2.msra.mxu0 0.0
    %4697 = vmatprep.mubr.f32.mxu0 0.0
    %v4698 = vand.u32 %v4627, 4294901760
    %v4699 = vsub.f32 %v4627, %v4698
    %v4700 = vand.u32 %v4699, 4294901760
    %v4701 = vsub.f32 %v4699, %v4700
    %v4702 = vand.u32 %v4701, 4294901760
    %4703 = vmatmul.mubr.f32.gmra.mxu0 %v4702
    %v4704 = vpop.f32.mrf.mxu0
    %v4705 = vadd.f32 0.0, %v4704
    %v4706 = vpop.f32.mrf.mxu0
    %4707 = vdwg.mxu0
    %4708 = vmatprep.subr.mxu0 0.0
    %4709 = vmatpush1.msra.mxu0 0.0
    %4710 = vmatprep.subr.mxu0 0.0
    %4711 = vmatpush1.msra.mxu0 0.0
    %4712 = vmatprep.subr.mxu0 0.0
    %4713 = vmatpush1.msra.mxu0 0.0
    %4714 = vmatprep.subr.mxu0 0.0
    %4715 = vmatpush1.msra.mxu0 0.0
    %4716 = vmatprep.subr.mxu0 0.0
    %4717 = vmatpush1.msra.mxu0 0.0
    %4718 = vmatprep.subr.mxu0 0.0
    %4719 = vmatpush1.msra.mxu0 0.0
    %4720 = vmatprep.subr.mxu0 0.0
    %4721 = vmatpush1.msra.mxu0 0.0
    %4722 = vmatprep.subr.mxu0 0.0
    %4723 = vmatpush1.msra.mxu0 0.0
    %4724 = vmatprep.subr.mxu0 0.0
    %4725 = vmatpush1.msra.mxu0 0.0
    %4726 = vmatprep.subr.mxu0 0.0
    %4727 = vmatpush1.msra.mxu0 0.0
    %4728 = vmatprep.subr.mxu0 0.0
    %4729 = vmatpush1.msra.mxu0 0.0
    %4730 = vmatprep.subr.mxu0 0.0
    %4731 = vmatpush1.msra.mxu0 0.0
    %4732 = vmatprep.subr.mxu0 0.0
    %v4733 = vand.u32 %v998, 4294901760
    %v4734 = vsub.f32 %v998, %v4733
    %v4735 = vand.u32 %v4734, 4294901760
    %v4736 = vsub.f32 %v4734, %v4735
    %v4737 = vand.u32 %v4736, 4294901760
    %4738 = vmatpush1.msra.mxu0 %v4737
    %4739 = vmatprep.subr.mxu0 0.0
    %v4740 = vand.u32 %v997, 4294901760
    %v4741 = vsub.f32 %v997, %v4740
    %v4742 = vand.u32 %v4741, 4294901760
    %v4743 = vsub.f32 %v4741, %v4742
    %v4744 = vand.u32 %v4743, 4294901760
    %4745 = vmatpush1.msra.mxu0 %v4744
    %4746 = vmatprep.subr.mxu0 0.0
    %v4747 = vand.u32 %v996, 4294901760
    %v4748 = vsub.f32 %v996, %v4747
    %v4749 = vand.u32 %v4748, 4294901760
    %v4750 = vsub.f32 %v4748, %v4749
    %v4751 = vand.u32 %v4750, 4294901760
    %4752 = vmatpush1.msra.mxu0 %v4751
    %4753 = vmatprep.subr.mxu0 0.0
    %v4754 = vand.u32 %v995, 4294901760
    %v4755 = vsub.f32 %v995, %v4754
    %v4756 = vand.u32 %v4755, 4294901760
    %v4757 = vsub.f32 %v4755, %v4756
    %v4758 = vand.u32 %v4757, 4294901760
    %4759 = vmatpush1.msra.mxu0 %v4758
    %4760 = vmatprep.subr.mxu0 0.0
    %4761 = vmatpush2.msra.mxu0 0.0
    %4762 = vmatprep.subr.mxu0 0.0
    %4763 = vmatpush2.msra.mxu0 0.0
    %4764 = vmatprep.subr.mxu0 0.0
    %4765 = vmatpush2.msra.mxu0 0.0
    %4766 = vmatprep.subr.mxu0 0.0
    %4767 = vmatpush2.msra.mxu0 0.0
    %4768 = vmatprep.subr.mxu0 0.0
    %4769 = vmatpush2.msra.mxu0 0.0
    %4770 = vmatprep.subr.mxu0 0.0
    %4771 = vmatpush2.msra.mxu0 0.0
    %4772 = vmatprep.subr.mxu0 0.0
    %4773 = vmatpush2.msra.mxu0 0.0
    %4774 = vmatprep.subr.mxu0 0.0
    %4775 = vmatpush2.msra.mxu0 0.0
    %4776 = vmatprep.subr.mxu0 0.0
    %4777 = vmatpush2.msra.mxu0 0.0
    %4778 = vmatprep.subr.mxu0 0.0
    %4779 = vmatpush2.msra.mxu0 0.0
    %4780 = vmatprep.subr.mxu0 0.0
    %4781 = vmatpush2.msra.mxu0 0.0
    %4782 = vmatprep.subr.mxu0 0.0
    %4783 = vmatpush2.msra.mxu0 0.0
    %4784 = vmatprep.subr.mxu0 0.0
    %4785 = vmatpush2.msra.mxu0 0.0
    %4786 = vmatprep.subr.mxu0 0.0
    %4787 = vmatpush2.msra.mxu0 0.0
    %4788 = vmatprep.subr.mxu0 0.0
    %4789 = vmatpush2.msra.mxu0 0.0
    %4790 = vmatprep.subr.mxu0 0.0
    %4791 = vmatpush2.msra.mxu0 0.0
    %4792 = vmatprep.mubr.f32.mxu0 0.0
    %v4793 = vand.u32 %v4627, 4294901760
    %4794 = vmatmul.mubr.f32.gmra.mxu0 %v4793
    %v4795 = vpop.f32.mrf.mxu0
    %v4796 = vadd.f32 %v4705, %v4795
    %v4797 = vpop.f32.mrf.mxu0
    %4798 = vdwg.mxu0
    %4799 = vmatprep.subr.mxu0 0.0
    %4800 = vmatpush1.msra.mxu0 0.0
    %4801 = vmatprep.subr.mxu0 0.0
    %4802 = vmatpush1.msra.mxu0 0.0
    %4803 = vmatprep.subr.mxu0 0.0
    %4804 = vmatpush1.msra.mxu0 0.0
    %4805 = vmatprep.subr.mxu0 0.0
    %4806 = vmatpush1.msra.mxu0 0.0
    %4807 = vmatprep.subr.mxu0 0.0
    %4808 = vmatpush1.msra.mxu0 0.0
    %4809 = vmatprep.subr.mxu0 0.0
    %4810 = vmatpush1.msra.mxu0 0.0
    %4811 = vmatprep.subr.mxu0 0.0
    %4812 = vmatpush1.msra.mxu0 0.0
    %4813 = vmatprep.subr.mxu0 0.0
    %4814 = vmatpush1.msra.mxu0 0.0
    %4815 = vmatprep.subr.mxu0 0.0
    %4816 = vmatpush1.msra.mxu0 0.0
    %4817 = vmatprep.subr.mxu0 0.0
    %4818 = vmatpush1.msra.mxu0 0.0
    %4819 = vmatprep.subr.mxu0 0.0
    %4820 = vmatpush1.msra.mxu0 0.0
    %4821 = vmatprep.subr.mxu0 0.0
    %4822 = vmatpush1.msra.mxu0 0.0
    %4823 = vmatprep.subr.mxu0 0.0
    %v4824 = vand.u32 %v998, 4294901760
    %v4825 = vsub.f32 %v998, %v4824
    %4826 = vmatpush1.msra.mxu0 %v4825
    %4827 = vmatprep.subr.mxu0 0.0
    %v4828 = vand.u32 %v997, 4294901760
    %v4829 = vsub.f32 %v997, %v4828
    %4830 = vmatpush1.msra.mxu0 %v4829
    %4831 = vmatprep.subr.mxu0 0.0
    %v4832 = vand.u32 %v996, 4294901760
    %v4833 = vsub.f32 %v996, %v4832
    %4834 = vmatpush1.msra.mxu0 %v4833
    %4835 = vmatprep.subr.mxu0 0.0
    %v4836 = vand.u32 %v995, 4294901760
    %v4837 = vsub.f32 %v995, %v4836
    %4838 = vmatpush1.msra.mxu0 %v4837
    %4839 = vmatprep.subr.mxu0 0.0
    %4840 = vmatpush2.msra.mxu0 0.0
    %4841 = vmatprep.subr.mxu0 0.0
    %4842 = vmatpush2.msra.mxu0 0.0
    %4843 = vmatprep.subr.mxu0 0.0
    %4844 = vmatpush2.msra.mxu0 0.0
    %4845 = vmatprep.subr.mxu0 0.0
    %4846 = vmatpush2.msra.mxu0 0.0
    %4847 = vmatprep.subr.mxu0 0.0
    %4848 = vmatpush2.msra.mxu0 0.0
    %4849 = vmatprep.subr.mxu0 0.0
    %4850 = vmatpush2.msra.mxu0 0.0
    %4851 = vmatprep.subr.mxu0 0.0
    %4852 = vmatpush2.msra.mxu0 0.0
    %4853 = vmatprep.subr.mxu0 0.0
    %4854 = vmatpush2.msra.mxu0 0.0
    %4855 = vmatprep.subr.mxu0 0.0
    %4856 = vmatpush2.msra.mxu0 0.0
    %4857 = vmatprep.subr.mxu0 0.0
    %4858 = vmatpush2.msra.mxu0 0.0
    %4859 = vmatprep.subr.mxu0 0.0
    %4860 = vmatpush2.msra.mxu0 0.0
    %4861 = vmatprep.subr.mxu0 0.0
    %4862 = vmatpush2.msra.mxu0 0.0
    %4863 = vmatprep.subr.mxu0 0.0
    %4864 = vmatpush2.msra.mxu0 0.0
    %4865 = vmatprep.subr.mxu0 0.0
    %4866 = vmatpush2.msra.mxu0 0.0
    %4867 = vmatprep.subr.mxu0 0.0
    %4868 = vmatpush2.msra.mxu0 0.0
    %4869 = vmatprep.subr.mxu0 0.0
    %4870 = vmatpush2.msra.mxu0 0.0
    %4871 = vmatprep.mubr.f32.mxu0 0.0
    %v4872 = vand.u32 %v4627, 4294901760
    %v4873 = vsub.f32 %v4627, %v4872
    %4874 = vmatmul.mubr.f32.gmra.mxu0 %v4873
    %v4875 = vpop.f32.mrf.mxu0
    %v4876 = vadd.f32 %v4796, %v4875
    %v4877 = vpop.f32.mrf.mxu0
    %4878 = vdwg.mxu0
    %4879 = vmatprep.subr.mxu0 0.0
    %4880 = vmatpush1.msra.mxu0 0.0
    %4881 = vmatprep.subr.mxu0 0.0
    %4882 = vmatpush1.msra.mxu0 0.0
    %4883 = vmatprep.subr.mxu0 0.0
    %4884 = vmatpush1.msra.mxu0 0.0
    %4885 = vmatprep.subr.mxu0 0.0
    %4886 = vmatpush1.msra.mxu0 0.0
    %4887 = vmatprep.subr.mxu0 0.0
    %4888 = vmatpush1.msra.mxu0 0.0
    %4889 = vmatprep.subr.mxu0 0.0
    %4890 = vmatpush1.msra.mxu0 0.0
    %4891 = vmatprep.subr.mxu0 0.0
    %4892 = vmatpush1.msra.mxu0 0.0
    %4893 = vmatprep.subr.mxu0 0.0
    %4894 = vmatpush1.msra.mxu0 0.0
    %4895 = vmatprep.subr.mxu0 0.0
    %4896 = vmatpush1.msra.mxu0 0.0
    %4897 = vmatprep.subr.mxu0 0.0
    %4898 = vmatpush1.msra.mxu0 0.0
    %4899 = vmatprep.subr.mxu0 0.0
    %4900 = vmatpush1.msra.mxu0 0.0
    %4901 = vmatprep.subr.mxu0 0.0
    %4902 = vmatpush1.msra.mxu0 0.0
    %4903 = vmatprep.subr.mxu0 0.0
    %v4904 = vand.u32 %v998, 4294901760
    %4905 = vmatpush1.msra.mxu0 %v4904
    %4906 = vmatprep.subr.mxu0 0.0
    %v4907 = vand.u32 %v997, 4294901760
    %4908 = vmatpush1.msra.mxu0 %v4907
    %4909 = vmatprep.subr.mxu0 0.0
    %v4910 = vand.u32 %v996, 4294901760
    %4911 = vmatpush1.msra.mxu0 %v4910
    %4912 = vmatprep.subr.mxu0 0.0
    %v4913 = vand.u32 %v995, 4294901760
    %4914 = vmatpush1.msra.mxu0 %v4913
    %4915 = vmatprep.subr.mxu0 0.0
    %4916 = vmatpush2.msra.mxu0 0.0
    %4917 = vmatprep.subr.mxu0 0.0
    %4918 = vmatpush2.msra.mxu0 0.0
    %4919 = vmatprep.subr.mxu0 0.0
    %4920 = vmatpush2.msra.mxu0 0.0
    %4921 = vmatprep.subr.mxu0 0.0
    %4922 = vmatpush2.msra.mxu0 0.0
    %4923 = vmatprep.subr.mxu0 0.0
    %4924 = vmatpush2.msra.mxu0 0.0
    %4925 = vmatprep.subr.mxu0 0.0
    %4926 = vmatpush2.msra.mxu0 0.0
    %4927 = vmatprep.subr.mxu0 0.0
    %4928 = vmatpush2.msra.mxu0 0.0
    %4929 = vmatprep.subr.mxu0 0.0
    %4930 = vmatpush2.msra.mxu0 0.0
    %4931 = vmatprep.subr.mxu0 0.0
    %4932 = vmatpush2.msra.mxu0 0.0
    %4933 = vmatprep.subr.mxu0 0.0
    %4934 = vmatpush2.msra.mxu0 0.0
    %4935 = vmatprep.subr.mxu0 0.0
    %4936 = vmatpush2.msra.mxu0 0.0
    %4937 = vmatprep.subr.mxu0 0.0
    %4938 = vmatpush2.msra.mxu0 0.0
    %4939 = vmatprep.subr.mxu0 0.0
    %4940 = vmatpush2.msra.mxu0 0.0
    %4941 = vmatprep.subr.mxu0 0.0
    %4942 = vmatpush2.msra.mxu0 0.0
    %4943 = vmatprep.subr.mxu0 0.0
    %4944 = vmatpush2.msra.mxu0 0.0
    %4945 = vmatprep.subr.mxu0 0.0
    %4946 = vmatpush2.msra.mxu0 0.0
    %4947 = vmatprep.mubr.f32.mxu0 0.0
    %v4948 = vand.u32 %v4627, 4294901760
    %v4949 = vsub.f32 %v4627, %v4948
    %v4950 = vand.u32 %v4949, 4294901760
    %4951 = vmatmul.mubr.f32.gmra.mxu0 %v4950
    %v4952 = vpop.f32.mrf.mxu0
    %v4953 = vadd.f32 %v4876, %v4952
    %v4954 = vpop.f32.mrf.mxu0
    %4955 = vdwg.mxu0
    %4956 = vmatprep.subr.mxu0 0.0
    %4957 = vmatpush1.msra.mxu0 0.0
    %4958 = vmatprep.subr.mxu0 0.0
    %4959 = vmatpush1.msra.mxu0 0.0
    %4960 = vmatprep.subr.mxu0 0.0
    %4961 = vmatpush1.msra.mxu0 0.0
    %4962 = vmatprep.subr.mxu0 0.0
    %4963 = vmatpush1.msra.mxu0 0.0
    %4964 = vmatprep.subr.mxu0 0.0
    %4965 = vmatpush1.msra.mxu0 0.0
    %4966 = vmatprep.subr.mxu0 0.0
    %4967 = vmatpush1.msra.mxu0 0.0
    %4968 = vmatprep.subr.mxu0 0.0
    %4969 = vmatpush1.msra.mxu0 0.0
    %4970 = vmatprep.subr.mxu0 0.0
    %4971 = vmatpush1.msra.mxu0 0.0
    %4972 = vmatprep.subr.mxu0 0.0
    %4973 = vmatpush1.msra.mxu0 0.0
    %4974 = vmatprep.subr.mxu0 0.0
    %4975 = vmatpush1.msra.mxu0 0.0
    %4976 = vmatprep.subr.mxu0 0.0
    %4977 = vmatpush1.msra.mxu0 0.0
    %4978 = vmatprep.subr.mxu0 0.0
    %4979 = vmatpush1.msra.mxu0 0.0
    %4980 = vmatprep.subr.mxu0 0.0
    %v4981 = vand.u32 %v998, 4294901760
    %v4982 = vsub.f32 %v998, %v4981
    %v4983 = vand.u32 %v4982, 4294901760
    %4984 = vmatpush1.msra.mxu0 %v4983
    %4985 = vmatprep.subr.mxu0 0.0
    %v4986 = vand.u32 %v997, 4294901760
    %v4987 = vsub.f32 %v997, %v4986
    %v4988 = vand.u32 %v4987, 4294901760
    %4989 = vmatpush1.msra.mxu0 %v4988
    %4990 = vmatprep.subr.mxu0 0.0
    %v4991 = vand.u32 %v996, 4294901760
    %v4992 = vsub.f32 %v996, %v4991
    %v4993 = vand.u32 %v4992, 4294901760
    %4994 = vmatpush1.msra.mxu0 %v4993
    %4995 = vmatprep.subr.mxu0 0.0
    %v4996 = vand.u32 %v995, 4294901760
    %v4997 = vsub.f32 %v995, %v4996
    %v4998 = vand.u32 %v4997, 4294901760
    %4999 = vmatpush1.msra.mxu0 %v4998
    %5000 = vmatprep.subr.mxu0 0.0
    %5001 = vmatpush2.msra.mxu0 0.0
    %5002 = vmatprep.subr.mxu0 0.0
    %5003 = vmatpush2.msra.mxu0 0.0
    %5004 = vmatprep.subr.mxu0 0.0
    %5005 = vmatpush2.msra.mxu0 0.0
    %5006 = vmatprep.subr.mxu0 0.0
    %5007 = vmatpush2.msra.mxu0 0.0
    %5008 = vmatprep.subr.mxu0 0.0
    %5009 = vmatpush2.msra.mxu0 0.0
    %5010 = vmatprep.subr.mxu0 0.0
    %5011 = vmatpush2.msra.mxu0 0.0
    %5012 = vmatprep.subr.mxu0 0.0
    %5013 = vmatpush2.msra.mxu0 0.0
    %5014 = vmatprep.subr.mxu0 0.0
    %5015 = vmatpush2.msra.mxu0 0.0
    %5016 = vmatprep.subr.mxu0 0.0
    %5017 = vmatpush2.msra.mxu0 0.0
    %5018 = vmatprep.subr.mxu0 0.0
    %5019 = vmatpush2.msra.mxu0 0.0
    %5020 = vmatprep.subr.mxu0 0.0
    %5021 = vmatpush2.msra.mxu0 0.0
    %5022 = vmatprep.subr.mxu0 0.0
    %5023 = vmatpush2.msra.mxu0 0.0
    %5024 = vmatprep.subr.mxu0 0.0
    %5025 = vmatpush2.msra.mxu0 0.0
    %5026 = vmatprep.subr.mxu0 0.0
    %5027 = vmatpush2.msra.mxu0 0.0
    %5028 = vmatprep.subr.mxu0 0.0
    %5029 = vmatpush2.msra.mxu0 0.0
    %5030 = vmatprep.subr.mxu0 0.0
    %5031 = vmatpush2.msra.mxu0 0.0
    %5032 = vmatprep.mubr.f32.mxu0 0.0
    %v5033 = vand.u32 %v4627, 4294901760
    %5034 = vmatmul.mubr.f32.gmra.mxu0 %v5033
    %v5035 = vpop.f32.mrf.mxu0
    %v5036 = vadd.f32 %v4953, %v5035
    %v5037 = vpop.f32.mrf.mxu0
    %5038 = vdwg.mxu0
    %5039 = vmatprep.subr.mxu0 0.0
    %5040 = vmatpush1.msra.mxu0 0.0
    %5041 = vmatprep.subr.mxu0 0.0
    %5042 = vmatpush1.msra.mxu0 0.0
    %5043 = vmatprep.subr.mxu0 0.0
    %5044 = vmatpush1.msra.mxu0 0.0
    %5045 = vmatprep.subr.mxu0 0.0
    %5046 = vmatpush1.msra.mxu0 0.0
    %5047 = vmatprep.subr.mxu0 0.0
    %5048 = vmatpush1.msra.mxu0 0.0
    %5049 = vmatprep.subr.mxu0 0.0
    %5050 = vmatpush1.msra.mxu0 0.0
    %5051 = vmatprep.subr.mxu0 0.0
    %5052 = vmatpush1.msra.mxu0 0.0
    %5053 = vmatprep.subr.mxu0 0.0
    %5054 = vmatpush1.msra.mxu0 0.0
    %5055 = vmatprep.subr.mxu0 0.0
    %5056 = vmatpush1.msra.mxu0 0.0
    %5057 = vmatprep.subr.mxu0 0.0
    %5058 = vmatpush1.msra.mxu0 0.0
    %5059 = vmatprep.subr.mxu0 0.0
    %5060 = vmatpush1.msra.mxu0 0.0
    %5061 = vmatprep.subr.mxu0 0.0
    %5062 = vmatpush1.msra.mxu0 0.0
    %5063 = vmatprep.subr.mxu0 0.0
    %v5064 = vand.u32 %v998, 4294901760
    %5065 = vmatpush1.msra.mxu0 %v5064
    %5066 = vmatprep.subr.mxu0 0.0
    %v5067 = vand.u32 %v997, 4294901760
    %5068 = vmatpush1.msra.mxu0 %v5067
    %5069 = vmatprep.subr.mxu0 0.0
    %v5070 = vand.u32 %v996, 4294901760
    %5071 = vmatpush1.msra.mxu0 %v5070
    %5072 = vmatprep.subr.mxu0 0.0
    %v5073 = vand.u32 %v995, 4294901760
    %5074 = vmatpush1.msra.mxu0 %v5073
    %5075 = vmatprep.subr.mxu0 0.0
    %5076 = vmatpush2.msra.mxu0 0.0
    %5077 = vmatprep.subr.mxu0 0.0
    %5078 = vmatpush2.msra.mxu0 0.0
    %5079 = vmatprep.subr.mxu0 0.0
    %5080 = vmatpush2.msra.mxu0 0.0
    %5081 = vmatprep.subr.mxu0 0.0
    %5082 = vmatpush2.msra.mxu0 0.0
    %5083 = vmatprep.subr.mxu0 0.0
    %5084 = vmatpush2.msra.mxu0 0.0
    %5085 = vmatprep.subr.mxu0 0.0
    %5086 = vmatpush2.msra.mxu0 0.0
    %5087 = vmatprep.subr.mxu0 0.0
    %5088 = vmatpush2.msra.mxu0 0.0
    %5089 = vmatprep.subr.mxu0 0.0
    %5090 = vmatpush2.msra.mxu0 0.0
    %5091 = vmatprep.subr.mxu0 0.0
    %5092 = vmatpush2.msra.mxu0 0.0
    %5093 = vmatprep.subr.mxu0 0.0
    %5094 = vmatpush2.msra.mxu0 0.0
    %5095 = vmatprep.subr.mxu0 0.0
    %5096 = vmatpush2.msra.mxu0 0.0
    %5097 = vmatprep.subr.mxu0 0.0
    %5098 = vmatpush2.msra.mxu0 0.0
    %5099 = vmatprep.subr.mxu0 0.0
    %5100 = vmatpush2.msra.mxu0 0.0
    %5101 = vmatprep.subr.mxu0 0.0
    %5102 = vmatpush2.msra.mxu0 0.0
    %5103 = vmatprep.subr.mxu0 0.0
    %5104 = vmatpush2.msra.mxu0 0.0
    %5105 = vmatprep.subr.mxu0 0.0
    %5106 = vmatpush2.msra.mxu0 0.0
    %5107 = vmatprep.mubr.f32.mxu0 0.0
    %v5108 = vand.u32 %v4627, 4294901760
    %5109 = vmatmul.mubr.f32.gmra.mxu0 %v5108
    %v5110 = vpop.f32.mrf.mxu0
    %v5111 = vadd.f32 %v5036, %v5110
    %v5112 = vpop.f32.mrf.mxu0
    %5113 = vdwg.mxu0
    %v5114 = vadd.f32 %v4623, %v5111
    %v5115 = vxor.u32 %v5114, 2147483648
    %v5116 = vmul.f32 %v5115, 1.442695
    %v5117 = vpow.pop %v5116
    %v5118 = vadd.f32 %v5117, 1.0
    %v5119 = vrcp.pop %v5118
    %v5120 = vmul.f32 1.0, %v5119
    %v5121 = vtanh.pop %v5114
    %v5122 = vmul.f32 %v5120, %v4615
    %5124 = vrot.lane.b32.xlu0 %v5121, 32
    %v5125 = vpop.permute.xlu0 %5124
    %v5127 = vmul.f32 %v5120, %v5125
    %5129 = vrot.lane.b32.xlu0 %v5127, 32
    %v5130 = vpop.permute.xlu0 %5129
    %v5132 = vadd.f32 %v5122, %v5130
    %v5133 = vtanh.pop %v5132
    %5135 = vrot.lane.b32.xlu0 %v5133, 32
    %v5136 = vpop.permute.xlu0 %5135
    %v5138 = vmul.f32 %v5120, %v5136
    %5140 = vrot.lane.b32.xlu0 %v5138, 64
    %v5141 = vpop.permute.xlu0 %5140
    %5143 = vst.msk [vmem:[#allocation3] sm:$0xff] %vm1002, %v5141
    // Predicated region
    $region42: #{tpu_custom_call.1} parent=1 // pred_check
      _
    $region43: #{tpu_custom_call.1} parent=1 // pred_check_branch
      %5145 = sbr.rel (0) target = $region45
    $region44: #{tpu_custom_call.1} parent=1 // pred_region
      %s5147 = ssub.s32 128, 128
      %5148 = vsyncadd [#allocation4], %s5147
      %s5150 = sshll.u32 [#allocation3], 4
      %s5151 = int_to_ptr.vmem [resolvable:$true] %s5150
      %5153 = dma.vmem_to_hbm [thread:$0]  %s5151, 128, %s10, [#allocation4]
    $region45: #{tpu_custom_call.1} parent=1 // pred_fallthru
      _
    // Predicated region
    $region46: #{tpu_custom_call.1} parent=1 // pred_check
      _
    $region47: #{tpu_custom_call.1} parent=1 // pred_check_branch
      %5155 = sbr.rel (0) target = $region49
    $region48: #{tpu_custom_call.1} parent=1 // pred_region
      %5156 = dma.done [#allocation4], 128
    $region49: #{tpu_custom_call.1} parent=1 // pred_fallthru
      _
    %5157 = vsyncpa [#allocation4], 1

</llo_original>
